<compile_context>
chip_gen: v7x
topology: tpu7x:2x2x1
jax: 0.10.0
libtpu: 0.0.40
codegen_flags: <defaults>
</compile_context>

<pallas_src>
import functools

import jax
import jax.numpy as jnp
from jax.experimental import pallas as pl
from jax.experimental.pallas import tpu as pltpu

HIDDEN = 1024     # fixed by the module definition (Linear(1024, ...))
_MIN_TILE = 8     # sublane granularity


def _cdiv(a, b):
    return (a + b - 1) // b


def _round_up(n, m):
    return ((n + m - 1) // m) * m


def _pick_tile(B, tm, split_threshold=256):
    """Balanced batch tiling.

    * tiles are multiples of 8 rows
    * tile sizes are balanced (no near-empty tail tile when B is just over tm)
    * for B >= split_threshold force >= 2 tiles so the "parallel" grid axis
      shards across both v7x TensorCores instead of idling one.
    """
    n_tiles = _cdiv(B, tm)
    if B >= split_threshold:
        n_tiles = max(n_tiles, 2)
    tm_eff = _round_up(_cdiv(B, n_tiles), _MIN_TILE)
    grid = _cdiv(B, tm_eff)
    return tm_eff, grid, grid * tm_eff


def foo_kernel(x_ref, w0_ref, b0_ref, w1_ref, b1_ref, w23_ref, w3_ref, c_ref,
               o_ref):
    # bf16 MXU inputs, f32 accumulation via preferred_element_type.
    x = x_ref[...].astype(jnp.bfloat16)

    # layer0 -> residual
    res = jnp.dot(x, w0_ref[...], preferred_element_type=jnp.float32) + b0_ref[...]
    # layer1
    h1 = jnp.dot(res.astype(jnp.bfloat16), w1_ref[...],
                 preferred_element_type=jnp.float32) + b1_ref[...]

    # layers 2+3 folded:  (h2 + res) @ w3 + b3
    #   = (h1 @ W2 + b2 + res) @ w3 + b3
    #   = h1 @ (W2 @ w3) + res @ w3 + (b2 @ w3 + b3)
    # w23 = W2 @ w3 and c = b2 @ w3 + b3 are precomputed in f32 (prepare_params);
    # the N=1 contractions run on the VPU (mul) + XLU (row reduce), MXU stays free.
    out = (jnp.sum(h1 * w23_ref[...], axis=-1, keepdims=True)
           + jnp.sum(res * w3_ref[...], axis=-1, keepdims=True)
           + c_ref[...])
    o_ref[...] = out.astype(o_ref.dtype)


def prepare_params(params):
    """One-time (outside the per-call jit) parameter preparation.

    * W0/W1 -> bf16 rows for the MXU; biases -> (1, 1024) f32 rows.
    * Fold layer3 into layer2: w23 = W2 @ w3 (f32, (1024,1)) and
      c = b2 @ w3 + b3, so W2 never has to be loaded by the kernel.
    """
    w3 = params["w3"].astype(jnp.float32)                       # (1024, 1)
    w23 = params["w2"].astype(jnp.float32) @ w3                 # (1024, 1)
    c = params["b2"].astype(jnp.float32) @ w3 + params["b3"]    # (1, 1)
    return {
        "w0": params["w0"].astype(jnp.bfloat16),
        "b0": params["b0"].reshape(1, HIDDEN).astype(jnp.float32),
        "w1": params["w1"].astype(jnp.bfloat16),
        "b1": params["b1"].reshape(1, HIDDEN).astype(jnp.float32),
        "w23_row": w23.reshape(1, HIDDEN),
        "w3_row": w3.reshape(1, HIDDEN),
        "c": c.reshape(1, 1).astype(jnp.float32),
    }


@functools.partial(jax.jit, static_argnames=("tm",))
def foo_forward(x, prep, *, tm=256):
    """x: (B, 1024) float32.  `prep` = prepare_params(params), computed ONCE.

    tm=256 is a good default on all chips; on v6e/v5e (128 MiB VMEM, single TC)
    tm=512 at large B halves the grid-step count for a small additional gain.
    """
    B, D = x.shape
    assert D == HIDDEN

    tm_eff, grid, Bp = _pick_tile(B, tm)
    if Bp != B:
        x = jnp.pad(x, ((0, Bp - B), (0, 0)))   # padded rows sliced off below

    resident = lambda i: (0, 0)  # constant block index -> stays resident in VMEM

    out = pl.pallas_call(
        foo_kernel,
        out_shape=jax.ShapeDtypeStruct((Bp, 1), jnp.float32),
        grid_spec=pltpu.PrefetchScalarGridSpec(
            num_scalar_prefetch=0,
            grid=(grid,),
            in_specs=[
                pl.BlockSpec((tm_eff, HIDDEN), lambda i: (i, 0)),   # x tile
                pl.BlockSpec((HIDDEN, HIDDEN), resident),           # W0 (bf16)
                pl.BlockSpec((1, HIDDEN), resident),                # b0
                pl.BlockSpec((HIDDEN, HIDDEN), resident),           # W1 (bf16)
                pl.BlockSpec((1, HIDDEN), resident),                # b1
                pl.BlockSpec((1, HIDDEN), resident),                # W2@w3 row (f32)
                pl.BlockSpec((1, HIDDEN), resident),                # w3 row (f32)
                pl.BlockSpec((1, 1), resident),                     # b2@w3 + b3
            ],
            out_specs=pl.BlockSpec((tm_eff, 1), lambda i: (i, 0)),
        ),
        compiler_params=pltpu.CompilerParams(
            # Batch tiles are independent -> shard across v7x's two TensorCores.
            dimension_semantics=("parallel",),
            # Working set ~12-18 MiB (4 MiB bf16 weights x2 buffers + tiles +
            # intermediates); plenty of headroom under v7x's 64 MiB VMEM.
            vmem_limit_bytes=40 << 20,
        ),
    )(x, prep["w0"], prep["b0"], prep["w1"], prep["b1"],
      prep["w23_row"], prep["w3_row"], prep["c"])

    return out[:B]


def init_params(key):
    """Deterministic init mimicking nn.Linear default (uniform +-1/sqrt(fan_in)).

    Weights are stored as (in_features, out_features) — already transposed
    relative to PyTorch's (out, in) layout — so the kernel uses plain x @ W.
    """
    keys = jax.random.split(key, 8)
    bound = 1.0 / jnp.sqrt(jnp.float32(HIDDEN))

    def u(k, shape):
        return jax.random.uniform(k, shape, jnp.float32, minval=-bound, maxval=bound)

    return {
        "w0": u(keys[0], (HIDDEN, HIDDEN)), "b0": u(keys[1], (1, HIDDEN)),
        "w1": u(keys[2], (HIDDEN, HIDDEN)), "b1": u(keys[3], (1, HIDDEN)),
        "w2": u(keys[4], (HIDDEN, HIDDEN)), "b2": u(keys[5], (1, HIDDEN)),
        "w3": u(keys[6], (HIDDEN, 1)),      "b3": u(keys[7], (1, 1)),
    }


def foo_reference(x, p):
    """Pure f32 reference (exact module semantics)."""
    res = x @ p["w0"] + p["b0"]
    h = res @ p["w1"] + p["b1"]
    h = h @ p["w2"] + p["b2"]
    return (h + res) @ p["w3"] + p["b3"]


def foo_reference_mixed(x, p):
    """Reference mirroring the kernel: bf16 MXU inputs, f32 accum, layer2/3 fold."""
    bf = jnp.bfloat16
    mm = lambda a, w: jnp.dot(a.astype(bf), w.astype(bf),
                              preferred_element_type=jnp.float32)
    res = mm(x, p["w0"]) + p["b0"]
    h1 = mm(res, p["w1"]) + p["b1"]
    w3 = p["w3"]
    return h1 @ (p["w2"] @ w3) + res @ w3 + (p["b2"] @ w3 + p["b3"])


if __name__ == "__main__":
    key = jax.random.PRNGKey(0)
    k_x, k_p = jax.random.split(key)
    params = init_params(k_p)
    prep = prepare_params(params)   # one-time: bf16 weights + layer2/3 fold

    # B=4 exercises pad-to-8; B=300 exercises balanced 2-tile path (tm_eff=152).
    for B in (4, 300):
        x = jax.random.normal(jax.random.fold_in(k_x, B), (B, HIDDEN), jnp.float32)

        out = jax.block_until_ready(foo_forward(x, prep))
        assert out.shape == (B, 1), out.shape

        ref_mixed = foo_reference_mixed(x, params)
        ref_f32 = foo_reference(x, params)
        assert jnp.allclose(out, ref_mixed, atol=2e-2, rtol=2e-2), (
            f"B={B}: max abs err vs mixed ref = {jnp.max(jnp.abs(out - ref_mixed))}")
        assert jnp.allclose(out, ref_f32, atol=1e-1, rtol=1e-1), (
            f"B={B}: max abs err vs f32 ref = {jnp.max(jnp.abs(out - ref_f32))}")

    print("KERNEL_OK")
</pallas_src>

<mosaic_0001>
module attributes {stable_mosaic.version = 11 : i64} {
  func.func @foo_kernel(%arg0: i32, %arg1: memref<8x1024xf32, #tpu.memory_space<vmem>>, %arg2: memref<1024x1024xbf16, #tpu.memory_space<vmem>>, %arg3: memref<1x1024xf32, #tpu.memory_space<vmem>>, %arg4: memref<1024x1024xbf16, #tpu.memory_space<vmem>>, %arg5: memref<1x1024xf32, #tpu.memory_space<vmem>>, %arg6: memref<1x1024xf32, #tpu.memory_space<vmem>>, %arg7: memref<1x1024xf32, #tpu.memory_space<vmem>>, %arg8: memref<1x1xf32, #tpu.memory_space<vmem>>, %arg9: memref<8x1xf32, #tpu.memory_space<vmem>>) attributes {dimension_semantics = [#tpu.dimension_semantics<parallel>], iteration_bounds = array<i64: 1>, scalar_prefetch = 0 : i64, scratch_operands = 0 : i64, tpu.core_type = #tpu.core_type<tc>, window_params = [{transform_indices = @transform_0, window_bounds = array<i64: 8, 1024>}, {pipeline_mode = #tpu.pipeline_mode<synchronous>, transform_indices = @transform_1, window_bounds = array<i64: 1024, 1024>}, {pipeline_mode = #tpu.pipeline_mode<synchronous>, transform_indices = @transform_2, window_bounds = array<i64: 1, 1024>}, {pipeline_mode = #tpu.pipeline_mode<synchronous>, transform_indices = @transform_3, window_bounds = array<i64: 1024, 1024>}, {pipeline_mode = #tpu.pipeline_mode<synchronous>, transform_indices = @transform_4, window_bounds = array<i64: 1, 1024>}, {pipeline_mode = #tpu.pipeline_mode<synchronous>, transform_indices = @transform_5, window_bounds = array<i64: 1, 1024>}, {pipeline_mode = #tpu.pipeline_mode<synchronous>, transform_indices = @transform_6, window_bounds = array<i64: 1, 1024>}, {pipeline_mode = #tpu.pipeline_mode<synchronous>, transform_indices = @transform_7, window_bounds = array<i64: 1, 1>}, {transform_indices = @transform_8, window_bounds = array<i64: 8, 1>}]} {
    %c0 = arith.constant 0 : index
    %c0_0 = arith.constant 0 : index
    %0 = vector.load %arg1[%c0, %c0_0] : memref<8x1024xf32, #tpu.memory_space<vmem>>, vector<8x1024xf32>
    %1 = arith.truncf %0 : vector<8x1024xf32> to vector<8x1024xbf16>
    %c0_1 = arith.constant 0 : index
    %c0_2 = arith.constant 0 : index
    %2 = vector.load %arg2[%c0_1, %c0_2] : memref<1024x1024xbf16, #tpu.memory_space<vmem>>, vector<1024x1024xbf16>
    %cst = arith.constant dense<0.000000e+00> : vector<8x1024xf32>
    %3 = tpu.matmul %1, %2, %cst {dimension_numbers = #tpu.dot_dimension_numbers<[1], [0], [0], [1], [0, 0, 1, 1], [], []>} : vector<8x1024xbf16>, vector<1024x1024xbf16>, vector<8x1024xf32> -> vector<8x1024xf32>
    %c0_3 = arith.constant 0 : index
    %c0_4 = arith.constant 0 : index
    %4 = vector.load %arg3[%c0_3, %c0_4] : memref<1x1024xf32, #tpu.memory_space<vmem>>, vector<1x1024xf32>
    %5 = vector.broadcast %4 : vector<1x1024xf32> to vector<8x1024xf32>
    %6 = arith.addf %3, %5 : vector<8x1024xf32>
    %7 = arith.truncf %6 : vector<8x1024xf32> to vector<8x1024xbf16>
    %c0_5 = arith.constant 0 : index
    %c0_6 = arith.constant 0 : index
    %8 = vector.load %arg4[%c0_5, %c0_6] : memref<1024x1024xbf16, #tpu.memory_space<vmem>>, vector<1024x1024xbf16>
    %cst_7 = arith.constant dense<0.000000e+00> : vector<8x1024xf32>
    %9 = tpu.matmul %7, %8, %cst_7 {dimension_numbers = #tpu.dot_dimension_numbers<[1], [0], [0], [1], [0, 0, 1, 1], [], []>} : vector<8x1024xbf16>, vector<1024x1024xbf16>, vector<8x1024xf32> -> vector<8x1024xf32>
    %c0_8 = arith.constant 0 : index
    %c0_9 = arith.constant 0 : index
    %10 = vector.load %arg5[%c0_8, %c0_9] : memref<1x1024xf32, #tpu.memory_space<vmem>>, vector<1x1024xf32>
    %11 = vector.broadcast %10 : vector<1x1024xf32> to vector<8x1024xf32>
    %12 = arith.addf %9, %11 : vector<8x1024xf32>
    %c0_10 = arith.constant 0 : index
    %c0_11 = arith.constant 0 : index
    %13 = vector.load %arg6[%c0_10, %c0_11] : memref<1x1024xf32, #tpu.memory_space<vmem>>, vector<1x1024xf32>
    %14 = vector.broadcast %13 : vector<1x1024xf32> to vector<8x1024xf32>
    %15 = arith.mulf %12, %14 : vector<8x1024xf32>
    %cst_12 = arith.constant dense<0.000000e+00> : vector<8xf32>
    %16 = vector.multi_reduction <add>, %15, %cst_12 [1] : vector<8x1024xf32> to vector<8xf32>
    %17 = vector.shape_cast %16 : vector<8xf32> to vector<8x1xf32>
    %c0_13 = arith.constant 0 : index
    %c0_14 = arith.constant 0 : index
    %18 = vector.load %arg7[%c0_13, %c0_14] : memref<1x1024xf32, #tpu.memory_space<vmem>>, vector<1x1024xf32>
    %19 = vector.broadcast %18 : vector<1x1024xf32> to vector<8x1024xf32>
    %20 = arith.mulf %6, %19 : vector<8x1024xf32>
    %cst_15 = arith.constant dense<0.000000e+00> : vector<8xf32>
    %21 = vector.multi_reduction <add>, %20, %cst_15 [1] : vector<8x1024xf32> to vector<8xf32>
    %22 = vector.shape_cast %21 : vector<8xf32> to vector<8x1xf32>
    %23 = arith.addf %17, %22 : vector<8x1xf32>
    %c0_16 = arith.constant 0 : index
    %c0_17 = arith.constant 0 : index
    %24 = vector.load %arg8[%c0_16, %c0_17] : memref<1x1xf32, #tpu.memory_space<vmem>>, vector<1x1xf32>
    %25 = vector.broadcast %24 : vector<1x1xf32> to vector<8x1xf32>
    %26 = arith.addf %23, %25 : vector<8x1xf32>
    %c0_18 = arith.constant 0 : index
    %c0_19 = arith.constant 0 : index
    %27 = vector.load %arg9[%c0_18, %c0_19] : memref<8x1xf32, #tpu.memory_space<vmem>>, vector<8x1xf32>
    tpu.vector_store %arg9[%c0_18, %c0_19], %26 {strides = array<i32>} : memref<8x1xf32, #tpu.memory_space<vmem>>, vector<8x1xf32>,
    return
  }
  func.func @transform_0(%arg0: i32) -> (i32, i32) {
    %c0_i32 = arith.constant 0 : i32
    %c0_i32_0 = arith.constant 0 : i32
    return %arg0, %c0_i32 : i32, i32
  }
  func.func @transform_1(%arg0: i32) -> (i32, i32) {
    %c0_i32 = arith.constant 0 : i32
    %c0_i32_0 = arith.constant 0 : i32
    %c0_i32_1 = arith.constant 0 : i32
    return %c0_i32, %c0_i32_0 : i32, i32
  }
  func.func @transform_2(%arg0: i32) -> (i32, i32) {
    %c0_i32 = arith.constant 0 : i32
    %c0_i32_0 = arith.constant 0 : i32
    %c0_i32_1 = arith.constant 0 : i32
    return %c0_i32, %c0_i32_0 : i32, i32
  }
  func.func @transform_3(%arg0: i32) -> (i32, i32) {
    %c0_i32 = arith.constant 0 : i32
    %c0_i32_0 = arith.constant 0 : i32
    %c0_i32_1 = arith.constant 0 : i32
    return %c0_i32, %c0_i32_0 : i32, i32
  }
  func.func @transform_4(%arg0: i32) -> (i32, i32) {
    %c0_i32 = arith.constant 0 : i32
    %c0_i32_0 = arith.constant 0 : i32
    %c0_i32_1 = arith.constant 0 : i32
    return %c0_i32, %c0_i32_0 : i32, i32
  }
  func.func @transform_5(%arg0: i32) -> (i32, i32) {
    %c0_i32 = arith.constant 0 : i32
    %c0_i32_0 = arith.constant 0 : i32
    %c0_i32_1 = arith.constant 0 : i32
    return %c0_i32, %c0_i32_0 : i32, i32
  }
  func.func @transform_6(%arg0: i32) -> (i32, i32) {
    %c0_i32 = arith.constant 0 : i32
    %c0_i32_0 = arith.constant 0 : i32
    %c0_i32_1 = arith.constant 0 : i32
    return %c0_i32, %c0_i32_0 : i32, i32
  }
  func.func @transform_7(%arg0: i32) -> (i32, i32) {
    %c0_i32 = arith.constant 0 : i32
    %c0_i32_0 = arith.constant 0 : i32
    %c0_i32_1 = arith.constant 0 : i32
    return %c0_i32, %c0_i32_0 : i32, i32
  }
  func.func @transform_8(%arg0: i32) -> (i32, i32) {
    %c0_i32 = arith.constant 0 : i32
    %c0_i32_0 = arith.constant 0 : i32
    return %arg0, %c0_i32 : i32, i32
  }
}

</mosaic_0001>

<llo_original>
// kernel: foo_forward.1
$region0: #{foo_forward.1}
  #allocation0 [shape = 'u32[]', space=smem, size = 0x4, offset = 0x4, fixed_abs, tag = 'smem constant byte address 0x4 - core index']
  #allocation1 [shape = 'u32[144,128]{1,0:T(1,128)}', space=vmem, size = 0x12000, scoped, tag = 'internal scratch']
  #allocation2 [shape = 'f32[1,1]{1,0:T(1,128)S(1)}', space=vmem, size = 0x200, scoped, tag = 'scoped memory for foo_forward.1']
  %s0 = inlined_call_operand.vmem [shape: f32[8,1024], index: 0, kind: input, shape index: {}]
  %s1 = inlined_call_operand.hbm [shape: bf16[1024,1024], index: 1, kind: input, shape index: {}]
  %s2 = inlined_call_operand.hbm [shape: f32[1,1024], index: 2, kind: input, shape index: {}]
  %s3 = inlined_call_operand.hbm [shape: bf16[1024,1024], index: 3, kind: input, shape index: {}]
  %s4 = inlined_call_operand.hbm [shape: f32[1,1024], index: 4, kind: input, shape index: {}]
  %s5 = inlined_call_operand.hbm [shape: f32[1,1024], index: 5, kind: input, shape index: {}]
  %s6 = inlined_call_operand.hbm [shape: f32[1,1024], index: 6, kind: input, shape index: {}]
  %s7 = inlined_call_operand.<no memory space> [shape: f32[1,1], index: 7, kind: input, shape index: {}]
  %s8 = inlined_call_operand.vmem [shape: f32[8,1], index: 8, kind: output, shape index: {}]
  %s9 = sld [smem:[#allocation0]]
  $region66: #{foo_forward.1} parent=0
    _
  %s11 = ssub.s32 1, %s9
  %s12 = scalar_select 0, %s11, %s9
  %v13 = vstv %s7
  %14 = vst [vmem:[#allocation2] sm:$0x1] %v13
  $region1: #{foo_forward.1} parent=0
    #allocation3 [shape = 'u8[2097152]{0}', space=vmem, size = 0x200000, scoped, tag = 'input window, operand 1, single buffered']
    #allocation4 [shape = 's32[1]{0}', space=sflag, size = 0x4, scoped, tag = 'scoped memory for foo_forward.1']
    #allocation5 [shape = 'u8[4096]{0}', space=vmem, size = 0x1000, scoped, tag = 'input window, operand 2, single buffered']
    #allocation6 [shape = 's32[1]{0}', space=sflag, size = 0x4, scoped, tag = 'scoped memory for foo_forward.1']
    #allocation7 [shape = 'u8[2097152]{0}', space=vmem, size = 0x200000, scoped, tag = 'input window, operand 3, single buffered']
    #allocation8 [shape = 'u8[4096]{0}', space=vmem, size = 0x1000, scoped, tag = 'input window, operand 4, single buffered']
    #allocation9 [shape = 's32[1]{0}', space=sflag, size = 0x4, scoped, tag = 'scoped memory for foo_forward.1']
    #allocation10 [shape = 'u8[4096]{0}', space=vmem, size = 0x1000, scoped, tag = 'input window, operand 5, single buffered']
    #allocation11 [shape = 'u8[4096]{0}', space=vmem, size = 0x1000, scoped, tag = 'input window, operand 6, single buffered']
    #allocation12 [shape = 's32[1]{0}', space=sflag, size = 0x4, scoped, tag = 'scoped memory for foo_forward.1']
    %15 = vsyncpa [#allocation4], 0
    %16 = vsyncpa [#allocation6], 0
    %17 = vsyncpa [#allocation9], 0
    %18 = vsyncpa [#allocation12], 0
    // Predicated region
    $region2: #{foo_forward.1} parent=1 // pred_check
      _
    $region3: #{foo_forward.1} parent=1 // pred_check_branch
      %20 = sbr.rel (0) target = $region5
    $region4: #{foo_forward.1} parent=1 // pred_region
      _
    $region5: #{foo_forward.1} parent=1 // pred_fallthru
      _
    // Predicated region
    $region6: #{foo_forward.1} parent=1 // pred_check
      _
    $region7: #{foo_forward.1} parent=1 // pred_check_branch
      %22 = sbr.rel (0) target = $region9
    $region8: #{foo_forward.1} parent=1 // pred_region
      %s24 = ssub.s32 65536, 65536
      %25 = vsyncadd [#allocation4], %s24
      %s26 = sshll.u32 [#allocation3], 4
      %s27 = int_to_ptr.vmem [resolvable:$true] %s26
      %32 = dma.hbm_to_vmem [thread:$0]  %s1, 65536, %s27, [#allocation4], 512, 512, 32
    $region9: #{foo_forward.1} parent=1 // pred_fallthru
      _
    // Predicated region
    $region10: #{foo_forward.1} parent=1 // pred_check
      _
    $region11: #{foo_forward.1} parent=1 // pred_check_branch
      %34 = sbr.rel (0) target = $region13
    $region12: #{foo_forward.1} parent=1 // pred_region
      %s36 = ssub.s32 128, 128
      %37 = vsyncadd [#allocation6], %s36
      %s39 = sshll.u32 [#allocation5], 4
      %s40 = int_to_ptr.vmem [resolvable:$true] %s39
      %42 = dma.hbm_to_vmem [thread:$0]  %s2, 128, %s40, [#allocation6]
    $region13: #{foo_forward.1} parent=1 // pred_fallthru
      _
    // Predicated region
    $region14: #{foo_forward.1} parent=1 // pred_check
      _
    $region15: #{foo_forward.1} parent=1 // pred_check_branch
      %44 = sbr.rel (0) target = $region17
    $region16: #{foo_forward.1} parent=1 // pred_region
      %s46 = ssub.s32 65536, 65536
      %47 = vsyncadd [#allocation6], %s46
      %s48 = sshll.u32 [#allocation7], 4
      %s49 = int_to_ptr.vmem [resolvable:$true] %s48
      %54 = dma.hbm_to_vmem [thread:$0]  %s3, 65536, %s49, [#allocation6], 512, 512, 32
    $region17: #{foo_forward.1} parent=1 // pred_fallthru
      _
    // Predicated region
    $region18: #{foo_forward.1} parent=1 // pred_check
      _
    $region19: #{foo_forward.1} parent=1 // pred_check_branch
      %56 = sbr.rel (0) target = $region21
    $region20: #{foo_forward.1} parent=1 // pred_region
      %s58 = ssub.s32 128, 128
      %59 = vsyncadd [#allocation9], %s58
      %s61 = sshll.u32 [#allocation8], 4
      %s62 = int_to_ptr.vmem [resolvable:$true] %s61
      %64 = dma.hbm_to_vmem [thread:$0]  %s4, 128, %s62, [#allocation9]
    $region21: #{foo_forward.1} parent=1 // pred_fallthru
      _
    // Predicated region
    $region22: #{foo_forward.1} parent=1 // pred_check
      _
    $region23: #{foo_forward.1} parent=1 // pred_check_branch
      %66 = sbr.rel (0) target = $region25
    $region24: #{foo_forward.1} parent=1 // pred_region
      %s68 = ssub.s32 128, 128
      %69 = vsyncadd [#allocation9], %s68
      %s71 = sshll.u32 [#allocation10], 4
      %s72 = int_to_ptr.vmem [resolvable:$true] %s71
      %74 = dma.hbm_to_vmem [thread:$0]  %s5, 128, %s72, [#allocation9]
    $region25: #{foo_forward.1} parent=1 // pred_fallthru
      _
    // Predicated region
    $region26: #{foo_forward.1} parent=1 // pred_check
      _
    $region27: #{foo_forward.1} parent=1 // pred_check_branch
      %76 = sbr.rel (0) target = $region29
    $region28: #{foo_forward.1} parent=1 // pred_region
      %s78 = ssub.s32 128, 128
      %79 = vsyncadd [#allocation12], %s78
      %s81 = sshll.u32 [#allocation11], 4
      %s82 = int_to_ptr.vmem [resolvable:$true] %s81
      %84 = dma.hbm_to_vmem [thread:$0]  %s6, 128, %s82, [#allocation12]
    $region29: #{foo_forward.1} parent=1 // pred_fallthru
      _
    // Predicated region
    $region30: #{foo_forward.1} parent=1 // pred_check
      _
    $region31: #{foo_forward.1} parent=1 // pred_check_branch
      %86 = sbr.rel (0) target = $region33
    $region32: #{foo_forward.1} parent=1 // pred_region
      _
    $region33: #{foo_forward.1} parent=1 // pred_fallthru
      _
    // Predicated region
    $region34: #{foo_forward.1} parent=1 // pred_check
      _
    $region35: #{foo_forward.1} parent=1 // pred_check_branch
      %88 = sbr.rel (0) target = $region37
    $region36: #{foo_forward.1} parent=1 // pred_region
      %89 = dma.done [#allocation4], 65536
    $region37: #{foo_forward.1} parent=1 // pred_fallthru
      _
    // Predicated region
    $region38: #{foo_forward.1} parent=1 // pred_check
      _
    $region39: #{foo_forward.1} parent=1 // pred_check_branch
      %91 = sbr.rel (0) target = $region41
    $region40: #{foo_forward.1} parent=1 // pred_region
      %92 = dma.done [#allocation6], 128
    $region41: #{foo_forward.1} parent=1 // pred_fallthru
      _
    // Predicated region
    $region42: #{foo_forward.1} parent=1 // pred_check
      _
    $region43: #{foo_forward.1} parent=1 // pred_check_branch
      %94 = sbr.rel (0) target = $region45
    $region44: #{foo_forward.1} parent=1 // pred_region
      %95 = dma.done [#allocation6], 65536
    $region45: #{foo_forward.1} parent=1 // pred_fallthru
      _
    // Predicated region
    $region46: #{foo_forward.1} parent=1 // pred_check
      _
    $region47: #{foo_forward.1} parent=1 // pred_check_branch
      %97 = sbr.rel (0) target = $region49
    $region48: #{foo_forward.1} parent=1 // pred_region
      %98 = dma.done [#allocation9], 128
    $region49: #{foo_forward.1} parent=1 // pred_fallthru
      _
    // Predicated region
    $region50: #{foo_forward.1} parent=1 // pred_check
      _
    $region51: #{foo_forward.1} parent=1 // pred_check_branch
      %100 = sbr.rel (0) target = $region53
    $region52: #{foo_forward.1} parent=1 // pred_region
      %101 = dma.done [#allocation9], 128
    $region53: #{foo_forward.1} parent=1 // pred_fallthru
      _
    // Predicated region
    $region54: #{foo_forward.1} parent=1 // pred_check
      _
    $region55: #{foo_forward.1} parent=1 // pred_check_branch
      %103 = sbr.rel (0) target = $region57
    $region56: #{foo_forward.1} parent=1 // pred_region
      %104 = dma.done [#allocation12], 128
    $region57: #{foo_forward.1} parent=1 // pred_fallthru
      _
    %v105 = vld [vmem:[%s0] sm:$0xff]
    %v106 = vld [vmem:[%s0 + $0x8] sm:$0xff]
    %v107 = vld [vmem:[%s0 + $0x10] sm:$0xff]
    %v108 = vld [vmem:[%s0 + $0x18] sm:$0xff]
    %v109 = vld [vmem:[%s0 + $0x20] sm:$0xff]
    %v110 = vld [vmem:[%s0 + $0x28] sm:$0xff]
    %v111 = vld [vmem:[%s0 + $0x30] sm:$0xff]
    %v112 = vld [vmem:[%s0 + $0x38] sm:$0xff]
    %v113 = vpack.c.bf16 %v105, %v105
    %v114 = vpack.c.bf16 %v106, %v106
    %v115 = vpack.c.bf16 %v107, %v107
    %v116 = vpack.c.bf16 %v108, %v108
    %v117 = vpack.c.bf16 %v109, %v109
    %v118 = vpack.c.bf16 %v110, %v110
    %v119 = vpack.c.bf16 %v111, %v111
    %v120 = vpack.c.bf16 %v112, %v112
    %v121 = vld [vmem:[#allocation3] sm:$0xff]
    %v122 = vld [vmem:[#allocation3 + $0x8] sm:$0xff]
    %v123 = vld [vmem:[#allocation3 + $0x10] sm:$0xff]
    %v124 = vld [vmem:[#allocation3 + $0x18] sm:$0xff]
    %v125 = vld [vmem:[#allocation3 + $0x20] sm:$0xff]
    %v126 = vld [vmem:[#allocation3 + $0x28] sm:$0xff]
    %v127 = vld [vmem:[#allocation3 + $0x30] sm:$0xff]
    %v128 = vld [vmem:[#allocation3 + $0x38] sm:$0xff]
    %v129 = vld [vmem:[#allocation3 + $0x40] sm:$0xff]
    %v130 = vld [vmem:[#allocation3 + $0x48] sm:$0xff]
    %v131 = vld [vmem:[#allocation3 + $0x50] sm:$0xff]
    %v132 = vld [vmem:[#allocation3 + $0x58] sm:$0xff]
    %v133 = vld [vmem:[#allocation3 + $0x60] sm:$0xff]
    %v134 = vld [vmem:[#allocation3 + $0x68] sm:$0xff]
    %v135 = vld [vmem:[#allocation3 + $0x70] sm:$0xff]
    %v136 = vld [vmem:[#allocation3 + $0x78] sm:$0xff]
    %v137 = vld [vmem:[#allocation3 + $0x80] sm:$0xff]
    %v138 = vld [vmem:[#allocation3 + $0x88] sm:$0xff]
    %v139 = vld [vmem:[#allocation3 + $0x90] sm:$0xff]
    %v140 = vld [vmem:[#allocation3 + $0x98] sm:$0xff]
    %v141 = vld [vmem:[#allocation3 + $0xa0] sm:$0xff]
    %v142 = vld [vmem:[#allocation3 + $0xa8] sm:$0xff]
    %v143 = vld [vmem:[#allocation3 + $0xb0] sm:$0xff]
    %v144 = vld [vmem:[#allocation3 + $0xb8] sm:$0xff]
    %v145 = vld [vmem:[#allocation3 + $0xc0] sm:$0xff]
    %v146 = vld [vmem:[#allocation3 + $0xc8] sm:$0xff]
    %v147 = vld [vmem:[#allocation3 + $0xd0] sm:$0xff]
    %v148 = vld [vmem:[#allocation3 + $0xd8] sm:$0xff]
    %v149 = vld [vmem:[#allocation3 + $0xe0] sm:$0xff]
    %v150 = vld [vmem:[#allocation3 + $0xe8] sm:$0xff]
    %v151 = vld [vmem:[#allocation3 + $0xf0] sm:$0xff]
    %v152 = vld [vmem:[#allocation3 + $0xf8] sm:$0xff]
    %v153 = vld [vmem:[#allocation3 + $0x100] sm:$0xff]
    %v154 = vld [vmem:[#allocation3 + $0x108] sm:$0xff]
    %v155 = vld [vmem:[#allocation3 + $0x110] sm:$0xff]
    %v156 = vld [vmem:[#allocation3 + $0x118] sm:$0xff]
    %v157 = vld [vmem:[#allocation3 + $0x120] sm:$0xff]
    %v158 = vld [vmem:[#allocation3 + $0x128] sm:$0xff]
    %v159 = vld [vmem:[#allocation3 + $0x130] sm:$0xff]
    %v160 = vld [vmem:[#allocation3 + $0x138] sm:$0xff]
    %v161 = vld [vmem:[#allocation3 + $0x140] sm:$0xff]
    %v162 = vld [vmem:[#allocation3 + $0x148] sm:$0xff]
    %v163 = vld [vmem:[#allocation3 + $0x150] sm:$0xff]
    %v164 = vld [vmem:[#allocation3 + $0x158] sm:$0xff]
    %v165 = vld [vmem:[#allocation3 + $0x160] sm:$0xff]
    %v166 = vld [vmem:[#allocation3 + $0x168] sm:$0xff]
    %v167 = vld [vmem:[#allocation3 + $0x170] sm:$0xff]
    %v168 = vld [vmem:[#allocation3 + $0x178] sm:$0xff]
    %v169 = vld [vmem:[#allocation3 + $0x180] sm:$0xff]
    %v170 = vld [vmem:[#allocation3 + $0x188] sm:$0xff]
    %v171 = vld [vmem:[#allocation3 + $0x190] sm:$0xff]
    %v172 = vld [vmem:[#allocation3 + $0x198] sm:$0xff]
    %v173 = vld [vmem:[#allocation3 + $0x1a0] sm:$0xff]
    %v174 = vld [vmem:[#allocation3 + $0x1a8] sm:$0xff]
    %v175 = vld [vmem:[#allocation3 + $0x1b0] sm:$0xff]
    %v176 = vld [vmem:[#allocation3 + $0x1b8] sm:$0xff]
    %v177 = vld [vmem:[#allocation3 + $0x1c0] sm:$0xff]
    %v178 = vld [vmem:[#allocation3 + $0x1c8] sm:$0xff]
    %v179 = vld [vmem:[#allocation3 + $0x1d0] sm:$0xff]
    %v180 = vld [vmem:[#allocation3 + $0x1d8] sm:$0xff]
    %v181 = vld [vmem:[#allocation3 + $0x1e0] sm:$0xff]
    %v182 = vld [vmem:[#allocation3 + $0x1e8] sm:$0xff]
    %v183 = vld [vmem:[#allocation3 + $0x1f0] sm:$0xff]
    %v184 = vld [vmem:[#allocation3 + $0x1f8] sm:$0xff]
    %v185 = vld [vmem:[#allocation3 + $0x200] sm:$0xff]
    %v186 = vld [vmem:[#allocation3 + $0x208] sm:$0xff]
    %v187 = vld [vmem:[#allocation3 + $0x210] sm:$0xff]
    %v188 = vld [vmem:[#allocation3 + $0x218] sm:$0xff]
    %v189 = vld [vmem:[#allocation3 + $0x220] sm:$0xff]
    %v190 = vld [vmem:[#allocation3 + $0x228] sm:$0xff]
    %v191 = vld [vmem:[#allocation3 + $0x230] sm:$0xff]
    %v192 = vld [vmem:[#allocation3 + $0x238] sm:$0xff]
    %v193 = vld [vmem:[#allocation3 + $0x240] sm:$0xff]
    %v194 = vld [vmem:[#allocation3 + $0x248] sm:$0xff]
    %v195 = vld [vmem:[#allocation3 + $0x250] sm:$0xff]
    %v196 = vld [vmem:[#allocation3 + $0x258] sm:$0xff]
    %v197 = vld [vmem:[#allocation3 + $0x260] sm:$0xff]
    %v198 = vld [vmem:[#allocation3 + $0x268] sm:$0xff]
    %v199 = vld [vmem:[#allocation3 + $0x270] sm:$0xff]
    %v200 = vld [vmem:[#allocation3 + $0x278] sm:$0xff]
    %v201 = vld [vmem:[#allocation3 + $0x280] sm:$0xff]
    %v202 = vld [vmem:[#allocation3 + $0x288] sm:$0xff]
    %v203 = vld [vmem:[#allocation3 + $0x290] sm:$0xff]
    %v204 = vld [vmem:[#allocation3 + $0x298] sm:$0xff]
    %v205 = vld [vmem:[#allocation3 + $0x2a0] sm:$0xff]
    %v206 = vld [vmem:[#allocation3 + $0x2a8] sm:$0xff]
    %v207 = vld [vmem:[#allocation3 + $0x2b0] sm:$0xff]
    %v208 = vld [vmem:[#allocation3 + $0x2b8] sm:$0xff]
    %v209 = vld [vmem:[#allocation3 + $0x2c0] sm:$0xff]
    %v210 = vld [vmem:[#allocation3 + $0x2c8] sm:$0xff]
    %v211 = vld [vmem:[#allocation3 + $0x2d0] sm:$0xff]
    %v212 = vld [vmem:[#allocation3 + $0x2d8] sm:$0xff]
    %v213 = vld [vmem:[#allocation3 + $0x2e0] sm:$0xff]
    %v214 = vld [vmem:[#allocation3 + $0x2e8] sm:$0xff]
    %v215 = vld [vmem:[#allocation3 + $0x2f0] sm:$0xff]
    %v216 = vld [vmem:[#allocation3 + $0x2f8] sm:$0xff]
    %v217 = vld [vmem:[#allocation3 + $0x300] sm:$0xff]
    %v218 = vld [vmem:[#allocation3 + $0x308] sm:$0xff]
    %v219 = vld [vmem:[#allocation3 + $0x310] sm:$0xff]
    %v220 = vld [vmem:[#allocation3 + $0x318] sm:$0xff]
    %v221 = vld [vmem:[#allocation3 + $0x320] sm:$0xff]
    %v222 = vld [vmem:[#allocation3 + $0x328] sm:$0xff]
    %v223 = vld [vmem:[#allocation3 + $0x330] sm:$0xff]
    %v224 = vld [vmem:[#allocation3 + $0x338] sm:$0xff]
    %v225 = vld [vmem:[#allocation3 + $0x340] sm:$0xff]
    %v226 = vld [vmem:[#allocation3 + $0x348] sm:$0xff]
    %v227 = vld [vmem:[#allocation3 + $0x350] sm:$0xff]
    %v228 = vld [vmem:[#allocation3 + $0x358] sm:$0xff]
    %v229 = vld [vmem:[#allocation3 + $0x360] sm:$0xff]
    %v230 = vld [vmem:[#allocation3 + $0x368] sm:$0xff]
    %v231 = vld [vmem:[#allocation3 + $0x370] sm:$0xff]
    %v232 = vld [vmem:[#allocation3 + $0x378] sm:$0xff]
    %v233 = vld [vmem:[#allocation3 + $0x380] sm:$0xff]
    %v234 = vld [vmem:[#allocation3 + $0x388] sm:$0xff]
    %v235 = vld [vmem:[#allocation3 + $0x390] sm:$0xff]
    %v236 = vld [vmem:[#allocation3 + $0x398] sm:$0xff]
    %v237 = vld [vmem:[#allocation3 + $0x3a0] sm:$0xff]
    %v238 = vld [vmem:[#allocation3 + $0x3a8] sm:$0xff]
    %v239 = vld [vmem:[#allocation3 + $0x3b0] sm:$0xff]
    %v240 = vld [vmem:[#allocation3 + $0x3b8] sm:$0xff]
    %v241 = vld [vmem:[#allocation3 + $0x3c0] sm:$0xff]
    %v242 = vld [vmem:[#allocation3 + $0x3c8] sm:$0xff]
    %v243 = vld [vmem:[#allocation3 + $0x3d0] sm:$0xff]
    %v244 = vld [vmem:[#allocation3 + $0x3d8] sm:$0xff]
    %v245 = vld [vmem:[#allocation3 + $0x3e0] sm:$0xff]
    %v246 = vld [vmem:[#allocation3 + $0x3e8] sm:$0xff]
    %v247 = vld [vmem:[#allocation3 + $0x3f0] sm:$0xff]
    %v248 = vld [vmem:[#allocation3 + $0x3f8] sm:$0xff]
    %v249 = vld [vmem:[#allocation3 + $0x400] sm:$0xff]
    %v250 = vld [vmem:[#allocation3 + $0x408] sm:$0xff]
    %v251 = vld [vmem:[#allocation3 + $0x410] sm:$0xff]
    %v252 = vld [vmem:[#allocation3 + $0x418] sm:$0xff]
    %v253 = vld [vmem:[#allocation3 + $0x420] sm:$0xff]
    %v254 = vld [vmem:[#allocation3 + $0x428] sm:$0xff]
    %v255 = vld [vmem:[#allocation3 + $0x430] sm:$0xff]
    %v256 = vld [vmem:[#allocation3 + $0x438] sm:$0xff]
    %v257 = vld [vmem:[#allocation3 + $0x440] sm:$0xff]
    %v258 = vld [vmem:[#allocation3 + $0x448] sm:$0xff]
    %v259 = vld [vmem:[#allocation3 + $0x450] sm:$0xff]
    %v260 = vld [vmem:[#allocation3 + $0x458] sm:$0xff]
    %v261 = vld [vmem:[#allocation3 + $0x460] sm:$0xff]
    %v262 = vld [vmem:[#allocation3 + $0x468] sm:$0xff]
    %v263 = vld [vmem:[#allocation3 + $0x470] sm:$0xff]
    %v264 = vld [vmem:[#allocation3 + $0x478] sm:$0xff]
    %v265 = vld [vmem:[#allocation3 + $0x480] sm:$0xff]
    %v266 = vld [vmem:[#allocation3 + $0x488] sm:$0xff]
    %v267 = vld [vmem:[#allocation3 + $0x490] sm:$0xff]
    %v268 = vld [vmem:[#allocation3 + $0x498] sm:$0xff]
    %v269 = vld [vmem:[#allocation3 + $0x4a0] sm:$0xff]
    %v270 = vld [vmem:[#allocation3 + $0x4a8] sm:$0xff]
    %v271 = vld [vmem:[#allocation3 + $0x4b0] sm:$0xff]
    %v272 = vld [vmem:[#allocation3 + $0x4b8] sm:$0xff]
    %v273 = vld [vmem:[#allocation3 + $0x4c0] sm:$0xff]
    %v274 = vld [vmem:[#allocation3 + $0x4c8] sm:$0xff]
    %v275 = vld [vmem:[#allocation3 + $0x4d0] sm:$0xff]
    %v276 = vld [vmem:[#allocation3 + $0x4d8] sm:$0xff]
    %v277 = vld [vmem:[#allocation3 + $0x4e0] sm:$0xff]
    %v278 = vld [vmem:[#allocation3 + $0x4e8] sm:$0xff]
    %v279 = vld [vmem:[#allocation3 + $0x4f0] sm:$0xff]
    %v280 = vld [vmem:[#allocation3 + $0x4f8] sm:$0xff]
    %v281 = vld [vmem:[#allocation3 + $0x500] sm:$0xff]
    %v282 = vld [vmem:[#allocation3 + $0x508] sm:$0xff]
    %v283 = vld [vmem:[#allocation3 + $0x510] sm:$0xff]
    %v284 = vld [vmem:[#allocation3 + $0x518] sm:$0xff]
    %v285 = vld [vmem:[#allocation3 + $0x520] sm:$0xff]
    %v286 = vld [vmem:[#allocation3 + $0x528] sm:$0xff]
    %v287 = vld [vmem:[#allocation3 + $0x530] sm:$0xff]
    %v288 = vld [vmem:[#allocation3 + $0x538] sm:$0xff]
    %v289 = vld [vmem:[#allocation3 + $0x540] sm:$0xff]
    %v290 = vld [vmem:[#allocation3 + $0x548] sm:$0xff]
    %v291 = vld [vmem:[#allocation3 + $0x550] sm:$0xff]
    %v292 = vld [vmem:[#allocation3 + $0x558] sm:$0xff]
    %v293 = vld [vmem:[#allocation3 + $0x560] sm:$0xff]
    %v294 = vld [vmem:[#allocation3 + $0x568] sm:$0xff]
    %v295 = vld [vmem:[#allocation3 + $0x570] sm:$0xff]
    %v296 = vld [vmem:[#allocation3 + $0x578] sm:$0xff]
    %v297 = vld [vmem:[#allocation3 + $0x580] sm:$0xff]
    %v298 = vld [vmem:[#allocation3 + $0x588] sm:$0xff]
    %v299 = vld [vmem:[#allocation3 + $0x590] sm:$0xff]
    %v300 = vld [vmem:[#allocation3 + $0x598] sm:$0xff]
    %v301 = vld [vmem:[#allocation3 + $0x5a0] sm:$0xff]
    %v302 = vld [vmem:[#allocation3 + $0x5a8] sm:$0xff]
    %v303 = vld [vmem:[#allocation3 + $0x5b0] sm:$0xff]
    %v304 = vld [vmem:[#allocation3 + $0x5b8] sm:$0xff]
    %v305 = vld [vmem:[#allocation3 + $0x5c0] sm:$0xff]
    %v306 = vld [vmem:[#allocation3 + $0x5c8] sm:$0xff]
    %v307 = vld [vmem:[#allocation3 + $0x5d0] sm:$0xff]
    %v308 = vld [vmem:[#allocation3 + $0x5d8] sm:$0xff]
    %v309 = vld [vmem:[#allocation3 + $0x5e0] sm:$0xff]
    %v310 = vld [vmem:[#allocation3 + $0x5e8] sm:$0xff]
    %v311 = vld [vmem:[#allocation3 + $0x5f0] sm:$0xff]
    %v312 = vld [vmem:[#allocation3 + $0x5f8] sm:$0xff]
    %v313 = vld [vmem:[#allocation3 + $0x600] sm:$0xff]
    %v314 = vld [vmem:[#allocation3 + $0x608] sm:$0xff]
    %v315 = vld [vmem:[#allocation3 + $0x610] sm:$0xff]
    %v316 = vld [vmem:[#allocation3 + $0x618] sm:$0xff]
    %v317 = vld [vmem:[#allocation3 + $0x620] sm:$0xff]
    %v318 = vld [vmem:[#allocation3 + $0x628] sm:$0xff]
    %v319 = vld [vmem:[#allocation3 + $0x630] sm:$0xff]
    %v320 = vld [vmem:[#allocation3 + $0x638] sm:$0xff]
    %v321 = vld [vmem:[#allocation3 + $0x640] sm:$0xff]
    %v322 = vld [vmem:[#allocation3 + $0x648] sm:$0xff]
    %v323 = vld [vmem:[#allocation3 + $0x650] sm:$0xff]
    %v324 = vld [vmem:[#allocation3 + $0x658] sm:$0xff]
    %v325 = vld [vmem:[#allocation3 + $0x660] sm:$0xff]
    %v326 = vld [vmem:[#allocation3 + $0x668] sm:$0xff]
    %v327 = vld [vmem:[#allocation3 + $0x670] sm:$0xff]
    %v328 = vld [vmem:[#allocation3 + $0x678] sm:$0xff]
    %v329 = vld [vmem:[#allocation3 + $0x680] sm:$0xff]
    %v330 = vld [vmem:[#allocation3 + $0x688] sm:$0xff]
    %v331 = vld [vmem:[#allocation3 + $0x690] sm:$0xff]
    %v332 = vld [vmem:[#allocation3 + $0x698] sm:$0xff]
    %v333 = vld [vmem:[#allocation3 + $0x6a0] sm:$0xff]
    %v334 = vld [vmem:[#allocation3 + $0x6a8] sm:$0xff]
    %v335 = vld [vmem:[#allocation3 + $0x6b0] sm:$0xff]
    %v336 = vld [vmem:[#allocation3 + $0x6b8] sm:$0xff]
    %v337 = vld [vmem:[#allocation3 + $0x6c0] sm:$0xff]
    %v338 = vld [vmem:[#allocation3 + $0x6c8] sm:$0xff]
    %v339 = vld [vmem:[#allocation3 + $0x6d0] sm:$0xff]
    %v340 = vld [vmem:[#allocation3 + $0x6d8] sm:$0xff]
    %v341 = vld [vmem:[#allocation3 + $0x6e0] sm:$0xff]
    %v342 = vld [vmem:[#allocation3 + $0x6e8] sm:$0xff]
    %v343 = vld [vmem:[#allocation3 + $0x6f0] sm:$0xff]
    %v344 = vld [vmem:[#allocation3 + $0x6f8] sm:$0xff]
    %v345 = vld [vmem:[#allocation3 + $0x700] sm:$0xff]
    %v346 = vld [vmem:[#allocation3 + $0x708] sm:$0xff]
    %v347 = vld [vmem:[#allocation3 + $0x710] sm:$0xff]
    %v348 = vld [vmem:[#allocation3 + $0x718] sm:$0xff]
    %v349 = vld [vmem:[#allocation3 + $0x720] sm:$0xff]
    %v350 = vld [vmem:[#allocation3 + $0x728] sm:$0xff]
    %v351 = vld [vmem:[#allocation3 + $0x730] sm:$0xff]
    %v352 = vld [vmem:[#allocation3 + $0x738] sm:$0xff]
    %v353 = vld [vmem:[#allocation3 + $0x740] sm:$0xff]
    %v354 = vld [vmem:[#allocation3 + $0x748] sm:$0xff]
    %v355 = vld [vmem:[#allocation3 + $0x750] sm:$0xff]
    %v356 = vld [vmem:[#allocation3 + $0x758] sm:$0xff]
    %v357 = vld [vmem:[#allocation3 + $0x760] sm:$0xff]
    %v358 = vld [vmem:[#allocation3 + $0x768] sm:$0xff]
    %v359 = vld [vmem:[#allocation3 + $0x770] sm:$0xff]
    %v360 = vld [vmem:[#allocation3 + $0x778] sm:$0xff]
    %v361 = vld [vmem:[#allocation3 + $0x780] sm:$0xff]
    %v362 = vld [vmem:[#allocation3 + $0x788] sm:$0xff]
    %v363 = vld [vmem:[#allocation3 + $0x790] sm:$0xff]
    %v364 = vld [vmem:[#allocation3 + $0x798] sm:$0xff]
    %v365 = vld [vmem:[#allocation3 + $0x7a0] sm:$0xff]
    %v366 = vld [vmem:[#allocation3 + $0x7a8] sm:$0xff]
    %v367 = vld [vmem:[#allocation3 + $0x7b0] sm:$0xff]
    %v368 = vld [vmem:[#allocation3 + $0x7b8] sm:$0xff]
    %v369 = vld [vmem:[#allocation3 + $0x7c0] sm:$0xff]
    %v370 = vld [vmem:[#allocation3 + $0x7c8] sm:$0xff]
    %v371 = vld [vmem:[#allocation3 + $0x7d0] sm:$0xff]
    %v372 = vld [vmem:[#allocation3 + $0x7d8] sm:$0xff]
    %v373 = vld [vmem:[#allocation3 + $0x7e0] sm:$0xff]
    %v374 = vld [vmem:[#allocation3 + $0x7e8] sm:$0xff]
    %v375 = vld [vmem:[#allocation3 + $0x7f0] sm:$0xff]
    %v376 = vld [vmem:[#allocation3 + $0x7f8] sm:$0xff]
    %v377 = vld [vmem:[#allocation3 + $0x800] sm:$0xff]
    %v378 = vld [vmem:[#allocation3 + $0x808] sm:$0xff]
    %v379 = vld [vmem:[#allocation3 + $0x810] sm:$0xff]
    %v380 = vld [vmem:[#allocation3 + $0x818] sm:$0xff]
    %v381 = vld [vmem:[#allocation3 + $0x820] sm:$0xff]
    %v382 = vld [vmem:[#allocation3 + $0x828] sm:$0xff]
    %v383 = vld [vmem:[#allocation3 + $0x830] sm:$0xff]
    %v384 = vld [vmem:[#allocation3 + $0x838] sm:$0xff]
    %v385 = vld [vmem:[#allocation3 + $0x840] sm:$0xff]
    %v386 = vld [vmem:[#allocation3 + $0x848] sm:$0xff]
    %v387 = vld [vmem:[#allocation3 + $0x850] sm:$0xff]
    %v388 = vld [vmem:[#allocation3 + $0x858] sm:$0xff]
    %v389 = vld [vmem:[#allocation3 + $0x860] sm:$0xff]
    %v390 = vld [vmem:[#allocation3 + $0x868] sm:$0xff]
    %v391 = vld [vmem:[#allocation3 + $0x870] sm:$0xff]
    %v392 = vld [vmem:[#allocation3 + $0x878] sm:$0xff]
    %v393 = vld [vmem:[#allocation3 + $0x880] sm:$0xff]
    %v394 = vld [vmem:[#allocation3 + $0x888] sm:$0xff]
    %v395 = vld [vmem:[#allocation3 + $0x890] sm:$0xff]
    %v396 = vld [vmem:[#allocation3 + $0x898] sm:$0xff]
    %v397 = vld [vmem:[#allocation3 + $0x8a0] sm:$0xff]
    %v398 = vld [vmem:[#allocation3 + $0x8a8] sm:$0xff]
    %v399 = vld [vmem:[#allocation3 + $0x8b0] sm:$0xff]
    %v400 = vld [vmem:[#allocation3 + $0x8b8] sm:$0xff]
    %v401 = vld [vmem:[#allocation3 + $0x8c0] sm:$0xff]
    %v402 = vld [vmem:[#allocation3 + $0x8c8] sm:$0xff]
    %v403 = vld [vmem:[#allocation3 + $0x8d0] sm:$0xff]
    %v404 = vld [vmem:[#allocation3 + $0x8d8] sm:$0xff]
    %v405 = vld [vmem:[#allocation3 + $0x8e0] sm:$0xff]
    %v406 = vld [vmem:[#allocation3 + $0x8e8] sm:$0xff]
    %v407 = vld [vmem:[#allocation3 + $0x8f0] sm:$0xff]
    %v408 = vld [vmem:[#allocation3 + $0x8f8] sm:$0xff]
    %v409 = vld [vmem:[#allocation3 + $0x900] sm:$0xff]
    %v410 = vld [vmem:[#allocation3 + $0x908] sm:$0xff]
    %v411 = vld [vmem:[#allocation3 + $0x910] sm:$0xff]
    %v412 = vld [vmem:[#allocation3 + $0x918] sm:$0xff]
    %v413 = vld [vmem:[#allocation3 + $0x920] sm:$0xff]
    %v414 = vld [vmem:[#allocation3 + $0x928] sm:$0xff]
    %v415 = vld [vmem:[#allocation3 + $0x930] sm:$0xff]
    %v416 = vld [vmem:[#allocation3 + $0x938] sm:$0xff]
    %v417 = vld [vmem:[#allocation3 + $0x940] sm:$0xff]
    %v418 = vld [vmem:[#allocation3 + $0x948] sm:$0xff]
    %v419 = vld [vmem:[#allocation3 + $0x950] sm:$0xff]
    %v420 = vld [vmem:[#allocation3 + $0x958] sm:$0xff]
    %v421 = vld [vmem:[#allocation3 + $0x960] sm:$0xff]
    %v422 = vld [vmem:[#allocation3 + $0x968] sm:$0xff]
    %v423 = vld [vmem:[#allocation3 + $0x970] sm:$0xff]
    %v424 = vld [vmem:[#allocation3 + $0x978] sm:$0xff]
    %v425 = vld [vmem:[#allocation3 + $0x980] sm:$0xff]
    %v426 = vld [vmem:[#allocation3 + $0x988] sm:$0xff]
    %v427 = vld [vmem:[#allocation3 + $0x990] sm:$0xff]
    %v428 = vld [vmem:[#allocation3 + $0x998] sm:$0xff]
    %v429 = vld [vmem:[#allocation3 + $0x9a0] sm:$0xff]
    %v430 = vld [vmem:[#allocation3 + $0x9a8] sm:$0xff]
    %v431 = vld [vmem:[#allocation3 + $0x9b0] sm:$0xff]
    %v432 = vld [vmem:[#allocation3 + $0x9b8] sm:$0xff]
    %v433 = vld [vmem:[#allocation3 + $0x9c0] sm:$0xff]
    %v434 = vld [vmem:[#allocation3 + $0x9c8] sm:$0xff]
    %v435 = vld [vmem:[#allocation3 + $0x9d0] sm:$0xff]
    %v436 = vld [vmem:[#allocation3 + $0x9d8] sm:$0xff]
    %v437 = vld [vmem:[#allocation3 + $0x9e0] sm:$0xff]
    %v438 = vld [vmem:[#allocation3 + $0x9e8] sm:$0xff]
    %v439 = vld [vmem:[#allocation3 + $0x9f0] sm:$0xff]
    %v440 = vld [vmem:[#allocation3 + $0x9f8] sm:$0xff]
    %v441 = vld [vmem:[#allocation3 + $0xa00] sm:$0xff]
    %v442 = vld [vmem:[#allocation3 + $0xa08] sm:$0xff]
    %v443 = vld [vmem:[#allocation3 + $0xa10] sm:$0xff]
    %v444 = vld [vmem:[#allocation3 + $0xa18] sm:$0xff]
    %v445 = vld [vmem:[#allocation3 + $0xa20] sm:$0xff]
    %v446 = vld [vmem:[#allocation3 + $0xa28] sm:$0xff]
    %v447 = vld [vmem:[#allocation3 + $0xa30] sm:$0xff]
    %v448 = vld [vmem:[#allocation3 + $0xa38] sm:$0xff]
    %v449 = vld [vmem:[#allocation3 + $0xa40] sm:$0xff]
    %v450 = vld [vmem:[#allocation3 + $0xa48] sm:$0xff]
    %v451 = vld [vmem:[#allocation3 + $0xa50] sm:$0xff]
    %v452 = vld [vmem:[#allocation3 + $0xa58] sm:$0xff]
    %v453 = vld [vmem:[#allocation3 + $0xa60] sm:$0xff]
    %v454 = vld [vmem:[#allocation3 + $0xa68] sm:$0xff]
    %v455 = vld [vmem:[#allocation3 + $0xa70] sm:$0xff]
    %v456 = vld [vmem:[#allocation3 + $0xa78] sm:$0xff]
    %v457 = vld [vmem:[#allocation3 + $0xa80] sm:$0xff]
    %v458 = vld [vmem:[#allocation3 + $0xa88] sm:$0xff]
    %v459 = vld [vmem:[#allocation3 + $0xa90] sm:$0xff]
    %v460 = vld [vmem:[#allocation3 + $0xa98] sm:$0xff]
    %v461 = vld [vmem:[#allocation3 + $0xaa0] sm:$0xff]
    %v462 = vld [vmem:[#allocation3 + $0xaa8] sm:$0xff]
    %v463 = vld [vmem:[#allocation3 + $0xab0] sm:$0xff]
    %v464 = vld [vmem:[#allocation3 + $0xab8] sm:$0xff]
    %v465 = vld [vmem:[#allocation3 + $0xac0] sm:$0xff]
    %v466 = vld [vmem:[#allocation3 + $0xac8] sm:$0xff]
    %v467 = vld [vmem:[#allocation3 + $0xad0] sm:$0xff]
    %v468 = vld [vmem:[#allocation3 + $0xad8] sm:$0xff]
    %v469 = vld [vmem:[#allocation3 + $0xae0] sm:$0xff]
    %v470 = vld [vmem:[#allocation3 + $0xae8] sm:$0xff]
    %v471 = vld [vmem:[#allocation3 + $0xaf0] sm:$0xff]
    %v472 = vld [vmem:[#allocation3 + $0xaf8] sm:$0xff]
    %v473 = vld [vmem:[#allocation3 + $0xb00] sm:$0xff]
    %v474 = vld [vmem:[#allocation3 + $0xb08] sm:$0xff]
    %v475 = vld [vmem:[#allocation3 + $0xb10] sm:$0xff]
    %v476 = vld [vmem:[#allocation3 + $0xb18] sm:$0xff]
    %v477 = vld [vmem:[#allocation3 + $0xb20] sm:$0xff]
    %v478 = vld [vmem:[#allocation3 + $0xb28] sm:$0xff]
    %v479 = vld [vmem:[#allocation3 + $0xb30] sm:$0xff]
    %v480 = vld [vmem:[#allocation3 + $0xb38] sm:$0xff]
    %v481 = vld [vmem:[#allocation3 + $0xb40] sm:$0xff]
    %v482 = vld [vmem:[#allocation3 + $0xb48] sm:$0xff]
    %v483 = vld [vmem:[#allocation3 + $0xb50] sm:$0xff]
    %v484 = vld [vmem:[#allocation3 + $0xb58] sm:$0xff]
    %v485 = vld [vmem:[#allocation3 + $0xb60] sm:$0xff]
    %v486 = vld [vmem:[#allocation3 + $0xb68] sm:$0xff]
    %v487 = vld [vmem:[#allocation3 + $0xb70] sm:$0xff]
    %v488 = vld [vmem:[#allocation3 + $0xb78] sm:$0xff]
    %v489 = vld [vmem:[#allocation3 + $0xb80] sm:$0xff]
    %v490 = vld [vmem:[#allocation3 + $0xb88] sm:$0xff]
    %v491 = vld [vmem:[#allocation3 + $0xb90] sm:$0xff]
    %v492 = vld [vmem:[#allocation3 + $0xb98] sm:$0xff]
    %v493 = vld [vmem:[#allocation3 + $0xba0] sm:$0xff]
    %v494 = vld [vmem:[#allocation3 + $0xba8] sm:$0xff]
    %v495 = vld [vmem:[#allocation3 + $0xbb0] sm:$0xff]
    %v496 = vld [vmem:[#allocation3 + $0xbb8] sm:$0xff]
    %v497 = vld [vmem:[#allocation3 + $0xbc0] sm:$0xff]
    %v498 = vld [vmem:[#allocation3 + $0xbc8] sm:$0xff]
    %v499 = vld [vmem:[#allocation3 + $0xbd0] sm:$0xff]
    %v500 = vld [vmem:[#allocation3 + $0xbd8] sm:$0xff]
    %v501 = vld [vmem:[#allocation3 + $0xbe0] sm:$0xff]
    %v502 = vld [vmem:[#allocation3 + $0xbe8] sm:$0xff]
    %v503 = vld [vmem:[#allocation3 + $0xbf0] sm:$0xff]
    %v504 = vld [vmem:[#allocation3 + $0xbf8] sm:$0xff]
    %v505 = vld [vmem:[#allocation3 + $0xc00] sm:$0xff]
    %v506 = vld [vmem:[#allocation3 + $0xc08] sm:$0xff]
    %v507 = vld [vmem:[#allocation3 + $0xc10] sm:$0xff]
    %v508 = vld [vmem:[#allocation3 + $0xc18] sm:$0xff]
    %v509 = vld [vmem:[#allocation3 + $0xc20] sm:$0xff]
    %v510 = vld [vmem:[#allocation3 + $0xc28] sm:$0xff]
    %v511 = vld [vmem:[#allocation3 + $0xc30] sm:$0xff]
    %v512 = vld [vmem:[#allocation3 + $0xc38] sm:$0xff]
    %v513 = vld [vmem:[#allocation3 + $0xc40] sm:$0xff]
    %v514 = vld [vmem:[#allocation3 + $0xc48] sm:$0xff]
    %v515 = vld [vmem:[#allocation3 + $0xc50] sm:$0xff]
    %v516 = vld [vmem:[#allocation3 + $0xc58] sm:$0xff]
    %v517 = vld [vmem:[#allocation3 + $0xc60] sm:$0xff]
    %v518 = vld [vmem:[#allocation3 + $0xc68] sm:$0xff]
    %v519 = vld [vmem:[#allocation3 + $0xc70] sm:$0xff]
    %v520 = vld [vmem:[#allocation3 + $0xc78] sm:$0xff]
    %v521 = vld [vmem:[#allocation3 + $0xc80] sm:$0xff]
    %v522 = vld [vmem:[#allocation3 + $0xc88] sm:$0xff]
    %v523 = vld [vmem:[#allocation3 + $0xc90] sm:$0xff]
    %v524 = vld [vmem:[#allocation3 + $0xc98] sm:$0xff]
    %v525 = vld [vmem:[#allocation3 + $0xca0] sm:$0xff]
    %v526 = vld [vmem:[#allocation3 + $0xca8] sm:$0xff]
    %v527 = vld [vmem:[#allocation3 + $0xcb0] sm:$0xff]
    %v528 = vld [vmem:[#allocation3 + $0xcb8] sm:$0xff]
    %v529 = vld [vmem:[#allocation3 + $0xcc0] sm:$0xff]
    %v530 = vld [vmem:[#allocation3 + $0xcc8] sm:$0xff]
    %v531 = vld [vmem:[#allocation3 + $0xcd0] sm:$0xff]
    %v532 = vld [vmem:[#allocation3 + $0xcd8] sm:$0xff]
    %v533 = vld [vmem:[#allocation3 + $0xce0] sm:$0xff]
    %v534 = vld [vmem:[#allocation3 + $0xce8] sm:$0xff]
    %v535 = vld [vmem:[#allocation3 + $0xcf0] sm:$0xff]
    %v536 = vld [vmem:[#allocation3 + $0xcf8] sm:$0xff]
    %v537 = vld [vmem:[#allocation3 + $0xd00] sm:$0xff]
    %v538 = vld [vmem:[#allocation3 + $0xd08] sm:$0xff]
    %v539 = vld [vmem:[#allocation3 + $0xd10] sm:$0xff]
    %v540 = vld [vmem:[#allocation3 + $0xd18] sm:$0xff]
    %v541 = vld [vmem:[#allocation3 + $0xd20] sm:$0xff]
    %v542 = vld [vmem:[#allocation3 + $0xd28] sm:$0xff]
    %v543 = vld [vmem:[#allocation3 + $0xd30] sm:$0xff]
    %v544 = vld [vmem:[#allocation3 + $0xd38] sm:$0xff]
    %v545 = vld [vmem:[#allocation3 + $0xd40] sm:$0xff]
    %v546 = vld [vmem:[#allocation3 + $0xd48] sm:$0xff]
    %v547 = vld [vmem:[#allocation3 + $0xd50] sm:$0xff]
    %v548 = vld [vmem:[#allocation3 + $0xd58] sm:$0xff]
    %v549 = vld [vmem:[#allocation3 + $0xd60] sm:$0xff]
    %v550 = vld [vmem:[#allocation3 + $0xd68] sm:$0xff]
    %v551 = vld [vmem:[#allocation3 + $0xd70] sm:$0xff]
    %v552 = vld [vmem:[#allocation3 + $0xd78] sm:$0xff]
    %v553 = vld [vmem:[#allocation3 + $0xd80] sm:$0xff]
    %v554 = vld [vmem:[#allocation3 + $0xd88] sm:$0xff]
    %v555 = vld [vmem:[#allocation3 + $0xd90] sm:$0xff]
    %v556 = vld [vmem:[#allocation3 + $0xd98] sm:$0xff]
    %v557 = vld [vmem:[#allocation3 + $0xda0] sm:$0xff]
    %v558 = vld [vmem:[#allocation3 + $0xda8] sm:$0xff]
    %v559 = vld [vmem:[#allocation3 + $0xdb0] sm:$0xff]
    %v560 = vld [vmem:[#allocation3 + $0xdb8] sm:$0xff]
    %v561 = vld [vmem:[#allocation3 + $0xdc0] sm:$0xff]
    %v562 = vld [vmem:[#allocation3 + $0xdc8] sm:$0xff]
    %v563 = vld [vmem:[#allocation3 + $0xdd0] sm:$0xff]
    %v564 = vld [vmem:[#allocation3 + $0xdd8] sm:$0xff]
    %v565 = vld [vmem:[#allocation3 + $0xde0] sm:$0xff]
    %v566 = vld [vmem:[#allocation3 + $0xde8] sm:$0xff]
    %v567 = vld [vmem:[#allocation3 + $0xdf0] sm:$0xff]
    %v568 = vld [vmem:[#allocation3 + $0xdf8] sm:$0xff]
    %v569 = vld [vmem:[#allocation3 + $0xe00] sm:$0xff]
    %v570 = vld [vmem:[#allocation3 + $0xe08] sm:$0xff]
    %v571 = vld [vmem:[#allocation3 + $0xe10] sm:$0xff]
    %v572 = vld [vmem:[#allocation3 + $0xe18] sm:$0xff]
    %v573 = vld [vmem:[#allocation3 + $0xe20] sm:$0xff]
    %v574 = vld [vmem:[#allocation3 + $0xe28] sm:$0xff]
    %v575 = vld [vmem:[#allocation3 + $0xe30] sm:$0xff]
    %v576 = vld [vmem:[#allocation3 + $0xe38] sm:$0xff]
    %v577 = vld [vmem:[#allocation3 + $0xe40] sm:$0xff]
    %v578 = vld [vmem:[#allocation3 + $0xe48] sm:$0xff]
    %v579 = vld [vmem:[#allocation3 + $0xe50] sm:$0xff]
    %v580 = vld [vmem:[#allocation3 + $0xe58] sm:$0xff]
    %v581 = vld [vmem:[#allocation3 + $0xe60] sm:$0xff]
    %v582 = vld [vmem:[#allocation3 + $0xe68] sm:$0xff]
    %v583 = vld [vmem:[#allocation3 + $0xe70] sm:$0xff]
    %v584 = vld [vmem:[#allocation3 + $0xe78] sm:$0xff]
    %v585 = vld [vmem:[#allocation3 + $0xe80] sm:$0xff]
    %v586 = vld [vmem:[#allocation3 + $0xe88] sm:$0xff]
    %v587 = vld [vmem:[#allocation3 + $0xe90] sm:$0xff]
    %v588 = vld [vmem:[#allocation3 + $0xe98] sm:$0xff]
    %v589 = vld [vmem:[#allocation3 + $0xea0] sm:$0xff]
    %v590 = vld [vmem:[#allocation3 + $0xea8] sm:$0xff]
    %v591 = vld [vmem:[#allocation3 + $0xeb0] sm:$0xff]
    %v592 = vld [vmem:[#allocation3 + $0xeb8] sm:$0xff]
    %v593 = vld [vmem:[#allocation3 + $0xec0] sm:$0xff]
    %v594 = vld [vmem:[#allocation3 + $0xec8] sm:$0xff]
    %v595 = vld [vmem:[#allocation3 + $0xed0] sm:$0xff]
    %v596 = vld [vmem:[#allocation3 + $0xed8] sm:$0xff]
    %v597 = vld [vmem:[#allocation3 + $0xee0] sm:$0xff]
    %v598 = vld [vmem:[#allocation3 + $0xee8] sm:$0xff]
    %v599 = vld [vmem:[#allocation3 + $0xef0] sm:$0xff]
    %v600 = vld [vmem:[#allocation3 + $0xef8] sm:$0xff]
    %v601 = vld [vmem:[#allocation3 + $0xf00] sm:$0xff]
    %v602 = vld [vmem:[#allocation3 + $0xf08] sm:$0xff]
    %v603 = vld [vmem:[#allocation3 + $0xf10] sm:$0xff]
    %v604 = vld [vmem:[#allocation3 + $0xf18] sm:$0xff]
    %v605 = vld [vmem:[#allocation3 + $0xf20] sm:$0xff]
    %v606 = vld [vmem:[#allocation3 + $0xf28] sm:$0xff]
    %v607 = vld [vmem:[#allocation3 + $0xf30] sm:$0xff]
    %v608 = vld [vmem:[#allocation3 + $0xf38] sm:$0xff]
    %v609 = vld [vmem:[#allocation3 + $0xf40] sm:$0xff]
    %v610 = vld [vmem:[#allocation3 + $0xf48] sm:$0xff]
    %v611 = vld [vmem:[#allocation3 + $0xf50] sm:$0xff]
    %v612 = vld [vmem:[#allocation3 + $0xf58] sm:$0xff]
    %v613 = vld [vmem:[#allocation3 + $0xf60] sm:$0xff]
    %v614 = vld [vmem:[#allocation3 + $0xf68] sm:$0xff]
    %v615 = vld [vmem:[#allocation3 + $0xf70] sm:$0xff]
    %v616 = vld [vmem:[#allocation3 + $0xf78] sm:$0xff]
    %v617 = vld [vmem:[#allocation3 + $0xf80] sm:$0xff]
    %v618 = vld [vmem:[#allocation3 + $0xf88] sm:$0xff]
    %v619 = vld [vmem:[#allocation3 + $0xf90] sm:$0xff]
    %v620 = vld [vmem:[#allocation3 + $0xf98] sm:$0xff]
    %v621 = vld [vmem:[#allocation3 + $0xfa0] sm:$0xff]
    %v622 = vld [vmem:[#allocation3 + $0xfa8] sm:$0xff]
    %v623 = vld [vmem:[#allocation3 + $0xfb0] sm:$0xff]
    %v624 = vld [vmem:[#allocation3 + $0xfb8] sm:$0xff]
    %v625 = vld [vmem:[#allocation3 + $0xfc0] sm:$0xff]
    %v626 = vld [vmem:[#allocation3 + $0xfc8] sm:$0xff]
    %v627 = vld [vmem:[#allocation3 + $0xfd0] sm:$0xff]
    %v628 = vld [vmem:[#allocation3 + $0xfd8] sm:$0xff]
    %v629 = vld [vmem:[#allocation3 + $0xfe0] sm:$0xff]
    %v630 = vld [vmem:[#allocation3 + $0xfe8] sm:$0xff]
    %v631 = vld [vmem:[#allocation3 + $0xff0] sm:$0xff]
    %v632 = vld [vmem:[#allocation3 + $0xff8] sm:$0xff]
    %v633 = vld [vmem:[#allocation5] sm:$0xff]
    %v635 = vlaneseq
    %v636 = vshrl.u32 %v635, 7
    %v637 = vsub.s32 0, %v636
    %v638 = vrot.slane %v633, %v637
    %v639 = vlaneseq
    %v640 = vshrl.u32 %v639, 7
    %v641 = vsub.s32 1, %v640
    %v642 = vrot.slane %v633, %v641
    %v643 = vlaneseq
    %v644 = vshrl.u32 %v643, 7
    %v645 = vsub.s32 2, %v644
    %v646 = vrot.slane %v633, %v645
    %v647 = vlaneseq
    %v648 = vshrl.u32 %v647, 7
    %v649 = vsub.s32 3, %v648
    %v650 = vrot.slane %v633, %v649
    %v651 = vlaneseq
    %v652 = vshrl.u32 %v651, 7
    %v653 = vsub.s32 4, %v652
    %v654 = vrot.slane %v633, %v653
    %v655 = vlaneseq
    %v656 = vshrl.u32 %v655, 7
    %v657 = vsub.s32 5, %v656
    %v658 = vrot.slane %v633, %v657
    %v659 = vlaneseq
    %v660 = vshrl.u32 %v659, 7
    %v661 = vsub.s32 6, %v660
    %v662 = vrot.slane %v633, %v661
    %v663 = vlaneseq
    %v664 = vshrl.u32 %v663, 7
    %v665 = vsub.s32 7, %v664
    %v666 = vrot.slane %v633, %v665
    %v1187 = vunpack.c.l.b16 %v121
    %v1188 = vunpack.c.h.b16 %v121
    %v1189 = vunpack.c.l.b16 %v122
    %v1190 = vunpack.c.h.b16 %v122
    %v1191 = vunpack.c.l.b16 %v123
    %v1192 = vunpack.c.h.b16 %v123
    %v1193 = vunpack.c.l.b16 %v124
    %v1194 = vunpack.c.h.b16 %v124
    %v1195 = vunpack.c.l.b16 %v125
    %v1196 = vunpack.c.h.b16 %v125
    %v1197 = vunpack.c.l.b16 %v126
    %v1198 = vunpack.c.h.b16 %v126
    %v1199 = vunpack.c.l.b16 %v127
    %v1200 = vunpack.c.h.b16 %v127
    %v1201 = vunpack.c.l.b16 %v128
    %v1202 = vunpack.c.h.b16 %v128
    %v1203 = vunpack.c.l.b16 %v129
    %v1204 = vunpack.c.h.b16 %v129
    %v1205 = vunpack.c.l.b16 %v130
    %v1206 = vunpack.c.h.b16 %v130
    %v1207 = vunpack.c.l.b16 %v131
    %v1208 = vunpack.c.h.b16 %v131
    %v1209 = vunpack.c.l.b16 %v132
    %v1210 = vunpack.c.h.b16 %v132
    %v1211 = vunpack.c.l.b16 %v133
    %v1212 = vunpack.c.h.b16 %v133
    %v1213 = vunpack.c.l.b16 %v134
    %v1214 = vunpack.c.h.b16 %v134
    %v1215 = vunpack.c.l.b16 %v135
    %v1216 = vunpack.c.h.b16 %v135
    %v1217 = vunpack.c.l.b16 %v136
    %v1218 = vunpack.c.h.b16 %v136
    %v1219 = vunpack.c.l.b16 %v137
    %v1220 = vunpack.c.h.b16 %v137
    %v1221 = vunpack.c.l.b16 %v138
    %v1222 = vunpack.c.h.b16 %v138
    %v1223 = vunpack.c.l.b16 %v139
    %v1224 = vunpack.c.h.b16 %v139
    %v1225 = vunpack.c.l.b16 %v140
    %v1226 = vunpack.c.h.b16 %v140
    %v1227 = vunpack.c.l.b16 %v141
    %v1228 = vunpack.c.h.b16 %v141
    %v1229 = vunpack.c.l.b16 %v142
    %v1230 = vunpack.c.h.b16 %v142
    %v1231 = vunpack.c.l.b16 %v143
    %v1232 = vunpack.c.h.b16 %v143
    %v1233 = vunpack.c.l.b16 %v144
    %v1234 = vunpack.c.h.b16 %v144
    %v1235 = vunpack.c.l.b16 %v145
    %v1236 = vunpack.c.h.b16 %v145
    %v1237 = vunpack.c.l.b16 %v146
    %v1238 = vunpack.c.h.b16 %v146
    %v1239 = vunpack.c.l.b16 %v147
    %v1240 = vunpack.c.h.b16 %v147
    %v1241 = vunpack.c.l.b16 %v148
    %v1242 = vunpack.c.h.b16 %v148
    %v1243 = vunpack.c.l.b16 %v149
    %v1244 = vunpack.c.h.b16 %v149
    %v1245 = vunpack.c.l.b16 %v150
    %v1246 = vunpack.c.h.b16 %v150
    %v1247 = vunpack.c.l.b16 %v151
    %v1248 = vunpack.c.h.b16 %v151
    %v1249 = vunpack.c.l.b16 %v152
    %v1250 = vunpack.c.h.b16 %v152
    %v1251 = vunpack.c.l.b16 %v153
    %v1252 = vunpack.c.h.b16 %v153
    %v1253 = vunpack.c.l.b16 %v154
    %v1254 = vunpack.c.h.b16 %v154
    %v1255 = vunpack.c.l.b16 %v155
    %v1256 = vunpack.c.h.b16 %v155
    %v1257 = vunpack.c.l.b16 %v156
    %v1258 = vunpack.c.h.b16 %v156
    %v1259 = vunpack.c.l.b16 %v157
    %v1260 = vunpack.c.h.b16 %v157
    %v1261 = vunpack.c.l.b16 %v158
    %v1262 = vunpack.c.h.b16 %v158
    %v1263 = vunpack.c.l.b16 %v159
    %v1264 = vunpack.c.h.b16 %v159
    %v1265 = vunpack.c.l.b16 %v160
    %v1266 = vunpack.c.h.b16 %v160
    %v1267 = vunpack.c.l.b16 %v161
    %v1268 = vunpack.c.h.b16 %v161
    %v1269 = vunpack.c.l.b16 %v162
    %v1270 = vunpack.c.h.b16 %v162
    %v1271 = vunpack.c.l.b16 %v163
    %v1272 = vunpack.c.h.b16 %v163
    %v1273 = vunpack.c.l.b16 %v164
    %v1274 = vunpack.c.h.b16 %v164
    %v1275 = vunpack.c.l.b16 %v165
    %v1276 = vunpack.c.h.b16 %v165
    %v1277 = vunpack.c.l.b16 %v166
    %v1278 = vunpack.c.h.b16 %v166
    %v1279 = vunpack.c.l.b16 %v167
    %v1280 = vunpack.c.h.b16 %v167
    %v1281 = vunpack.c.l.b16 %v168
    %v1282 = vunpack.c.h.b16 %v168
    %v1283 = vunpack.c.l.b16 %v169
    %v1284 = vunpack.c.h.b16 %v169
    %v1285 = vunpack.c.l.b16 %v170
    %v1286 = vunpack.c.h.b16 %v170
    %v1287 = vunpack.c.l.b16 %v171
    %v1288 = vunpack.c.h.b16 %v171
    %v1289 = vunpack.c.l.b16 %v172
    %v1290 = vunpack.c.h.b16 %v172
    %v1291 = vunpack.c.l.b16 %v173
    %v1292 = vunpack.c.h.b16 %v173
    %v1293 = vunpack.c.l.b16 %v174
    %v1294 = vunpack.c.h.b16 %v174
    %v1295 = vunpack.c.l.b16 %v175
    %v1296 = vunpack.c.h.b16 %v175
    %v1297 = vunpack.c.l.b16 %v176
    %v1298 = vunpack.c.h.b16 %v176
    %v1299 = vunpack.c.l.b16 %v177
    %v1300 = vunpack.c.h.b16 %v177
    %v1301 = vunpack.c.l.b16 %v178
    %v1302 = vunpack.c.h.b16 %v178
    %v1303 = vunpack.c.l.b16 %v179
    %v1304 = vunpack.c.h.b16 %v179
    %v1305 = vunpack.c.l.b16 %v180
    %v1306 = vunpack.c.h.b16 %v180
    %v1307 = vunpack.c.l.b16 %v181
    %v1308 = vunpack.c.h.b16 %v181
    %v1309 = vunpack.c.l.b16 %v182
    %v1310 = vunpack.c.h.b16 %v182
    %v1311 = vunpack.c.l.b16 %v183
    %v1312 = vunpack.c.h.b16 %v183
    %v1313 = vunpack.c.l.b16 %v184
    %v1314 = vunpack.c.h.b16 %v184
    %v1315 = vunpack.c.l.b16 %v185
    %v1316 = vunpack.c.h.b16 %v185
    %v1317 = vunpack.c.l.b16 %v186
    %v1318 = vunpack.c.h.b16 %v186
    %v1319 = vunpack.c.l.b16 %v187
    %v1320 = vunpack.c.h.b16 %v187
    %v1321 = vunpack.c.l.b16 %v188
    %v1322 = vunpack.c.h.b16 %v188
    %v1323 = vunpack.c.l.b16 %v189
    %v1324 = vunpack.c.h.b16 %v189
    %v1325 = vunpack.c.l.b16 %v190
    %v1326 = vunpack.c.h.b16 %v190
    %v1327 = vunpack.c.l.b16 %v191
    %v1328 = vunpack.c.h.b16 %v191
    %v1329 = vunpack.c.l.b16 %v192
    %v1330 = vunpack.c.h.b16 %v192
    %v1331 = vunpack.c.l.b16 %v193
    %v1332 = vunpack.c.h.b16 %v193
    %v1333 = vunpack.c.l.b16 %v194
    %v1334 = vunpack.c.h.b16 %v194
    %v1335 = vunpack.c.l.b16 %v195
    %v1336 = vunpack.c.h.b16 %v195
    %v1337 = vunpack.c.l.b16 %v196
    %v1338 = vunpack.c.h.b16 %v196
    %v1339 = vunpack.c.l.b16 %v197
    %v1340 = vunpack.c.h.b16 %v197
    %v1341 = vunpack.c.l.b16 %v198
    %v1342 = vunpack.c.h.b16 %v198
    %v1343 = vunpack.c.l.b16 %v199
    %v1344 = vunpack.c.h.b16 %v199
    %v1345 = vunpack.c.l.b16 %v200
    %v1346 = vunpack.c.h.b16 %v200
    %v1347 = vunpack.c.l.b16 %v201
    %v1348 = vunpack.c.h.b16 %v201
    %v1349 = vunpack.c.l.b16 %v202
    %v1350 = vunpack.c.h.b16 %v202
    %v1351 = vunpack.c.l.b16 %v203
    %v1352 = vunpack.c.h.b16 %v203
    %v1353 = vunpack.c.l.b16 %v204
    %v1354 = vunpack.c.h.b16 %v204
    %v1355 = vunpack.c.l.b16 %v205
    %v1356 = vunpack.c.h.b16 %v205
    %v1357 = vunpack.c.l.b16 %v206
    %v1358 = vunpack.c.h.b16 %v206
    %v1359 = vunpack.c.l.b16 %v207
    %v1360 = vunpack.c.h.b16 %v207
    %v1361 = vunpack.c.l.b16 %v208
    %v1362 = vunpack.c.h.b16 %v208
    %v1363 = vunpack.c.l.b16 %v209
    %v1364 = vunpack.c.h.b16 %v209
    %v1365 = vunpack.c.l.b16 %v210
    %v1366 = vunpack.c.h.b16 %v210
    %v1367 = vunpack.c.l.b16 %v211
    %v1368 = vunpack.c.h.b16 %v211
    %v1369 = vunpack.c.l.b16 %v212
    %v1370 = vunpack.c.h.b16 %v212
    %v1371 = vunpack.c.l.b16 %v213
    %v1372 = vunpack.c.h.b16 %v213
    %v1373 = vunpack.c.l.b16 %v214
    %v1374 = vunpack.c.h.b16 %v214
    %v1375 = vunpack.c.l.b16 %v215
    %v1376 = vunpack.c.h.b16 %v215
    %v1377 = vunpack.c.l.b16 %v216
    %v1378 = vunpack.c.h.b16 %v216
    %v1379 = vunpack.c.l.b16 %v217
    %v1380 = vunpack.c.h.b16 %v217
    %v1381 = vunpack.c.l.b16 %v218
    %v1382 = vunpack.c.h.b16 %v218
    %v1383 = vunpack.c.l.b16 %v219
    %v1384 = vunpack.c.h.b16 %v219
    %v1385 = vunpack.c.l.b16 %v220
    %v1386 = vunpack.c.h.b16 %v220
    %v1387 = vunpack.c.l.b16 %v221
    %v1388 = vunpack.c.h.b16 %v221
    %v1389 = vunpack.c.l.b16 %v222
    %v1390 = vunpack.c.h.b16 %v222
    %v1391 = vunpack.c.l.b16 %v223
    %v1392 = vunpack.c.h.b16 %v223
    %v1393 = vunpack.c.l.b16 %v224
    %v1394 = vunpack.c.h.b16 %v224
    %v1395 = vunpack.c.l.b16 %v225
    %v1396 = vunpack.c.h.b16 %v225
    %v1397 = vunpack.c.l.b16 %v226
    %v1398 = vunpack.c.h.b16 %v226
    %v1399 = vunpack.c.l.b16 %v227
    %v1400 = vunpack.c.h.b16 %v227
    %v1401 = vunpack.c.l.b16 %v228
    %v1402 = vunpack.c.h.b16 %v228
    %v1403 = vunpack.c.l.b16 %v229
    %v1404 = vunpack.c.h.b16 %v229
    %v1405 = vunpack.c.l.b16 %v230
    %v1406 = vunpack.c.h.b16 %v230
    %v1407 = vunpack.c.l.b16 %v231
    %v1408 = vunpack.c.h.b16 %v231
    %v1409 = vunpack.c.l.b16 %v232
    %v1410 = vunpack.c.h.b16 %v232
    %v1411 = vunpack.c.l.b16 %v233
    %v1412 = vunpack.c.h.b16 %v233
    %v1413 = vunpack.c.l.b16 %v234
    %v1414 = vunpack.c.h.b16 %v234
    %v1415 = vunpack.c.l.b16 %v235
    %v1416 = vunpack.c.h.b16 %v235
    %v1417 = vunpack.c.l.b16 %v236
    %v1418 = vunpack.c.h.b16 %v236
    %v1419 = vunpack.c.l.b16 %v237
    %v1420 = vunpack.c.h.b16 %v237
    %v1421 = vunpack.c.l.b16 %v238
    %v1422 = vunpack.c.h.b16 %v238
    %v1423 = vunpack.c.l.b16 %v239
    %v1424 = vunpack.c.h.b16 %v239
    %v1425 = vunpack.c.l.b16 %v240
    %v1426 = vunpack.c.h.b16 %v240
    %v1427 = vunpack.c.l.b16 %v241
    %v1428 = vunpack.c.h.b16 %v241
    %v1429 = vunpack.c.l.b16 %v242
    %v1430 = vunpack.c.h.b16 %v242
    %v1431 = vunpack.c.l.b16 %v243
    %v1432 = vunpack.c.h.b16 %v243
    %v1433 = vunpack.c.l.b16 %v244
    %v1434 = vunpack.c.h.b16 %v244
    %v1435 = vunpack.c.l.b16 %v245
    %v1436 = vunpack.c.h.b16 %v245
    %v1437 = vunpack.c.l.b16 %v246
    %v1438 = vunpack.c.h.b16 %v246
    %v1439 = vunpack.c.l.b16 %v247
    %v1440 = vunpack.c.h.b16 %v247
    %v1441 = vunpack.c.l.b16 %v248
    %v1442 = vunpack.c.h.b16 %v248
    %v1443 = vunpack.c.l.b16 %v249
    %v1444 = vunpack.c.h.b16 %v249
    %v1445 = vunpack.c.l.b16 %v250
    %v1446 = vunpack.c.h.b16 %v250
    %v1447 = vunpack.c.l.b16 %v251
    %v1448 = vunpack.c.h.b16 %v251
    %v1449 = vunpack.c.l.b16 %v252
    %v1450 = vunpack.c.h.b16 %v252
    %v1451 = vunpack.c.l.b16 %v253
    %v1452 = vunpack.c.h.b16 %v253
    %v1453 = vunpack.c.l.b16 %v254
    %v1454 = vunpack.c.h.b16 %v254
    %v1455 = vunpack.c.l.b16 %v255
    %v1456 = vunpack.c.h.b16 %v255
    %v1457 = vunpack.c.l.b16 %v256
    %v1458 = vunpack.c.h.b16 %v256
    %v1459 = vunpack.c.l.b16 %v257
    %v1460 = vunpack.c.h.b16 %v257
    %v1461 = vunpack.c.l.b16 %v258
    %v1462 = vunpack.c.h.b16 %v258
    %v1463 = vunpack.c.l.b16 %v259
    %v1464 = vunpack.c.h.b16 %v259
    %v1465 = vunpack.c.l.b16 %v260
    %v1466 = vunpack.c.h.b16 %v260
    %v1467 = vunpack.c.l.b16 %v261
    %v1468 = vunpack.c.h.b16 %v261
    %v1469 = vunpack.c.l.b16 %v262
    %v1470 = vunpack.c.h.b16 %v262
    %v1471 = vunpack.c.l.b16 %v263
    %v1472 = vunpack.c.h.b16 %v263
    %v1473 = vunpack.c.l.b16 %v264
    %v1474 = vunpack.c.h.b16 %v264
    %v1475 = vunpack.c.l.b16 %v265
    %v1476 = vunpack.c.h.b16 %v265
    %v1477 = vunpack.c.l.b16 %v266
    %v1478 = vunpack.c.h.b16 %v266
    %v1479 = vunpack.c.l.b16 %v267
    %v1480 = vunpack.c.h.b16 %v267
    %v1481 = vunpack.c.l.b16 %v268
    %v1482 = vunpack.c.h.b16 %v268
    %v1483 = vunpack.c.l.b16 %v269
    %v1484 = vunpack.c.h.b16 %v269
    %v1485 = vunpack.c.l.b16 %v270
    %v1486 = vunpack.c.h.b16 %v270
    %v1487 = vunpack.c.l.b16 %v271
    %v1488 = vunpack.c.h.b16 %v271
    %v1489 = vunpack.c.l.b16 %v272
    %v1490 = vunpack.c.h.b16 %v272
    %v1491 = vunpack.c.l.b16 %v273
    %v1492 = vunpack.c.h.b16 %v273
    %v1493 = vunpack.c.l.b16 %v274
    %v1494 = vunpack.c.h.b16 %v274
    %v1495 = vunpack.c.l.b16 %v275
    %v1496 = vunpack.c.h.b16 %v275
    %v1497 = vunpack.c.l.b16 %v276
    %v1498 = vunpack.c.h.b16 %v276
    %v1499 = vunpack.c.l.b16 %v277
    %v1500 = vunpack.c.h.b16 %v277
    %v1501 = vunpack.c.l.b16 %v278
    %v1502 = vunpack.c.h.b16 %v278
    %v1503 = vunpack.c.l.b16 %v279
    %v1504 = vunpack.c.h.b16 %v279
    %v1505 = vunpack.c.l.b16 %v280
    %v1506 = vunpack.c.h.b16 %v280
    %v1507 = vunpack.c.l.b16 %v281
    %v1508 = vunpack.c.h.b16 %v281
    %v1509 = vunpack.c.l.b16 %v282
    %v1510 = vunpack.c.h.b16 %v282
    %v1511 = vunpack.c.l.b16 %v283
    %v1512 = vunpack.c.h.b16 %v283
    %v1513 = vunpack.c.l.b16 %v284
    %v1514 = vunpack.c.h.b16 %v284
    %v1515 = vunpack.c.l.b16 %v285
    %v1516 = vunpack.c.h.b16 %v285
    %v1517 = vunpack.c.l.b16 %v286
    %v1518 = vunpack.c.h.b16 %v286
    %v1519 = vunpack.c.l.b16 %v287
    %v1520 = vunpack.c.h.b16 %v287
    %v1521 = vunpack.c.l.b16 %v288
    %v1522 = vunpack.c.h.b16 %v288
    %v1523 = vunpack.c.l.b16 %v289
    %v1524 = vunpack.c.h.b16 %v289
    %v1525 = vunpack.c.l.b16 %v290
    %v1526 = vunpack.c.h.b16 %v290
    %v1527 = vunpack.c.l.b16 %v291
    %v1528 = vunpack.c.h.b16 %v291
    %v1529 = vunpack.c.l.b16 %v292
    %v1530 = vunpack.c.h.b16 %v292
    %v1531 = vunpack.c.l.b16 %v293
    %v1532 = vunpack.c.h.b16 %v293
    %v1533 = vunpack.c.l.b16 %v294
    %v1534 = vunpack.c.h.b16 %v294
    %v1535 = vunpack.c.l.b16 %v295
    %v1536 = vunpack.c.h.b16 %v295
    %v1537 = vunpack.c.l.b16 %v296
    %v1538 = vunpack.c.h.b16 %v296
    %v1539 = vunpack.c.l.b16 %v297
    %v1540 = vunpack.c.h.b16 %v297
    %v1541 = vunpack.c.l.b16 %v298
    %v1542 = vunpack.c.h.b16 %v298
    %v1543 = vunpack.c.l.b16 %v299
    %v1544 = vunpack.c.h.b16 %v299
    %v1545 = vunpack.c.l.b16 %v300
    %v1546 = vunpack.c.h.b16 %v300
    %v1547 = vunpack.c.l.b16 %v301
    %v1548 = vunpack.c.h.b16 %v301
    %v1549 = vunpack.c.l.b16 %v302
    %v1550 = vunpack.c.h.b16 %v302
    %v1551 = vunpack.c.l.b16 %v303
    %v1552 = vunpack.c.h.b16 %v303
    %v1553 = vunpack.c.l.b16 %v304
    %v1554 = vunpack.c.h.b16 %v304
    %v1555 = vunpack.c.l.b16 %v305
    %v1556 = vunpack.c.h.b16 %v305
    %v1557 = vunpack.c.l.b16 %v306
    %v1558 = vunpack.c.h.b16 %v306
    %v1559 = vunpack.c.l.b16 %v307
    %v1560 = vunpack.c.h.b16 %v307
    %v1561 = vunpack.c.l.b16 %v308
    %v1562 = vunpack.c.h.b16 %v308
    %v1563 = vunpack.c.l.b16 %v309
    %v1564 = vunpack.c.h.b16 %v309
    %v1565 = vunpack.c.l.b16 %v310
    %v1566 = vunpack.c.h.b16 %v310
    %v1567 = vunpack.c.l.b16 %v311
    %v1568 = vunpack.c.h.b16 %v311
    %v1569 = vunpack.c.l.b16 %v312
    %v1570 = vunpack.c.h.b16 %v312
    %v1571 = vunpack.c.l.b16 %v313
    %v1572 = vunpack.c.h.b16 %v313
    %v1573 = vunpack.c.l.b16 %v314
    %v1574 = vunpack.c.h.b16 %v314
    %v1575 = vunpack.c.l.b16 %v315
    %v1576 = vunpack.c.h.b16 %v315
    %v1577 = vunpack.c.l.b16 %v316
    %v1578 = vunpack.c.h.b16 %v316
    %v1579 = vunpack.c.l.b16 %v317
    %v1580 = vunpack.c.h.b16 %v317
    %v1581 = vunpack.c.l.b16 %v318
    %v1582 = vunpack.c.h.b16 %v318
    %v1583 = vunpack.c.l.b16 %v319
    %v1584 = vunpack.c.h.b16 %v319
    %v1585 = vunpack.c.l.b16 %v320
    %v1586 = vunpack.c.h.b16 %v320
    %v1587 = vunpack.c.l.b16 %v321
    %v1588 = vunpack.c.h.b16 %v321
    %v1589 = vunpack.c.l.b16 %v322
    %v1590 = vunpack.c.h.b16 %v322
    %v1591 = vunpack.c.l.b16 %v323
    %v1592 = vunpack.c.h.b16 %v323
    %v1593 = vunpack.c.l.b16 %v324
    %v1594 = vunpack.c.h.b16 %v324
    %v1595 = vunpack.c.l.b16 %v325
    %v1596 = vunpack.c.h.b16 %v325
    %v1597 = vunpack.c.l.b16 %v326
    %v1598 = vunpack.c.h.b16 %v326
    %v1599 = vunpack.c.l.b16 %v327
    %v1600 = vunpack.c.h.b16 %v327
    %v1601 = vunpack.c.l.b16 %v328
    %v1602 = vunpack.c.h.b16 %v328
    %v1603 = vunpack.c.l.b16 %v329
    %v1604 = vunpack.c.h.b16 %v329
    %v1605 = vunpack.c.l.b16 %v330
    %v1606 = vunpack.c.h.b16 %v330
    %v1607 = vunpack.c.l.b16 %v331
    %v1608 = vunpack.c.h.b16 %v331
    %v1609 = vunpack.c.l.b16 %v332
    %v1610 = vunpack.c.h.b16 %v332
    %v1611 = vunpack.c.l.b16 %v333
    %v1612 = vunpack.c.h.b16 %v333
    %v1613 = vunpack.c.l.b16 %v334
    %v1614 = vunpack.c.h.b16 %v334
    %v1615 = vunpack.c.l.b16 %v335
    %v1616 = vunpack.c.h.b16 %v335
    %v1617 = vunpack.c.l.b16 %v336
    %v1618 = vunpack.c.h.b16 %v336
    %v1619 = vunpack.c.l.b16 %v337
    %v1620 = vunpack.c.h.b16 %v337
    %v1621 = vunpack.c.l.b16 %v338
    %v1622 = vunpack.c.h.b16 %v338
    %v1623 = vunpack.c.l.b16 %v339
    %v1624 = vunpack.c.h.b16 %v339
    %v1625 = vunpack.c.l.b16 %v340
    %v1626 = vunpack.c.h.b16 %v340
    %v1627 = vunpack.c.l.b16 %v341
    %v1628 = vunpack.c.h.b16 %v341
    %v1629 = vunpack.c.l.b16 %v342
    %v1630 = vunpack.c.h.b16 %v342
    %v1631 = vunpack.c.l.b16 %v343
    %v1632 = vunpack.c.h.b16 %v343
    %v1633 = vunpack.c.l.b16 %v344
    %v1634 = vunpack.c.h.b16 %v344
    %v1635 = vunpack.c.l.b16 %v345
    %v1636 = vunpack.c.h.b16 %v345
    %v1637 = vunpack.c.l.b16 %v346
    %v1638 = vunpack.c.h.b16 %v346
    %v1639 = vunpack.c.l.b16 %v347
    %v1640 = vunpack.c.h.b16 %v347
    %v1641 = vunpack.c.l.b16 %v348
    %v1642 = vunpack.c.h.b16 %v348
    %v1643 = vunpack.c.l.b16 %v349
    %v1644 = vunpack.c.h.b16 %v349
    %v1645 = vunpack.c.l.b16 %v350
    %v1646 = vunpack.c.h.b16 %v350
    %v1647 = vunpack.c.l.b16 %v351
    %v1648 = vunpack.c.h.b16 %v351
    %v1649 = vunpack.c.l.b16 %v352
    %v1650 = vunpack.c.h.b16 %v352
    %v1651 = vunpack.c.l.b16 %v353
    %v1652 = vunpack.c.h.b16 %v353
    %v1653 = vunpack.c.l.b16 %v354
    %v1654 = vunpack.c.h.b16 %v354
    %v1655 = vunpack.c.l.b16 %v355
    %v1656 = vunpack.c.h.b16 %v355
    %v1657 = vunpack.c.l.b16 %v356
    %v1658 = vunpack.c.h.b16 %v356
    %v1659 = vunpack.c.l.b16 %v357
    %v1660 = vunpack.c.h.b16 %v357
    %v1661 = vunpack.c.l.b16 %v358
    %v1662 = vunpack.c.h.b16 %v358
    %v1663 = vunpack.c.l.b16 %v359
    %v1664 = vunpack.c.h.b16 %v359
    %v1665 = vunpack.c.l.b16 %v360
    %v1666 = vunpack.c.h.b16 %v360
    %v1667 = vunpack.c.l.b16 %v361
    %v1668 = vunpack.c.h.b16 %v361
    %v1669 = vunpack.c.l.b16 %v362
    %v1670 = vunpack.c.h.b16 %v362
    %v1671 = vunpack.c.l.b16 %v363
    %v1672 = vunpack.c.h.b16 %v363
    %v1673 = vunpack.c.l.b16 %v364
    %v1674 = vunpack.c.h.b16 %v364
    %v1675 = vunpack.c.l.b16 %v365
    %v1676 = vunpack.c.h.b16 %v365
    %v1677 = vunpack.c.l.b16 %v366
    %v1678 = vunpack.c.h.b16 %v366
    %v1679 = vunpack.c.l.b16 %v367
    %v1680 = vunpack.c.h.b16 %v367
    %v1681 = vunpack.c.l.b16 %v368
    %v1682 = vunpack.c.h.b16 %v368
    %v1683 = vunpack.c.l.b16 %v369
    %v1684 = vunpack.c.h.b16 %v369
    %v1685 = vunpack.c.l.b16 %v370
    %v1686 = vunpack.c.h.b16 %v370
    %v1687 = vunpack.c.l.b16 %v371
    %v1688 = vunpack.c.h.b16 %v371
    %v1689 = vunpack.c.l.b16 %v372
    %v1690 = vunpack.c.h.b16 %v372
    %v1691 = vunpack.c.l.b16 %v373
    %v1692 = vunpack.c.h.b16 %v373
    %v1693 = vunpack.c.l.b16 %v374
    %v1694 = vunpack.c.h.b16 %v374
    %v1695 = vunpack.c.l.b16 %v375
    %v1696 = vunpack.c.h.b16 %v375
    %v1697 = vunpack.c.l.b16 %v376
    %v1698 = vunpack.c.h.b16 %v376
    %v1699 = vunpack.c.l.b16 %v377
    %v1700 = vunpack.c.h.b16 %v377
    %v1701 = vunpack.c.l.b16 %v378
    %v1702 = vunpack.c.h.b16 %v378
    %v1703 = vunpack.c.l.b16 %v379
    %v1704 = vunpack.c.h.b16 %v379
    %v1705 = vunpack.c.l.b16 %v380
    %v1706 = vunpack.c.h.b16 %v380
    %v1707 = vunpack.c.l.b16 %v381
    %v1708 = vunpack.c.h.b16 %v381
    %v1709 = vunpack.c.l.b16 %v382
    %v1710 = vunpack.c.h.b16 %v382
    %v1711 = vunpack.c.l.b16 %v383
    %v1712 = vunpack.c.h.b16 %v383
    %v1713 = vunpack.c.l.b16 %v384
    %v1714 = vunpack.c.h.b16 %v384
    %v1715 = vunpack.c.l.b16 %v385
    %v1716 = vunpack.c.h.b16 %v385
    %v1717 = vunpack.c.l.b16 %v386
    %v1718 = vunpack.c.h.b16 %v386
    %v1719 = vunpack.c.l.b16 %v387
    %v1720 = vunpack.c.h.b16 %v387
    %v1721 = vunpack.c.l.b16 %v388
    %v1722 = vunpack.c.h.b16 %v388
    %v1723 = vunpack.c.l.b16 %v389
    %v1724 = vunpack.c.h.b16 %v389
    %v1725 = vunpack.c.l.b16 %v390
    %v1726 = vunpack.c.h.b16 %v390
    %v1727 = vunpack.c.l.b16 %v391
    %v1728 = vunpack.c.h.b16 %v391
    %v1729 = vunpack.c.l.b16 %v392
    %v1730 = vunpack.c.h.b16 %v392
    %v1731 = vunpack.c.l.b16 %v393
    %v1732 = vunpack.c.h.b16 %v393
    %v1733 = vunpack.c.l.b16 %v394
    %v1734 = vunpack.c.h.b16 %v394
    %v1735 = vunpack.c.l.b16 %v395
    %v1736 = vunpack.c.h.b16 %v395
    %v1737 = vunpack.c.l.b16 %v396
    %v1738 = vunpack.c.h.b16 %v396
    %v1739 = vunpack.c.l.b16 %v397
    %v1740 = vunpack.c.h.b16 %v397
    %v1741 = vunpack.c.l.b16 %v398
    %v1742 = vunpack.c.h.b16 %v398
    %v1743 = vunpack.c.l.b16 %v399
    %v1744 = vunpack.c.h.b16 %v399
    %v1745 = vunpack.c.l.b16 %v400
    %v1746 = vunpack.c.h.b16 %v400
    %v1747 = vunpack.c.l.b16 %v401
    %v1748 = vunpack.c.h.b16 %v401
    %v1749 = vunpack.c.l.b16 %v402
    %v1750 = vunpack.c.h.b16 %v402
    %v1751 = vunpack.c.l.b16 %v403
    %v1752 = vunpack.c.h.b16 %v403
    %v1753 = vunpack.c.l.b16 %v404
    %v1754 = vunpack.c.h.b16 %v404
    %v1755 = vunpack.c.l.b16 %v405
    %v1756 = vunpack.c.h.b16 %v405
    %v1757 = vunpack.c.l.b16 %v406
    %v1758 = vunpack.c.h.b16 %v406
    %v1759 = vunpack.c.l.b16 %v407
    %v1760 = vunpack.c.h.b16 %v407
    %v1761 = vunpack.c.l.b16 %v408
    %v1762 = vunpack.c.h.b16 %v408
    %v1763 = vunpack.c.l.b16 %v409
    %v1764 = vunpack.c.h.b16 %v409
    %v1765 = vunpack.c.l.b16 %v410
    %v1766 = vunpack.c.h.b16 %v410
    %v1767 = vunpack.c.l.b16 %v411
    %v1768 = vunpack.c.h.b16 %v411
    %v1769 = vunpack.c.l.b16 %v412
    %v1770 = vunpack.c.h.b16 %v412
    %v1771 = vunpack.c.l.b16 %v413
    %v1772 = vunpack.c.h.b16 %v413
    %v1773 = vunpack.c.l.b16 %v414
    %v1774 = vunpack.c.h.b16 %v414
    %v1775 = vunpack.c.l.b16 %v415
    %v1776 = vunpack.c.h.b16 %v415
    %v1777 = vunpack.c.l.b16 %v416
    %v1778 = vunpack.c.h.b16 %v416
    %v1779 = vunpack.c.l.b16 %v417
    %v1780 = vunpack.c.h.b16 %v417
    %v1781 = vunpack.c.l.b16 %v418
    %v1782 = vunpack.c.h.b16 %v418
    %v1783 = vunpack.c.l.b16 %v419
    %v1784 = vunpack.c.h.b16 %v419
    %v1785 = vunpack.c.l.b16 %v420
    %v1786 = vunpack.c.h.b16 %v420
    %v1787 = vunpack.c.l.b16 %v421
    %v1788 = vunpack.c.h.b16 %v421
    %v1789 = vunpack.c.l.b16 %v422
    %v1790 = vunpack.c.h.b16 %v422
    %v1791 = vunpack.c.l.b16 %v423
    %v1792 = vunpack.c.h.b16 %v423
    %v1793 = vunpack.c.l.b16 %v424
    %v1794 = vunpack.c.h.b16 %v424
    %v1795 = vunpack.c.l.b16 %v425
    %v1796 = vunpack.c.h.b16 %v425
    %v1797 = vunpack.c.l.b16 %v426
    %v1798 = vunpack.c.h.b16 %v426
    %v1799 = vunpack.c.l.b16 %v427
    %v1800 = vunpack.c.h.b16 %v427
    %v1801 = vunpack.c.l.b16 %v428
    %v1802 = vunpack.c.h.b16 %v428
    %v1803 = vunpack.c.l.b16 %v429
    %v1804 = vunpack.c.h.b16 %v429
    %v1805 = vunpack.c.l.b16 %v430
    %v1806 = vunpack.c.h.b16 %v430
    %v1807 = vunpack.c.l.b16 %v431
    %v1808 = vunpack.c.h.b16 %v431
    %v1809 = vunpack.c.l.b16 %v432
    %v1810 = vunpack.c.h.b16 %v432
    %v1811 = vunpack.c.l.b16 %v433
    %v1812 = vunpack.c.h.b16 %v433
    %v1813 = vunpack.c.l.b16 %v434
    %v1814 = vunpack.c.h.b16 %v434
    %v1815 = vunpack.c.l.b16 %v435
    %v1816 = vunpack.c.h.b16 %v435
    %v1817 = vunpack.c.l.b16 %v436
    %v1818 = vunpack.c.h.b16 %v436
    %v1819 = vunpack.c.l.b16 %v437
    %v1820 = vunpack.c.h.b16 %v437
    %v1821 = vunpack.c.l.b16 %v438
    %v1822 = vunpack.c.h.b16 %v438
    %v1823 = vunpack.c.l.b16 %v439
    %v1824 = vunpack.c.h.b16 %v439
    %v1825 = vunpack.c.l.b16 %v440
    %v1826 = vunpack.c.h.b16 %v440
    %v1827 = vunpack.c.l.b16 %v441
    %v1828 = vunpack.c.h.b16 %v441
    %v1829 = vunpack.c.l.b16 %v442
    %v1830 = vunpack.c.h.b16 %v442
    %v1831 = vunpack.c.l.b16 %v443
    %v1832 = vunpack.c.h.b16 %v443
    %v1833 = vunpack.c.l.b16 %v444
    %v1834 = vunpack.c.h.b16 %v444
    %v1835 = vunpack.c.l.b16 %v445
    %v1836 = vunpack.c.h.b16 %v445
    %v1837 = vunpack.c.l.b16 %v446
    %v1838 = vunpack.c.h.b16 %v446
    %v1839 = vunpack.c.l.b16 %v447
    %v1840 = vunpack.c.h.b16 %v447
    %v1841 = vunpack.c.l.b16 %v448
    %v1842 = vunpack.c.h.b16 %v448
    %v1843 = vunpack.c.l.b16 %v449
    %v1844 = vunpack.c.h.b16 %v449
    %v1845 = vunpack.c.l.b16 %v450
    %v1846 = vunpack.c.h.b16 %v450
    %v1847 = vunpack.c.l.b16 %v451
    %v1848 = vunpack.c.h.b16 %v451
    %v1849 = vunpack.c.l.b16 %v452
    %v1850 = vunpack.c.h.b16 %v452
    %v1851 = vunpack.c.l.b16 %v453
    %v1852 = vunpack.c.h.b16 %v453
    %v1853 = vunpack.c.l.b16 %v454
    %v1854 = vunpack.c.h.b16 %v454
    %v1855 = vunpack.c.l.b16 %v455
    %v1856 = vunpack.c.h.b16 %v455
    %v1857 = vunpack.c.l.b16 %v456
    %v1858 = vunpack.c.h.b16 %v456
    %v1859 = vunpack.c.l.b16 %v457
    %v1860 = vunpack.c.h.b16 %v457
    %v1861 = vunpack.c.l.b16 %v458
    %v1862 = vunpack.c.h.b16 %v458
    %v1863 = vunpack.c.l.b16 %v459
    %v1864 = vunpack.c.h.b16 %v459
    %v1865 = vunpack.c.l.b16 %v460
    %v1866 = vunpack.c.h.b16 %v460
    %v1867 = vunpack.c.l.b16 %v461
    %v1868 = vunpack.c.h.b16 %v461
    %v1869 = vunpack.c.l.b16 %v462
    %v1870 = vunpack.c.h.b16 %v462
    %v1871 = vunpack.c.l.b16 %v463
    %v1872 = vunpack.c.h.b16 %v463
    %v1873 = vunpack.c.l.b16 %v464
    %v1874 = vunpack.c.h.b16 %v464
    %v1875 = vunpack.c.l.b16 %v465
    %v1876 = vunpack.c.h.b16 %v465
    %v1877 = vunpack.c.l.b16 %v466
    %v1878 = vunpack.c.h.b16 %v466
    %v1879 = vunpack.c.l.b16 %v467
    %v1880 = vunpack.c.h.b16 %v467
    %v1881 = vunpack.c.l.b16 %v468
    %v1882 = vunpack.c.h.b16 %v468
    %v1883 = vunpack.c.l.b16 %v469
    %v1884 = vunpack.c.h.b16 %v469
    %v1885 = vunpack.c.l.b16 %v470
    %v1886 = vunpack.c.h.b16 %v470
    %v1887 = vunpack.c.l.b16 %v471
    %v1888 = vunpack.c.h.b16 %v471
    %v1889 = vunpack.c.l.b16 %v472
    %v1890 = vunpack.c.h.b16 %v472
    %v1891 = vunpack.c.l.b16 %v473
    %v1892 = vunpack.c.h.b16 %v473
    %v1893 = vunpack.c.l.b16 %v474
    %v1894 = vunpack.c.h.b16 %v474
    %v1895 = vunpack.c.l.b16 %v475
    %v1896 = vunpack.c.h.b16 %v475
    %v1897 = vunpack.c.l.b16 %v476
    %v1898 = vunpack.c.h.b16 %v476
    %v1899 = vunpack.c.l.b16 %v477
    %v1900 = vunpack.c.h.b16 %v477
    %v1901 = vunpack.c.l.b16 %v478
    %v1902 = vunpack.c.h.b16 %v478
    %v1903 = vunpack.c.l.b16 %v479
    %v1904 = vunpack.c.h.b16 %v479
    %v1905 = vunpack.c.l.b16 %v480
    %v1906 = vunpack.c.h.b16 %v480
    %v1907 = vunpack.c.l.b16 %v481
    %v1908 = vunpack.c.h.b16 %v481
    %v1909 = vunpack.c.l.b16 %v482
    %v1910 = vunpack.c.h.b16 %v482
    %v1911 = vunpack.c.l.b16 %v483
    %v1912 = vunpack.c.h.b16 %v483
    %v1913 = vunpack.c.l.b16 %v484
    %v1914 = vunpack.c.h.b16 %v484
    %v1915 = vunpack.c.l.b16 %v485
    %v1916 = vunpack.c.h.b16 %v485
    %v1917 = vunpack.c.l.b16 %v486
    %v1918 = vunpack.c.h.b16 %v486
    %v1919 = vunpack.c.l.b16 %v487
    %v1920 = vunpack.c.h.b16 %v487
    %v1921 = vunpack.c.l.b16 %v488
    %v1922 = vunpack.c.h.b16 %v488
    %v1923 = vunpack.c.l.b16 %v489
    %v1924 = vunpack.c.h.b16 %v489
    %v1925 = vunpack.c.l.b16 %v490
    %v1926 = vunpack.c.h.b16 %v490
    %v1927 = vunpack.c.l.b16 %v491
    %v1928 = vunpack.c.h.b16 %v491
    %v1929 = vunpack.c.l.b16 %v492
    %v1930 = vunpack.c.h.b16 %v492
    %v1931 = vunpack.c.l.b16 %v493
    %v1932 = vunpack.c.h.b16 %v493
    %v1933 = vunpack.c.l.b16 %v494
    %v1934 = vunpack.c.h.b16 %v494
    %v1935 = vunpack.c.l.b16 %v495
    %v1936 = vunpack.c.h.b16 %v495
    %v1937 = vunpack.c.l.b16 %v496
    %v1938 = vunpack.c.h.b16 %v496
    %v1939 = vunpack.c.l.b16 %v497
    %v1940 = vunpack.c.h.b16 %v497
    %v1941 = vunpack.c.l.b16 %v498
    %v1942 = vunpack.c.h.b16 %v498
    %v1943 = vunpack.c.l.b16 %v499
    %v1944 = vunpack.c.h.b16 %v499
    %v1945 = vunpack.c.l.b16 %v500
    %v1946 = vunpack.c.h.b16 %v500
    %v1947 = vunpack.c.l.b16 %v501
    %v1948 = vunpack.c.h.b16 %v501
    %v1949 = vunpack.c.l.b16 %v502
    %v1950 = vunpack.c.h.b16 %v502
    %v1951 = vunpack.c.l.b16 %v503
    %v1952 = vunpack.c.h.b16 %v503
    %v1953 = vunpack.c.l.b16 %v504
    %v1954 = vunpack.c.h.b16 %v504
    %v1955 = vunpack.c.l.b16 %v505
    %v1956 = vunpack.c.h.b16 %v505
    %v1957 = vunpack.c.l.b16 %v506
    %v1958 = vunpack.c.h.b16 %v506
    %v1959 = vunpack.c.l.b16 %v507
    %v1960 = vunpack.c.h.b16 %v507
    %v1961 = vunpack.c.l.b16 %v508
    %v1962 = vunpack.c.h.b16 %v508
    %v1963 = vunpack.c.l.b16 %v509
    %v1964 = vunpack.c.h.b16 %v509
    %v1965 = vunpack.c.l.b16 %v510
    %v1966 = vunpack.c.h.b16 %v510
    %v1967 = vunpack.c.l.b16 %v511
    %v1968 = vunpack.c.h.b16 %v511
    %v1969 = vunpack.c.l.b16 %v512
    %v1970 = vunpack.c.h.b16 %v512
    %v1971 = vunpack.c.l.b16 %v513
    %v1972 = vunpack.c.h.b16 %v513
    %v1973 = vunpack.c.l.b16 %v514
    %v1974 = vunpack.c.h.b16 %v514
    %v1975 = vunpack.c.l.b16 %v515
    %v1976 = vunpack.c.h.b16 %v515
    %v1977 = vunpack.c.l.b16 %v516
    %v1978 = vunpack.c.h.b16 %v516
    %v1979 = vunpack.c.l.b16 %v517
    %v1980 = vunpack.c.h.b16 %v517
    %v1981 = vunpack.c.l.b16 %v518
    %v1982 = vunpack.c.h.b16 %v518
    %v1983 = vunpack.c.l.b16 %v519
    %v1984 = vunpack.c.h.b16 %v519
    %v1985 = vunpack.c.l.b16 %v520
    %v1986 = vunpack.c.h.b16 %v520
    %v1987 = vunpack.c.l.b16 %v521
    %v1988 = vunpack.c.h.b16 %v521
    %v1989 = vunpack.c.l.b16 %v522
    %v1990 = vunpack.c.h.b16 %v522
    %v1991 = vunpack.c.l.b16 %v523
    %v1992 = vunpack.c.h.b16 %v523
    %v1993 = vunpack.c.l.b16 %v524
    %v1994 = vunpack.c.h.b16 %v524
    %v1995 = vunpack.c.l.b16 %v525
    %v1996 = vunpack.c.h.b16 %v525
    %v1997 = vunpack.c.l.b16 %v526
    %v1998 = vunpack.c.h.b16 %v526
    %v1999 = vunpack.c.l.b16 %v527
    %v2000 = vunpack.c.h.b16 %v527
    %v2001 = vunpack.c.l.b16 %v528
    %v2002 = vunpack.c.h.b16 %v528
    %v2003 = vunpack.c.l.b16 %v529
    %v2004 = vunpack.c.h.b16 %v529
    %v2005 = vunpack.c.l.b16 %v530
    %v2006 = vunpack.c.h.b16 %v530
    %v2007 = vunpack.c.l.b16 %v531
    %v2008 = vunpack.c.h.b16 %v531
    %v2009 = vunpack.c.l.b16 %v532
    %v2010 = vunpack.c.h.b16 %v532
    %v2011 = vunpack.c.l.b16 %v533
    %v2012 = vunpack.c.h.b16 %v533
    %v2013 = vunpack.c.l.b16 %v534
    %v2014 = vunpack.c.h.b16 %v534
    %v2015 = vunpack.c.l.b16 %v535
    %v2016 = vunpack.c.h.b16 %v535
    %v2017 = vunpack.c.l.b16 %v536
    %v2018 = vunpack.c.h.b16 %v536
    %v2019 = vunpack.c.l.b16 %v537
    %v2020 = vunpack.c.h.b16 %v537
    %v2021 = vunpack.c.l.b16 %v538
    %v2022 = vunpack.c.h.b16 %v538
    %v2023 = vunpack.c.l.b16 %v539
    %v2024 = vunpack.c.h.b16 %v539
    %v2025 = vunpack.c.l.b16 %v540
    %v2026 = vunpack.c.h.b16 %v540
    %v2027 = vunpack.c.l.b16 %v541
    %v2028 = vunpack.c.h.b16 %v541
    %v2029 = vunpack.c.l.b16 %v542
    %v2030 = vunpack.c.h.b16 %v542
    %v2031 = vunpack.c.l.b16 %v543
    %v2032 = vunpack.c.h.b16 %v543
    %v2033 = vunpack.c.l.b16 %v544
    %v2034 = vunpack.c.h.b16 %v544
    %v2035 = vunpack.c.l.b16 %v545
    %v2036 = vunpack.c.h.b16 %v545
    %v2037 = vunpack.c.l.b16 %v546
    %v2038 = vunpack.c.h.b16 %v546
    %v2039 = vunpack.c.l.b16 %v547
    %v2040 = vunpack.c.h.b16 %v547
    %v2041 = vunpack.c.l.b16 %v548
    %v2042 = vunpack.c.h.b16 %v548
    %v2043 = vunpack.c.l.b16 %v549
    %v2044 = vunpack.c.h.b16 %v549
    %v2045 = vunpack.c.l.b16 %v550
    %v2046 = vunpack.c.h.b16 %v550
    %v2047 = vunpack.c.l.b16 %v551
    %v2048 = vunpack.c.h.b16 %v551
    %v2049 = vunpack.c.l.b16 %v552
    %v2050 = vunpack.c.h.b16 %v552
    %v2051 = vunpack.c.l.b16 %v553
    %v2052 = vunpack.c.h.b16 %v553
    %v2053 = vunpack.c.l.b16 %v554
    %v2054 = vunpack.c.h.b16 %v554
    %v2055 = vunpack.c.l.b16 %v555
    %v2056 = vunpack.c.h.b16 %v555
    %v2057 = vunpack.c.l.b16 %v556
    %v2058 = vunpack.c.h.b16 %v556
    %v2059 = vunpack.c.l.b16 %v557
    %v2060 = vunpack.c.h.b16 %v557
    %v2061 = vunpack.c.l.b16 %v558
    %v2062 = vunpack.c.h.b16 %v558
    %v2063 = vunpack.c.l.b16 %v559
    %v2064 = vunpack.c.h.b16 %v559
    %v2065 = vunpack.c.l.b16 %v560
    %v2066 = vunpack.c.h.b16 %v560
    %v2067 = vunpack.c.l.b16 %v561
    %v2068 = vunpack.c.h.b16 %v561
    %v2069 = vunpack.c.l.b16 %v562
    %v2070 = vunpack.c.h.b16 %v562
    %v2071 = vunpack.c.l.b16 %v563
    %v2072 = vunpack.c.h.b16 %v563
    %v2073 = vunpack.c.l.b16 %v564
    %v2074 = vunpack.c.h.b16 %v564
    %v2075 = vunpack.c.l.b16 %v565
    %v2076 = vunpack.c.h.b16 %v565
    %v2077 = vunpack.c.l.b16 %v566
    %v2078 = vunpack.c.h.b16 %v566
    %v2079 = vunpack.c.l.b16 %v567
    %v2080 = vunpack.c.h.b16 %v567
    %v2081 = vunpack.c.l.b16 %v568
    %v2082 = vunpack.c.h.b16 %v568
    %v2083 = vunpack.c.l.b16 %v569
    %v2084 = vunpack.c.h.b16 %v569
    %v2085 = vunpack.c.l.b16 %v570
    %v2086 = vunpack.c.h.b16 %v570
    %v2087 = vunpack.c.l.b16 %v571
    %v2088 = vunpack.c.h.b16 %v571
    %v2089 = vunpack.c.l.b16 %v572
    %v2090 = vunpack.c.h.b16 %v572
    %v2091 = vunpack.c.l.b16 %v573
    %v2092 = vunpack.c.h.b16 %v573
    %v2093 = vunpack.c.l.b16 %v574
    %v2094 = vunpack.c.h.b16 %v574
    %v2095 = vunpack.c.l.b16 %v575
    %v2096 = vunpack.c.h.b16 %v575
    %v2097 = vunpack.c.l.b16 %v576
    %v2098 = vunpack.c.h.b16 %v576
    %v2099 = vunpack.c.l.b16 %v577
    %v2100 = vunpack.c.h.b16 %v577
    %v2101 = vunpack.c.l.b16 %v578
    %v2102 = vunpack.c.h.b16 %v578
    %v2103 = vunpack.c.l.b16 %v579
    %v2104 = vunpack.c.h.b16 %v579
    %v2105 = vunpack.c.l.b16 %v580
    %v2106 = vunpack.c.h.b16 %v580
    %v2107 = vunpack.c.l.b16 %v581
    %v2108 = vunpack.c.h.b16 %v581
    %v2109 = vunpack.c.l.b16 %v582
    %v2110 = vunpack.c.h.b16 %v582
    %v2111 = vunpack.c.l.b16 %v583
    %v2112 = vunpack.c.h.b16 %v583
    %v2113 = vunpack.c.l.b16 %v584
    %v2114 = vunpack.c.h.b16 %v584
    %v2115 = vunpack.c.l.b16 %v585
    %v2116 = vunpack.c.h.b16 %v585
    %v2117 = vunpack.c.l.b16 %v586
    %v2118 = vunpack.c.h.b16 %v586
    %v2119 = vunpack.c.l.b16 %v587
    %v2120 = vunpack.c.h.b16 %v587
    %v2121 = vunpack.c.l.b16 %v588
    %v2122 = vunpack.c.h.b16 %v588
    %v2123 = vunpack.c.l.b16 %v589
    %v2124 = vunpack.c.h.b16 %v589
    %v2125 = vunpack.c.l.b16 %v590
    %v2126 = vunpack.c.h.b16 %v590
    %v2127 = vunpack.c.l.b16 %v591
    %v2128 = vunpack.c.h.b16 %v591
    %v2129 = vunpack.c.l.b16 %v592
    %v2130 = vunpack.c.h.b16 %v592
    %v2131 = vunpack.c.l.b16 %v593
    %v2132 = vunpack.c.h.b16 %v593
    %v2133 = vunpack.c.l.b16 %v594
    %v2134 = vunpack.c.h.b16 %v594
    %v2135 = vunpack.c.l.b16 %v595
    %v2136 = vunpack.c.h.b16 %v595
    %v2137 = vunpack.c.l.b16 %v596
    %v2138 = vunpack.c.h.b16 %v596
    %v2139 = vunpack.c.l.b16 %v597
    %v2140 = vunpack.c.h.b16 %v597
    %v2141 = vunpack.c.l.b16 %v598
    %v2142 = vunpack.c.h.b16 %v598
    %v2143 = vunpack.c.l.b16 %v599
    %v2144 = vunpack.c.h.b16 %v599
    %v2145 = vunpack.c.l.b16 %v600
    %v2146 = vunpack.c.h.b16 %v600
    %v2147 = vunpack.c.l.b16 %v601
    %v2148 = vunpack.c.h.b16 %v601
    %v2149 = vunpack.c.l.b16 %v602
    %v2150 = vunpack.c.h.b16 %v602
    %v2151 = vunpack.c.l.b16 %v603
    %v2152 = vunpack.c.h.b16 %v603
    %v2153 = vunpack.c.l.b16 %v604
    %v2154 = vunpack.c.h.b16 %v604
    %v2155 = vunpack.c.l.b16 %v605
    %v2156 = vunpack.c.h.b16 %v605
    %v2157 = vunpack.c.l.b16 %v606
    %v2158 = vunpack.c.h.b16 %v606
    %v2159 = vunpack.c.l.b16 %v607
    %v2160 = vunpack.c.h.b16 %v607
    %v2161 = vunpack.c.l.b16 %v608
    %v2162 = vunpack.c.h.b16 %v608
    %v2163 = vunpack.c.l.b16 %v609
    %v2164 = vunpack.c.h.b16 %v609
    %v2165 = vunpack.c.l.b16 %v610
    %v2166 = vunpack.c.h.b16 %v610
    %v2167 = vunpack.c.l.b16 %v611
    %v2168 = vunpack.c.h.b16 %v611
    %v2169 = vunpack.c.l.b16 %v612
    %v2170 = vunpack.c.h.b16 %v612
    %v2171 = vunpack.c.l.b16 %v613
    %v2172 = vunpack.c.h.b16 %v613
    %v2173 = vunpack.c.l.b16 %v614
    %v2174 = vunpack.c.h.b16 %v614
    %v2175 = vunpack.c.l.b16 %v615
    %v2176 = vunpack.c.h.b16 %v615
    %v2177 = vunpack.c.l.b16 %v616
    %v2178 = vunpack.c.h.b16 %v616
    %v2179 = vunpack.c.l.b16 %v617
    %v2180 = vunpack.c.h.b16 %v617
    %v2181 = vunpack.c.l.b16 %v618
    %v2182 = vunpack.c.h.b16 %v618
    %v2183 = vunpack.c.l.b16 %v619
    %v2184 = vunpack.c.h.b16 %v619
    %v2185 = vunpack.c.l.b16 %v620
    %v2186 = vunpack.c.h.b16 %v620
    %v2187 = vunpack.c.l.b16 %v621
    %v2188 = vunpack.c.h.b16 %v621
    %v2189 = vunpack.c.l.b16 %v622
    %v2190 = vunpack.c.h.b16 %v622
    %v2191 = vunpack.c.l.b16 %v623
    %v2192 = vunpack.c.h.b16 %v623
    %v2193 = vunpack.c.l.b16 %v624
    %v2194 = vunpack.c.h.b16 %v624
    %v2195 = vunpack.c.l.b16 %v625
    %v2196 = vunpack.c.h.b16 %v625
    %v2197 = vunpack.c.l.b16 %v626
    %v2198 = vunpack.c.h.b16 %v626
    %v2199 = vunpack.c.l.b16 %v627
    %v2200 = vunpack.c.h.b16 %v627
    %v2201 = vunpack.c.l.b16 %v628
    %v2202 = vunpack.c.h.b16 %v628
    %v2203 = vunpack.c.l.b16 %v629
    %v2204 = vunpack.c.h.b16 %v629
    %v2205 = vunpack.c.l.b16 %v630
    %v2206 = vunpack.c.h.b16 %v630
    %v2207 = vunpack.c.l.b16 %v631
    %v2208 = vunpack.c.h.b16 %v631
    %v2209 = vunpack.c.l.b16 %v632
    %v2210 = vunpack.c.h.b16 %v632
    %v2211 = vpack.c.b16 %v1195, %v1187
    %v2212 = vpack.c.b16 %v1196, %v1188
    %v2213 = vpack.c.b16 %v1197, %v1189
    %v2214 = vpack.c.b16 %v1198, %v1190
    %v2215 = vpack.c.b16 %v1199, %v1191
    %v2216 = vpack.c.b16 %v1200, %v1192
    %v2217 = vpack.c.b16 %v1201, %v1193
    %v2218 = vpack.c.b16 %v1202, %v1194
    %v2219 = vpack.c.b16 %v1211, %v1203
    %v2220 = vpack.c.b16 %v1212, %v1204
    %v2221 = vpack.c.b16 %v1213, %v1205
    %v2222 = vpack.c.b16 %v1214, %v1206
    %v2223 = vpack.c.b16 %v1215, %v1207
    %v2224 = vpack.c.b16 %v1216, %v1208
    %v2225 = vpack.c.b16 %v1217, %v1209
    %v2226 = vpack.c.b16 %v1218, %v1210
    %v2227 = vpack.c.b16 %v1227, %v1219
    %v2228 = vpack.c.b16 %v1228, %v1220
    %v2229 = vpack.c.b16 %v1229, %v1221
    %v2230 = vpack.c.b16 %v1230, %v1222
    %v2231 = vpack.c.b16 %v1231, %v1223
    %v2232 = vpack.c.b16 %v1232, %v1224
    %v2233 = vpack.c.b16 %v1233, %v1225
    %v2234 = vpack.c.b16 %v1234, %v1226
    %v2235 = vpack.c.b16 %v1243, %v1235
    %v2236 = vpack.c.b16 %v1244, %v1236
    %v2237 = vpack.c.b16 %v1245, %v1237
    %v2238 = vpack.c.b16 %v1246, %v1238
    %v2239 = vpack.c.b16 %v1247, %v1239
    %v2240 = vpack.c.b16 %v1248, %v1240
    %v2241 = vpack.c.b16 %v1249, %v1241
    %v2242 = vpack.c.b16 %v1250, %v1242
    %v2243 = vpack.c.b16 %v1259, %v1251
    %v2244 = vpack.c.b16 %v1260, %v1252
    %v2245 = vpack.c.b16 %v1261, %v1253
    %v2246 = vpack.c.b16 %v1262, %v1254
    %v2247 = vpack.c.b16 %v1263, %v1255
    %v2248 = vpack.c.b16 %v1264, %v1256
    %v2249 = vpack.c.b16 %v1265, %v1257
    %v2250 = vpack.c.b16 %v1266, %v1258
    %v2251 = vpack.c.b16 %v1275, %v1267
    %v2252 = vpack.c.b16 %v1276, %v1268
    %v2253 = vpack.c.b16 %v1277, %v1269
    %v2254 = vpack.c.b16 %v1278, %v1270
    %v2255 = vpack.c.b16 %v1279, %v1271
    %v2256 = vpack.c.b16 %v1280, %v1272
    %v2257 = vpack.c.b16 %v1281, %v1273
    %v2258 = vpack.c.b16 %v1282, %v1274
    %v2259 = vpack.c.b16 %v1291, %v1283
    %v2260 = vpack.c.b16 %v1292, %v1284
    %v2261 = vpack.c.b16 %v1293, %v1285
    %v2262 = vpack.c.b16 %v1294, %v1286
    %v2263 = vpack.c.b16 %v1295, %v1287
    %v2264 = vpack.c.b16 %v1296, %v1288
    %v2265 = vpack.c.b16 %v1297, %v1289
    %v2266 = vpack.c.b16 %v1298, %v1290
    %v2267 = vpack.c.b16 %v1307, %v1299
    %v2268 = vpack.c.b16 %v1308, %v1300
    %v2269 = vpack.c.b16 %v1309, %v1301
    %v2270 = vpack.c.b16 %v1310, %v1302
    %v2271 = vpack.c.b16 %v1311, %v1303
    %v2272 = vpack.c.b16 %v1312, %v1304
    %v2273 = vpack.c.b16 %v1313, %v1305
    %v2274 = vpack.c.b16 %v1314, %v1306
    %v2275 = vpack.c.b16 %v1323, %v1315
    %v2276 = vpack.c.b16 %v1324, %v1316
    %v2277 = vpack.c.b16 %v1325, %v1317
    %v2278 = vpack.c.b16 %v1326, %v1318
    %v2279 = vpack.c.b16 %v1327, %v1319
    %v2280 = vpack.c.b16 %v1328, %v1320
    %v2281 = vpack.c.b16 %v1329, %v1321
    %v2282 = vpack.c.b16 %v1330, %v1322
    %v2283 = vpack.c.b16 %v1339, %v1331
    %v2284 = vpack.c.b16 %v1340, %v1332
    %v2285 = vpack.c.b16 %v1341, %v1333
    %v2286 = vpack.c.b16 %v1342, %v1334
    %v2287 = vpack.c.b16 %v1343, %v1335
    %v2288 = vpack.c.b16 %v1344, %v1336
    %v2289 = vpack.c.b16 %v1345, %v1337
    %v2290 = vpack.c.b16 %v1346, %v1338
    %v2291 = vpack.c.b16 %v1355, %v1347
    %v2292 = vpack.c.b16 %v1356, %v1348
    %v2293 = vpack.c.b16 %v1357, %v1349
    %v2294 = vpack.c.b16 %v1358, %v1350
    %v2295 = vpack.c.b16 %v1359, %v1351
    %v2296 = vpack.c.b16 %v1360, %v1352
    %v2297 = vpack.c.b16 %v1361, %v1353
    %v2298 = vpack.c.b16 %v1362, %v1354
    %v2299 = vpack.c.b16 %v1371, %v1363
    %v2300 = vpack.c.b16 %v1372, %v1364
    %v2301 = vpack.c.b16 %v1373, %v1365
    %v2302 = vpack.c.b16 %v1374, %v1366
    %v2303 = vpack.c.b16 %v1375, %v1367
    %v2304 = vpack.c.b16 %v1376, %v1368
    %v2305 = vpack.c.b16 %v1377, %v1369
    %v2306 = vpack.c.b16 %v1378, %v1370
    %v2307 = vpack.c.b16 %v1387, %v1379
    %v2308 = vpack.c.b16 %v1388, %v1380
    %v2309 = vpack.c.b16 %v1389, %v1381
    %v2310 = vpack.c.b16 %v1390, %v1382
    %v2311 = vpack.c.b16 %v1391, %v1383
    %v2312 = vpack.c.b16 %v1392, %v1384
    %v2313 = vpack.c.b16 %v1393, %v1385
    %v2314 = vpack.c.b16 %v1394, %v1386
    %v2315 = vpack.c.b16 %v1403, %v1395
    %v2316 = vpack.c.b16 %v1404, %v1396
    %v2317 = vpack.c.b16 %v1405, %v1397
    %v2318 = vpack.c.b16 %v1406, %v1398
    %v2319 = vpack.c.b16 %v1407, %v1399
    %v2320 = vpack.c.b16 %v1408, %v1400
    %v2321 = vpack.c.b16 %v1409, %v1401
    %v2322 = vpack.c.b16 %v1410, %v1402
    %v2323 = vpack.c.b16 %v1419, %v1411
    %v2324 = vpack.c.b16 %v1420, %v1412
    %v2325 = vpack.c.b16 %v1421, %v1413
    %v2326 = vpack.c.b16 %v1422, %v1414
    %v2327 = vpack.c.b16 %v1423, %v1415
    %v2328 = vpack.c.b16 %v1424, %v1416
    %v2329 = vpack.c.b16 %v1425, %v1417
    %v2330 = vpack.c.b16 %v1426, %v1418
    %v2331 = vpack.c.b16 %v1435, %v1427
    %v2332 = vpack.c.b16 %v1436, %v1428
    %v2333 = vpack.c.b16 %v1437, %v1429
    %v2334 = vpack.c.b16 %v1438, %v1430
    %v2335 = vpack.c.b16 %v1439, %v1431
    %v2336 = vpack.c.b16 %v1440, %v1432
    %v2337 = vpack.c.b16 %v1441, %v1433
    %v2338 = vpack.c.b16 %v1442, %v1434
    %v2339 = vpack.c.b16 %v1451, %v1443
    %v2340 = vpack.c.b16 %v1452, %v1444
    %v2341 = vpack.c.b16 %v1453, %v1445
    %v2342 = vpack.c.b16 %v1454, %v1446
    %v2343 = vpack.c.b16 %v1455, %v1447
    %v2344 = vpack.c.b16 %v1456, %v1448
    %v2345 = vpack.c.b16 %v1457, %v1449
    %v2346 = vpack.c.b16 %v1458, %v1450
    %v2347 = vpack.c.b16 %v1467, %v1459
    %v2348 = vpack.c.b16 %v1468, %v1460
    %v2349 = vpack.c.b16 %v1469, %v1461
    %v2350 = vpack.c.b16 %v1470, %v1462
    %v2351 = vpack.c.b16 %v1471, %v1463
    %v2352 = vpack.c.b16 %v1472, %v1464
    %v2353 = vpack.c.b16 %v1473, %v1465
    %v2354 = vpack.c.b16 %v1474, %v1466
    %v2355 = vpack.c.b16 %v1483, %v1475
    %v2356 = vpack.c.b16 %v1484, %v1476
    %v2357 = vpack.c.b16 %v1485, %v1477
    %v2358 = vpack.c.b16 %v1486, %v1478
    %v2359 = vpack.c.b16 %v1487, %v1479
    %v2360 = vpack.c.b16 %v1488, %v1480
    %v2361 = vpack.c.b16 %v1489, %v1481
    %v2362 = vpack.c.b16 %v1490, %v1482
    %v2363 = vpack.c.b16 %v1499, %v1491
    %v2364 = vpack.c.b16 %v1500, %v1492
    %v2365 = vpack.c.b16 %v1501, %v1493
    %v2366 = vpack.c.b16 %v1502, %v1494
    %v2367 = vpack.c.b16 %v1503, %v1495
    %v2368 = vpack.c.b16 %v1504, %v1496
    %v2369 = vpack.c.b16 %v1505, %v1497
    %v2370 = vpack.c.b16 %v1506, %v1498
    %v2371 = vpack.c.b16 %v1515, %v1507
    %v2372 = vpack.c.b16 %v1516, %v1508
    %v2373 = vpack.c.b16 %v1517, %v1509
    %v2374 = vpack.c.b16 %v1518, %v1510
    %v2375 = vpack.c.b16 %v1519, %v1511
    %v2376 = vpack.c.b16 %v1520, %v1512
    %v2377 = vpack.c.b16 %v1521, %v1513
    %v2378 = vpack.c.b16 %v1522, %v1514
    %v2379 = vpack.c.b16 %v1531, %v1523
    %v2380 = vpack.c.b16 %v1532, %v1524
    %v2381 = vpack.c.b16 %v1533, %v1525
    %v2382 = vpack.c.b16 %v1534, %v1526
    %v2383 = vpack.c.b16 %v1535, %v1527
    %v2384 = vpack.c.b16 %v1536, %v1528
    %v2385 = vpack.c.b16 %v1537, %v1529
    %v2386 = vpack.c.b16 %v1538, %v1530
    %v2387 = vpack.c.b16 %v1547, %v1539
    %v2388 = vpack.c.b16 %v1548, %v1540
    %v2389 = vpack.c.b16 %v1549, %v1541
    %v2390 = vpack.c.b16 %v1550, %v1542
    %v2391 = vpack.c.b16 %v1551, %v1543
    %v2392 = vpack.c.b16 %v1552, %v1544
    %v2393 = vpack.c.b16 %v1553, %v1545
    %v2394 = vpack.c.b16 %v1554, %v1546
    %v2395 = vpack.c.b16 %v1563, %v1555
    %v2396 = vpack.c.b16 %v1564, %v1556
    %v2397 = vpack.c.b16 %v1565, %v1557
    %v2398 = vpack.c.b16 %v1566, %v1558
    %v2399 = vpack.c.b16 %v1567, %v1559
    %v2400 = vpack.c.b16 %v1568, %v1560
    %v2401 = vpack.c.b16 %v1569, %v1561
    %v2402 = vpack.c.b16 %v1570, %v1562
    %v2403 = vpack.c.b16 %v1579, %v1571
    %v2404 = vpack.c.b16 %v1580, %v1572
    %v2405 = vpack.c.b16 %v1581, %v1573
    %v2406 = vpack.c.b16 %v1582, %v1574
    %v2407 = vpack.c.b16 %v1583, %v1575
    %v2408 = vpack.c.b16 %v1584, %v1576
    %v2409 = vpack.c.b16 %v1585, %v1577
    %v2410 = vpack.c.b16 %v1586, %v1578
    %v2411 = vpack.c.b16 %v1595, %v1587
    %v2412 = vpack.c.b16 %v1596, %v1588
    %v2413 = vpack.c.b16 %v1597, %v1589
    %v2414 = vpack.c.b16 %v1598, %v1590
    %v2415 = vpack.c.b16 %v1599, %v1591
    %v2416 = vpack.c.b16 %v1600, %v1592
    %v2417 = vpack.c.b16 %v1601, %v1593
    %v2418 = vpack.c.b16 %v1602, %v1594
    %v2419 = vpack.c.b16 %v1611, %v1603
    %v2420 = vpack.c.b16 %v1612, %v1604
    %v2421 = vpack.c.b16 %v1613, %v1605
    %v2422 = vpack.c.b16 %v1614, %v1606
    %v2423 = vpack.c.b16 %v1615, %v1607
    %v2424 = vpack.c.b16 %v1616, %v1608
    %v2425 = vpack.c.b16 %v1617, %v1609
    %v2426 = vpack.c.b16 %v1618, %v1610
    %v2427 = vpack.c.b16 %v1627, %v1619
    %v2428 = vpack.c.b16 %v1628, %v1620
    %v2429 = vpack.c.b16 %v1629, %v1621
    %v2430 = vpack.c.b16 %v1630, %v1622
    %v2431 = vpack.c.b16 %v1631, %v1623
    %v2432 = vpack.c.b16 %v1632, %v1624
    %v2433 = vpack.c.b16 %v1633, %v1625
    %v2434 = vpack.c.b16 %v1634, %v1626
    %v2435 = vpack.c.b16 %v1643, %v1635
    %v2436 = vpack.c.b16 %v1644, %v1636
    %v2437 = vpack.c.b16 %v1645, %v1637
    %v2438 = vpack.c.b16 %v1646, %v1638
    %v2439 = vpack.c.b16 %v1647, %v1639
    %v2440 = vpack.c.b16 %v1648, %v1640
    %v2441 = vpack.c.b16 %v1649, %v1641
    %v2442 = vpack.c.b16 %v1650, %v1642
    %v2443 = vpack.c.b16 %v1659, %v1651
    %v2444 = vpack.c.b16 %v1660, %v1652
    %v2445 = vpack.c.b16 %v1661, %v1653
    %v2446 = vpack.c.b16 %v1662, %v1654
    %v2447 = vpack.c.b16 %v1663, %v1655
    %v2448 = vpack.c.b16 %v1664, %v1656
    %v2449 = vpack.c.b16 %v1665, %v1657
    %v2450 = vpack.c.b16 %v1666, %v1658
    %v2451 = vpack.c.b16 %v1675, %v1667
    %v2452 = vpack.c.b16 %v1676, %v1668
    %v2453 = vpack.c.b16 %v1677, %v1669
    %v2454 = vpack.c.b16 %v1678, %v1670
    %v2455 = vpack.c.b16 %v1679, %v1671
    %v2456 = vpack.c.b16 %v1680, %v1672
    %v2457 = vpack.c.b16 %v1681, %v1673
    %v2458 = vpack.c.b16 %v1682, %v1674
    %v2459 = vpack.c.b16 %v1691, %v1683
    %v2460 = vpack.c.b16 %v1692, %v1684
    %v2461 = vpack.c.b16 %v1693, %v1685
    %v2462 = vpack.c.b16 %v1694, %v1686
    %v2463 = vpack.c.b16 %v1695, %v1687
    %v2464 = vpack.c.b16 %v1696, %v1688
    %v2465 = vpack.c.b16 %v1697, %v1689
    %v2466 = vpack.c.b16 %v1698, %v1690
    %v2467 = vpack.c.b16 %v1707, %v1699
    %v2468 = vpack.c.b16 %v1708, %v1700
    %v2469 = vpack.c.b16 %v1709, %v1701
    %v2470 = vpack.c.b16 %v1710, %v1702
    %v2471 = vpack.c.b16 %v1711, %v1703
    %v2472 = vpack.c.b16 %v1712, %v1704
    %v2473 = vpack.c.b16 %v1713, %v1705
    %v2474 = vpack.c.b16 %v1714, %v1706
    %v2475 = vpack.c.b16 %v1723, %v1715
    %v2476 = vpack.c.b16 %v1724, %v1716
    %v2477 = vpack.c.b16 %v1725, %v1717
    %v2478 = vpack.c.b16 %v1726, %v1718
    %v2479 = vpack.c.b16 %v1727, %v1719
    %v2480 = vpack.c.b16 %v1728, %v1720
    %v2481 = vpack.c.b16 %v1729, %v1721
    %v2482 = vpack.c.b16 %v1730, %v1722
    %v2483 = vpack.c.b16 %v1739, %v1731
    %v2484 = vpack.c.b16 %v1740, %v1732
    %v2485 = vpack.c.b16 %v1741, %v1733
    %v2486 = vpack.c.b16 %v1742, %v1734
    %v2487 = vpack.c.b16 %v1743, %v1735
    %v2488 = vpack.c.b16 %v1744, %v1736
    %v2489 = vpack.c.b16 %v1745, %v1737
    %v2490 = vpack.c.b16 %v1746, %v1738
    %v2491 = vpack.c.b16 %v1755, %v1747
    %v2492 = vpack.c.b16 %v1756, %v1748
    %v2493 = vpack.c.b16 %v1757, %v1749
    %v2494 = vpack.c.b16 %v1758, %v1750
    %v2495 = vpack.c.b16 %v1759, %v1751
    %v2496 = vpack.c.b16 %v1760, %v1752
    %v2497 = vpack.c.b16 %v1761, %v1753
    %v2498 = vpack.c.b16 %v1762, %v1754
    %v2499 = vpack.c.b16 %v1771, %v1763
    %v2500 = vpack.c.b16 %v1772, %v1764
    %v2501 = vpack.c.b16 %v1773, %v1765
    %v2502 = vpack.c.b16 %v1774, %v1766
    %v2503 = vpack.c.b16 %v1775, %v1767
    %v2504 = vpack.c.b16 %v1776, %v1768
    %v2505 = vpack.c.b16 %v1777, %v1769
    %v2506 = vpack.c.b16 %v1778, %v1770
    %v2507 = vpack.c.b16 %v1787, %v1779
    %v2508 = vpack.c.b16 %v1788, %v1780
    %v2509 = vpack.c.b16 %v1789, %v1781
    %v2510 = vpack.c.b16 %v1790, %v1782
    %v2511 = vpack.c.b16 %v1791, %v1783
    %v2512 = vpack.c.b16 %v1792, %v1784
    %v2513 = vpack.c.b16 %v1793, %v1785
    %v2514 = vpack.c.b16 %v1794, %v1786
    %v2515 = vpack.c.b16 %v1803, %v1795
    %v2516 = vpack.c.b16 %v1804, %v1796
    %v2517 = vpack.c.b16 %v1805, %v1797
    %v2518 = vpack.c.b16 %v1806, %v1798
    %v2519 = vpack.c.b16 %v1807, %v1799
    %v2520 = vpack.c.b16 %v1808, %v1800
    %v2521 = vpack.c.b16 %v1809, %v1801
    %v2522 = vpack.c.b16 %v1810, %v1802
    %v2523 = vpack.c.b16 %v1819, %v1811
    %v2524 = vpack.c.b16 %v1820, %v1812
    %v2525 = vpack.c.b16 %v1821, %v1813
    %v2526 = vpack.c.b16 %v1822, %v1814
    %v2527 = vpack.c.b16 %v1823, %v1815
    %v2528 = vpack.c.b16 %v1824, %v1816
    %v2529 = vpack.c.b16 %v1825, %v1817
    %v2530 = vpack.c.b16 %v1826, %v1818
    %v2531 = vpack.c.b16 %v1835, %v1827
    %v2532 = vpack.c.b16 %v1836, %v1828
    %v2533 = vpack.c.b16 %v1837, %v1829
    %v2534 = vpack.c.b16 %v1838, %v1830
    %v2535 = vpack.c.b16 %v1839, %v1831
    %v2536 = vpack.c.b16 %v1840, %v1832
    %v2537 = vpack.c.b16 %v1841, %v1833
    %v2538 = vpack.c.b16 %v1842, %v1834
    %v2539 = vpack.c.b16 %v1851, %v1843
    %v2540 = vpack.c.b16 %v1852, %v1844
    %v2541 = vpack.c.b16 %v1853, %v1845
    %v2542 = vpack.c.b16 %v1854, %v1846
    %v2543 = vpack.c.b16 %v1855, %v1847
    %v2544 = vpack.c.b16 %v1856, %v1848
    %v2545 = vpack.c.b16 %v1857, %v1849
    %v2546 = vpack.c.b16 %v1858, %v1850
    %v2547 = vpack.c.b16 %v1867, %v1859
    %v2548 = vpack.c.b16 %v1868, %v1860
    %v2549 = vpack.c.b16 %v1869, %v1861
    %v2550 = vpack.c.b16 %v1870, %v1862
    %v2551 = vpack.c.b16 %v1871, %v1863
    %v2552 = vpack.c.b16 %v1872, %v1864
    %v2553 = vpack.c.b16 %v1873, %v1865
    %v2554 = vpack.c.b16 %v1874, %v1866
    %v2555 = vpack.c.b16 %v1883, %v1875
    %v2556 = vpack.c.b16 %v1884, %v1876
    %v2557 = vpack.c.b16 %v1885, %v1877
    %v2558 = vpack.c.b16 %v1886, %v1878
    %v2559 = vpack.c.b16 %v1887, %v1879
    %v2560 = vpack.c.b16 %v1888, %v1880
    %v2561 = vpack.c.b16 %v1889, %v1881
    %v2562 = vpack.c.b16 %v1890, %v1882
    %v2563 = vpack.c.b16 %v1899, %v1891
    %v2564 = vpack.c.b16 %v1900, %v1892
    %v2565 = vpack.c.b16 %v1901, %v1893
    %v2566 = vpack.c.b16 %v1902, %v1894
    %v2567 = vpack.c.b16 %v1903, %v1895
    %v2568 = vpack.c.b16 %v1904, %v1896
    %v2569 = vpack.c.b16 %v1905, %v1897
    %v2570 = vpack.c.b16 %v1906, %v1898
    %v2571 = vpack.c.b16 %v1915, %v1907
    %v2572 = vpack.c.b16 %v1916, %v1908
    %v2573 = vpack.c.b16 %v1917, %v1909
    %v2574 = vpack.c.b16 %v1918, %v1910
    %v2575 = vpack.c.b16 %v1919, %v1911
    %v2576 = vpack.c.b16 %v1920, %v1912
    %v2577 = vpack.c.b16 %v1921, %v1913
    %v2578 = vpack.c.b16 %v1922, %v1914
    %v2579 = vpack.c.b16 %v1931, %v1923
    %v2580 = vpack.c.b16 %v1932, %v1924
    %v2581 = vpack.c.b16 %v1933, %v1925
    %v2582 = vpack.c.b16 %v1934, %v1926
    %v2583 = vpack.c.b16 %v1935, %v1927
    %v2584 = vpack.c.b16 %v1936, %v1928
    %v2585 = vpack.c.b16 %v1937, %v1929
    %v2586 = vpack.c.b16 %v1938, %v1930
    %v2587 = vpack.c.b16 %v1947, %v1939
    %v2588 = vpack.c.b16 %v1948, %v1940
    %v2589 = vpack.c.b16 %v1949, %v1941
    %v2590 = vpack.c.b16 %v1950, %v1942
    %v2591 = vpack.c.b16 %v1951, %v1943
    %v2592 = vpack.c.b16 %v1952, %v1944
    %v2593 = vpack.c.b16 %v1953, %v1945
    %v2594 = vpack.c.b16 %v1954, %v1946
    %v2595 = vpack.c.b16 %v1963, %v1955
    %v2596 = vpack.c.b16 %v1964, %v1956
    %v2597 = vpack.c.b16 %v1965, %v1957
    %v2598 = vpack.c.b16 %v1966, %v1958
    %v2599 = vpack.c.b16 %v1967, %v1959
    %v2600 = vpack.c.b16 %v1968, %v1960
    %v2601 = vpack.c.b16 %v1969, %v1961
    %v2602 = vpack.c.b16 %v1970, %v1962
    %v2603 = vpack.c.b16 %v1979, %v1971
    %v2604 = vpack.c.b16 %v1980, %v1972
    %v2605 = vpack.c.b16 %v1981, %v1973
    %v2606 = vpack.c.b16 %v1982, %v1974
    %v2607 = vpack.c.b16 %v1983, %v1975
    %v2608 = vpack.c.b16 %v1984, %v1976
    %v2609 = vpack.c.b16 %v1985, %v1977
    %v2610 = vpack.c.b16 %v1986, %v1978
    %v2611 = vpack.c.b16 %v1995, %v1987
    %v2612 = vpack.c.b16 %v1996, %v1988
    %v2613 = vpack.c.b16 %v1997, %v1989
    %v2614 = vpack.c.b16 %v1998, %v1990
    %v2615 = vpack.c.b16 %v1999, %v1991
    %v2616 = vpack.c.b16 %v2000, %v1992
    %v2617 = vpack.c.b16 %v2001, %v1993
    %v2618 = vpack.c.b16 %v2002, %v1994
    %v2619 = vpack.c.b16 %v2011, %v2003
    %v2620 = vpack.c.b16 %v2012, %v2004
    %v2621 = vpack.c.b16 %v2013, %v2005
    %v2622 = vpack.c.b16 %v2014, %v2006
    %v2623 = vpack.c.b16 %v2015, %v2007
    %v2624 = vpack.c.b16 %v2016, %v2008
    %v2625 = vpack.c.b16 %v2017, %v2009
    %v2626 = vpack.c.b16 %v2018, %v2010
    %v2627 = vpack.c.b16 %v2027, %v2019
    %v2628 = vpack.c.b16 %v2028, %v2020
    %v2629 = vpack.c.b16 %v2029, %v2021
    %v2630 = vpack.c.b16 %v2030, %v2022
    %v2631 = vpack.c.b16 %v2031, %v2023
    %v2632 = vpack.c.b16 %v2032, %v2024
    %v2633 = vpack.c.b16 %v2033, %v2025
    %v2634 = vpack.c.b16 %v2034, %v2026
    %v2635 = vpack.c.b16 %v2043, %v2035
    %v2636 = vpack.c.b16 %v2044, %v2036
    %v2637 = vpack.c.b16 %v2045, %v2037
    %v2638 = vpack.c.b16 %v2046, %v2038
    %v2639 = vpack.c.b16 %v2047, %v2039
    %v2640 = vpack.c.b16 %v2048, %v2040
    %v2641 = vpack.c.b16 %v2049, %v2041
    %v2642 = vpack.c.b16 %v2050, %v2042
    %v2643 = vpack.c.b16 %v2059, %v2051
    %v2644 = vpack.c.b16 %v2060, %v2052
    %v2645 = vpack.c.b16 %v2061, %v2053
    %v2646 = vpack.c.b16 %v2062, %v2054
    %v2647 = vpack.c.b16 %v2063, %v2055
    %v2648 = vpack.c.b16 %v2064, %v2056
    %v2649 = vpack.c.b16 %v2065, %v2057
    %v2650 = vpack.c.b16 %v2066, %v2058
    %v2651 = vpack.c.b16 %v2075, %v2067
    %v2652 = vpack.c.b16 %v2076, %v2068
    %v2653 = vpack.c.b16 %v2077, %v2069
    %v2654 = vpack.c.b16 %v2078, %v2070
    %v2655 = vpack.c.b16 %v2079, %v2071
    %v2656 = vpack.c.b16 %v2080, %v2072
    %v2657 = vpack.c.b16 %v2081, %v2073
    %v2658 = vpack.c.b16 %v2082, %v2074
    %v2659 = vpack.c.b16 %v2091, %v2083
    %v2660 = vpack.c.b16 %v2092, %v2084
    %v2661 = vpack.c.b16 %v2093, %v2085
    %v2662 = vpack.c.b16 %v2094, %v2086
    %v2663 = vpack.c.b16 %v2095, %v2087
    %v2664 = vpack.c.b16 %v2096, %v2088
    %v2665 = vpack.c.b16 %v2097, %v2089
    %v2666 = vpack.c.b16 %v2098, %v2090
    %v2667 = vpack.c.b16 %v2107, %v2099
    %v2668 = vpack.c.b16 %v2108, %v2100
    %v2669 = vpack.c.b16 %v2109, %v2101
    %v2670 = vpack.c.b16 %v2110, %v2102
    %v2671 = vpack.c.b16 %v2111, %v2103
    %v2672 = vpack.c.b16 %v2112, %v2104
    %v2673 = vpack.c.b16 %v2113, %v2105
    %v2674 = vpack.c.b16 %v2114, %v2106
    %v2675 = vpack.c.b16 %v2123, %v2115
    %v2676 = vpack.c.b16 %v2124, %v2116
    %v2677 = vpack.c.b16 %v2125, %v2117
    %v2678 = vpack.c.b16 %v2126, %v2118
    %v2679 = vpack.c.b16 %v2127, %v2119
    %v2680 = vpack.c.b16 %v2128, %v2120
    %v2681 = vpack.c.b16 %v2129, %v2121
    %v2682 = vpack.c.b16 %v2130, %v2122
    %v2683 = vpack.c.b16 %v2139, %v2131
    %v2684 = vpack.c.b16 %v2140, %v2132
    %v2685 = vpack.c.b16 %v2141, %v2133
    %v2686 = vpack.c.b16 %v2142, %v2134
    %v2687 = vpack.c.b16 %v2143, %v2135
    %v2688 = vpack.c.b16 %v2144, %v2136
    %v2689 = vpack.c.b16 %v2145, %v2137
    %v2690 = vpack.c.b16 %v2146, %v2138
    %v2691 = vpack.c.b16 %v2155, %v2147
    %v2692 = vpack.c.b16 %v2156, %v2148
    %v2693 = vpack.c.b16 %v2157, %v2149
    %v2694 = vpack.c.b16 %v2158, %v2150
    %v2695 = vpack.c.b16 %v2159, %v2151
    %v2696 = vpack.c.b16 %v2160, %v2152
    %v2697 = vpack.c.b16 %v2161, %v2153
    %v2698 = vpack.c.b16 %v2162, %v2154
    %v2699 = vpack.c.b16 %v2171, %v2163
    %v2700 = vpack.c.b16 %v2172, %v2164
    %v2701 = vpack.c.b16 %v2173, %v2165
    %v2702 = vpack.c.b16 %v2174, %v2166
    %v2703 = vpack.c.b16 %v2175, %v2167
    %v2704 = vpack.c.b16 %v2176, %v2168
    %v2705 = vpack.c.b16 %v2177, %v2169
    %v2706 = vpack.c.b16 %v2178, %v2170
    %v2707 = vpack.c.b16 %v2187, %v2179
    %v2708 = vpack.c.b16 %v2188, %v2180
    %v2709 = vpack.c.b16 %v2189, %v2181
    %v2710 = vpack.c.b16 %v2190, %v2182
    %v2711 = vpack.c.b16 %v2191, %v2183
    %v2712 = vpack.c.b16 %v2192, %v2184
    %v2713 = vpack.c.b16 %v2193, %v2185
    %v2714 = vpack.c.b16 %v2194, %v2186
    %v2715 = vpack.c.b16 %v2203, %v2195
    %v2716 = vpack.c.b16 %v2204, %v2196
    %v2717 = vpack.c.b16 %v2205, %v2197
    %v2718 = vpack.c.b16 %v2206, %v2198
    %v2719 = vpack.c.b16 %v2207, %v2199
    %v2720 = vpack.c.b16 %v2208, %v2200
    %v2721 = vpack.c.b16 %v2209, %v2201
    %v2722 = vpack.c.b16 %v2210, %v2202
    %3235 = vmatprep.subr.bf16.mxu0 %v2212
    %3236 = vmatpush1.bf16.msra.mxu0 %v2211
    %3237 = vmatprep.subr.bf16.mxu0 %v2220
    %3238 = vmatpush1.bf16.msra.mxu0 %v2219
    %3239 = vmatprep.subr.bf16.mxu0 %v2228
    %3240 = vmatpush1.bf16.msra.mxu0 %v2227
    %3241 = vmatprep.subr.bf16.mxu0 %v2236
    %3242 = vmatpush1.bf16.msra.mxu0 %v2235
    %3243 = vmatprep.subr.bf16.mxu0 %v2244
    %3244 = vmatpush1.bf16.msra.mxu0 %v2243
    %3245 = vmatprep.subr.bf16.mxu0 %v2252
    %3246 = vmatpush1.bf16.msra.mxu0 %v2251
    %3247 = vmatprep.subr.bf16.mxu0 %v2260
    %3248 = vmatpush1.bf16.msra.mxu0 %v2259
    %3249 = vmatprep.subr.bf16.mxu0 %v2268
    %3250 = vmatpush1.bf16.msra.mxu0 %v2267
    %3251 = vmatprep.subr.bf16.mxu0 %v2276
    %3252 = vmatpush1.bf16.msra.mxu0 %v2275
    %3253 = vmatprep.subr.bf16.mxu0 %v2284
    %3254 = vmatpush1.bf16.msra.mxu0 %v2283
    %3255 = vmatprep.subr.bf16.mxu0 %v2292
    %3256 = vmatpush1.bf16.msra.mxu0 %v2291
    %3257 = vmatprep.subr.bf16.mxu0 %v2300
    %3258 = vmatpush1.bf16.msra.mxu0 %v2299
    %3259 = vmatprep.subr.bf16.mxu0 %v2308
    %3260 = vmatpush1.bf16.msra.mxu0 %v2307
    %3261 = vmatprep.subr.bf16.mxu0 %v2316
    %3262 = vmatpush1.bf16.msra.mxu0 %v2315
    %3263 = vmatprep.subr.bf16.mxu0 %v2324
    %3264 = vmatpush1.bf16.msra.mxu0 %v2323
    %3265 = vmatprep.subr.bf16.mxu0 %v2332
    %3266 = vmatpush1.bf16.msra.mxu0 %v2331
    %3267 = vmatprep.mubr.bf16.mxu0 %v114
    %3268 = vmatmul.mubr.bf16.gmra.mrb[0].mxu0 %v113
    %v3269 = vpop.f32.mrb[0].mxu0
    %v3270 = vadd.f32 %v638, %v3269
    %v3271 = vpop.f32.mrb[0].mxu0
    %v3272 = vadd.f32 %v642, %v3271
    %v3273 = vpop.f32.mrb[0].mxu0
    %v3274 = vpop.f32.mrb[0].mxu0
    %3275 = vdwg.mxu0
    %3276 = vmatprep.subr.bf16.mxu0 %v2340
    %3277 = vmatpush1.bf16.msra.mxu0 %v2339
    %3278 = vmatprep.subr.bf16.mxu0 %v2348
    %3279 = vmatpush1.bf16.msra.mxu0 %v2347
    %3280 = vmatprep.subr.bf16.mxu0 %v2356
    %3281 = vmatpush1.bf16.msra.mxu0 %v2355
    %3282 = vmatprep.subr.bf16.mxu0 %v2364
    %3283 = vmatpush1.bf16.msra.mxu0 %v2363
    %3284 = vmatprep.subr.bf16.mxu0 %v2372
    %3285 = vmatpush1.bf16.msra.mxu0 %v2371
    %3286 = vmatprep.subr.bf16.mxu0 %v2380
    %3287 = vmatpush1.bf16.msra.mxu0 %v2379
    %3288 = vmatprep.subr.bf16.mxu0 %v2388
    %3289 = vmatpush1.bf16.msra.mxu0 %v2387
    %3290 = vmatprep.subr.bf16.mxu0 %v2396
    %3291 = vmatpush1.bf16.msra.mxu0 %v2395
    %3292 = vmatprep.subr.bf16.mxu0 %v2404
    %3293 = vmatpush1.bf16.msra.mxu0 %v2403
    %3294 = vmatprep.subr.bf16.mxu0 %v2412
    %3295 = vmatpush1.bf16.msra.mxu0 %v2411
    %3296 = vmatprep.subr.bf16.mxu0 %v2420
    %3297 = vmatpush1.bf16.msra.mxu0 %v2419
    %3298 = vmatprep.subr.bf16.mxu0 %v2428
    %3299 = vmatpush1.bf16.msra.mxu0 %v2427
    %3300 = vmatprep.subr.bf16.mxu0 %v2436
    %3301 = vmatpush1.bf16.msra.mxu0 %v2435
    %3302 = vmatprep.subr.bf16.mxu0 %v2444
    %3303 = vmatpush1.bf16.msra.mxu0 %v2443
    %3304 = vmatprep.subr.bf16.mxu0 %v2452
    %3305 = vmatpush1.bf16.msra.mxu0 %v2451
    %3306 = vmatprep.subr.bf16.mxu0 %v2460
    %3307 = vmatpush1.bf16.msra.mxu0 %v2459
    %3308 = vmatprep.mubr.bf16.mxu0 %v116
    %3309 = vmatmul.mubr.bf16.gmra.mrb[0].mxu0 %v115
    %v3310 = vpop.f32.mrb[0].mxu0
    %v3311 = vadd.f32 %v3270, %v3310
    %v3312 = vpop.f32.mrb[0].mxu0
    %v3313 = vadd.f32 %v3272, %v3312
    %v3314 = vpop.f32.mrb[0].mxu0
    %v3315 = vpop.f32.mrb[0].mxu0
    %3316 = vdwg.mxu0
    %3317 = vmatprep.subr.bf16.mxu0 %v2468
    %3318 = vmatpush1.bf16.msra.mxu0 %v2467
    %3319 = vmatprep.subr.bf16.mxu0 %v2476
    %3320 = vmatpush1.bf16.msra.mxu0 %v2475
    %3321 = vmatprep.subr.bf16.mxu0 %v2484
    %3322 = vmatpush1.bf16.msra.mxu0 %v2483
    %3323 = vmatprep.subr.bf16.mxu0 %v2492
    %3324 = vmatpush1.bf16.msra.mxu0 %v2491
    %3325 = vmatprep.subr.bf16.mxu0 %v2500
    %3326 = vmatpush1.bf16.msra.mxu0 %v2499
    %3327 = vmatprep.subr.bf16.mxu0 %v2508
    %3328 = vmatpush1.bf16.msra.mxu0 %v2507
    %3329 = vmatprep.subr.bf16.mxu0 %v2516
    %3330 = vmatpush1.bf16.msra.mxu0 %v2515
    %3331 = vmatprep.subr.bf16.mxu0 %v2524
    %3332 = vmatpush1.bf16.msra.mxu0 %v2523
    %3333 = vmatprep.subr.bf16.mxu0 %v2532
    %3334 = vmatpush1.bf16.msra.mxu0 %v2531
    %3335 = vmatprep.subr.bf16.mxu0 %v2540
    %3336 = vmatpush1.bf16.msra.mxu0 %v2539
    %3337 = vmatprep.subr.bf16.mxu0 %v2548
    %3338 = vmatpush1.bf16.msra.mxu0 %v2547
    %3339 = vmatprep.subr.bf16.mxu0 %v2556
    %3340 = vmatpush1.bf16.msra.mxu0 %v2555
    %3341 = vmatprep.subr.bf16.mxu0 %v2564
    %3342 = vmatpush1.bf16.msra.mxu0 %v2563
    %3343 = vmatprep.subr.bf16.mxu0 %v2572
    %3344 = vmatpush1.bf16.msra.mxu0 %v2571
    %3345 = vmatprep.subr.bf16.mxu0 %v2580
    %3346 = vmatpush1.bf16.msra.mxu0 %v2579
    %3347 = vmatprep.subr.bf16.mxu0 %v2588
    %3348 = vmatpush1.bf16.msra.mxu0 %v2587
    %3349 = vmatprep.mubr.bf16.mxu0 %v118
    %3350 = vmatmul.mubr.bf16.gmra.mrb[0].mxu0 %v117
    %v3351 = vpop.f32.mrb[0].mxu0
    %v3352 = vadd.f32 %v3311, %v3351
    %v3353 = vpop.f32.mrb[0].mxu0
    %v3354 = vadd.f32 %v3313, %v3353
    %v3355 = vpop.f32.mrb[0].mxu0
    %v3356 = vpop.f32.mrb[0].mxu0
    %3357 = vdwg.mxu0
    %3358 = vmatprep.subr.bf16.mxu0 %v2596
    %3359 = vmatpush1.bf16.msra.mxu0 %v2595
    %3360 = vmatprep.subr.bf16.mxu0 %v2604
    %3361 = vmatpush1.bf16.msra.mxu0 %v2603
    %3362 = vmatprep.subr.bf16.mxu0 %v2612
    %3363 = vmatpush1.bf16.msra.mxu0 %v2611
    %3364 = vmatprep.subr.bf16.mxu0 %v2620
    %3365 = vmatpush1.bf16.msra.mxu0 %v2619
    %3366 = vmatprep.subr.bf16.mxu0 %v2628
    %3367 = vmatpush1.bf16.msra.mxu0 %v2627
    %3368 = vmatprep.subr.bf16.mxu0 %v2636
    %3369 = vmatpush1.bf16.msra.mxu0 %v2635
    %3370 = vmatprep.subr.bf16.mxu0 %v2644
    %3371 = vmatpush1.bf16.msra.mxu0 %v2643
    %3372 = vmatprep.subr.bf16.mxu0 %v2652
    %3373 = vmatpush1.bf16.msra.mxu0 %v2651
    %3374 = vmatprep.subr.bf16.mxu0 %v2660
    %3375 = vmatpush1.bf16.msra.mxu0 %v2659
    %3376 = vmatprep.subr.bf16.mxu0 %v2668
    %3377 = vmatpush1.bf16.msra.mxu0 %v2667
    %3378 = vmatprep.subr.bf16.mxu0 %v2676
    %3379 = vmatpush1.bf16.msra.mxu0 %v2675
    %3380 = vmatprep.subr.bf16.mxu0 %v2684
    %3381 = vmatpush1.bf16.msra.mxu0 %v2683
    %3382 = vmatprep.subr.bf16.mxu0 %v2692
    %3383 = vmatpush1.bf16.msra.mxu0 %v2691
    %3384 = vmatprep.subr.bf16.mxu0 %v2700
    %3385 = vmatpush1.bf16.msra.mxu0 %v2699
    %3386 = vmatprep.subr.bf16.mxu0 %v2708
    %3387 = vmatpush1.bf16.msra.mxu0 %v2707
    %3388 = vmatprep.subr.bf16.mxu0 %v2716
    %3389 = vmatpush1.bf16.msra.mxu0 %v2715
    %3390 = vmatprep.mubr.bf16.mxu0 %v120
    %3391 = vmatmul.mubr.bf16.gmra.mrb[0].mxu0 %v119
    %v3392 = vpop.f32.mrb[0].mxu0
    %v3393 = vadd.f32 %v3352, %v3392
    %v3394 = vpop.f32.mrb[0].mxu0
    %v3395 = vadd.f32 %v3354, %v3394
    %v3396 = vpop.f32.mrb[0].mxu0
    %v3397 = vpop.f32.mrb[0].mxu0
    %3398 = vdwg.mxu0
    %3399 = vmatprep.subr.bf16.mxu0 %v2214
    %3400 = vmatpush1.bf16.msra.mxu0 %v2213
    %3401 = vmatprep.subr.bf16.mxu0 %v2222
    %3402 = vmatpush1.bf16.msra.mxu0 %v2221
    %3403 = vmatprep.subr.bf16.mxu0 %v2230
    %3404 = vmatpush1.bf16.msra.mxu0 %v2229
    %3405 = vmatprep.subr.bf16.mxu0 %v2238
    %3406 = vmatpush1.bf16.msra.mxu0 %v2237
    %3407 = vmatprep.subr.bf16.mxu0 %v2246
    %3408 = vmatpush1.bf16.msra.mxu0 %v2245
    %3409 = vmatprep.subr.bf16.mxu0 %v2254
    %3410 = vmatpush1.bf16.msra.mxu0 %v2253
    %3411 = vmatprep.subr.bf16.mxu0 %v2262
    %3412 = vmatpush1.bf16.msra.mxu0 %v2261
    %3413 = vmatprep.subr.bf16.mxu0 %v2270
    %3414 = vmatpush1.bf16.msra.mxu0 %v2269
    %3415 = vmatprep.subr.bf16.mxu0 %v2278
    %3416 = vmatpush1.bf16.msra.mxu0 %v2277
    %3417 = vmatprep.subr.bf16.mxu0 %v2286
    %3418 = vmatpush1.bf16.msra.mxu0 %v2285
    %3419 = vmatprep.subr.bf16.mxu0 %v2294
    %3420 = vmatpush1.bf16.msra.mxu0 %v2293
    %3421 = vmatprep.subr.bf16.mxu0 %v2302
    %3422 = vmatpush1.bf16.msra.mxu0 %v2301
    %3423 = vmatprep.subr.bf16.mxu0 %v2310
    %3424 = vmatpush1.bf16.msra.mxu0 %v2309
    %3425 = vmatprep.subr.bf16.mxu0 %v2318
    %3426 = vmatpush1.bf16.msra.mxu0 %v2317
    %3427 = vmatprep.subr.bf16.mxu0 %v2326
    %3428 = vmatpush1.bf16.msra.mxu0 %v2325
    %3429 = vmatprep.subr.bf16.mxu0 %v2334
    %3430 = vmatpush1.bf16.msra.mxu0 %v2333
    %3431 = vmatprep.mubr.bf16.mxu0 %v114
    %3432 = vmatmul.mubr.bf16.gmra.mrb[0].mxu0 %v113
    %v3433 = vpop.f32.mrb[0].mxu0
    %v3434 = vadd.f32 %v646, %v3433
    %v3435 = vpop.f32.mrb[0].mxu0
    %v3436 = vadd.f32 %v650, %v3435
    %v3437 = vpop.f32.mrb[0].mxu0
    %v3438 = vpop.f32.mrb[0].mxu0
    %3439 = vdwg.mxu0
    %3440 = vmatprep.subr.bf16.mxu0 %v2342
    %3441 = vmatpush1.bf16.msra.mxu0 %v2341
    %3442 = vmatprep.subr.bf16.mxu0 %v2350
    %3443 = vmatpush1.bf16.msra.mxu0 %v2349
    %3444 = vmatprep.subr.bf16.mxu0 %v2358
    %3445 = vmatpush1.bf16.msra.mxu0 %v2357
    %3446 = vmatprep.subr.bf16.mxu0 %v2366
    %3447 = vmatpush1.bf16.msra.mxu0 %v2365
    %3448 = vmatprep.subr.bf16.mxu0 %v2374
    %3449 = vmatpush1.bf16.msra.mxu0 %v2373
    %3450 = vmatprep.subr.bf16.mxu0 %v2382
    %3451 = vmatpush1.bf16.msra.mxu0 %v2381
    %3452 = vmatprep.subr.bf16.mxu0 %v2390
    %3453 = vmatpush1.bf16.msra.mxu0 %v2389
    %3454 = vmatprep.subr.bf16.mxu0 %v2398
    %3455 = vmatpush1.bf16.msra.mxu0 %v2397
    %3456 = vmatprep.subr.bf16.mxu0 %v2406
    %3457 = vmatpush1.bf16.msra.mxu0 %v2405
    %3458 = vmatprep.subr.bf16.mxu0 %v2414
    %3459 = vmatpush1.bf16.msra.mxu0 %v2413
    %3460 = vmatprep.subr.bf16.mxu0 %v2422
    %3461 = vmatpush1.bf16.msra.mxu0 %v2421
    %3462 = vmatprep.subr.bf16.mxu0 %v2430
    %3463 = vmatpush1.bf16.msra.mxu0 %v2429
    %3464 = vmatprep.subr.bf16.mxu0 %v2438
    %3465 = vmatpush1.bf16.msra.mxu0 %v2437
    %3466 = vmatprep.subr.bf16.mxu0 %v2446
    %3467 = vmatpush1.bf16.msra.mxu0 %v2445
    %3468 = vmatprep.subr.bf16.mxu0 %v2454
    %3469 = vmatpush1.bf16.msra.mxu0 %v2453
    %3470 = vmatprep.subr.bf16.mxu0 %v2462
    %3471 = vmatpush1.bf16.msra.mxu0 %v2461
    %3472 = vmatprep.mubr.bf16.mxu0 %v116
    %3473 = vmatmul.mubr.bf16.gmra.mrb[0].mxu0 %v115
    %v3474 = vpop.f32.mrb[0].mxu0
    %v3475 = vadd.f32 %v3434, %v3474
    %v3476 = vpop.f32.mrb[0].mxu0
    %v3477 = vadd.f32 %v3436, %v3476
    %v3478 = vpop.f32.mrb[0].mxu0
    %v3479 = vpop.f32.mrb[0].mxu0
    %3480 = vdwg.mxu0
    %3481 = vmatprep.subr.bf16.mxu0 %v2470
    %3482 = vmatpush1.bf16.msra.mxu0 %v2469
    %3483 = vmatprep.subr.bf16.mxu0 %v2478
    %3484 = vmatpush1.bf16.msra.mxu0 %v2477
    %3485 = vmatprep.subr.bf16.mxu0 %v2486
    %3486 = vmatpush1.bf16.msra.mxu0 %v2485
    %3487 = vmatprep.subr.bf16.mxu0 %v2494
    %3488 = vmatpush1.bf16.msra.mxu0 %v2493
    %3489 = vmatprep.subr.bf16.mxu0 %v2502
    %3490 = vmatpush1.bf16.msra.mxu0 %v2501
    %3491 = vmatprep.subr.bf16.mxu0 %v2510
    %3492 = vmatpush1.bf16.msra.mxu0 %v2509
    %3493 = vmatprep.subr.bf16.mxu0 %v2518
    %3494 = vmatpush1.bf16.msra.mxu0 %v2517
    %3495 = vmatprep.subr.bf16.mxu0 %v2526
    %3496 = vmatpush1.bf16.msra.mxu0 %v2525
    %3497 = vmatprep.subr.bf16.mxu0 %v2534
    %3498 = vmatpush1.bf16.msra.mxu0 %v2533
    %3499 = vmatprep.subr.bf16.mxu0 %v2542
    %3500 = vmatpush1.bf16.msra.mxu0 %v2541
    %3501 = vmatprep.subr.bf16.mxu0 %v2550
    %3502 = vmatpush1.bf16.msra.mxu0 %v2549
    %3503 = vmatprep.subr.bf16.mxu0 %v2558
    %3504 = vmatpush1.bf16.msra.mxu0 %v2557
    %3505 = vmatprep.subr.bf16.mxu0 %v2566
    %3506 = vmatpush1.bf16.msra.mxu0 %v2565
    %3507 = vmatprep.subr.bf16.mxu0 %v2574
    %3508 = vmatpush1.bf16.msra.mxu0 %v2573
    %3509 = vmatprep.subr.bf16.mxu0 %v2582
    %3510 = vmatpush1.bf16.msra.mxu0 %v2581
    %3511 = vmatprep.subr.bf16.mxu0 %v2590
    %3512 = vmatpush1.bf16.msra.mxu0 %v2589
    %3513 = vmatprep.mubr.bf16.mxu0 %v118
    %3514 = vmatmul.mubr.bf16.gmra.mrb[0].mxu0 %v117
    %v3515 = vpop.f32.mrb[0].mxu0
    %v3516 = vadd.f32 %v3475, %v3515
    %v3517 = vpop.f32.mrb[0].mxu0
    %v3518 = vadd.f32 %v3477, %v3517
    %v3519 = vpop.f32.mrb[0].mxu0
    %v3520 = vpop.f32.mrb[0].mxu0
    %3521 = vdwg.mxu0
    %3522 = vmatprep.subr.bf16.mxu0 %v2598
    %3523 = vmatpush1.bf16.msra.mxu0 %v2597
    %3524 = vmatprep.subr.bf16.mxu0 %v2606
    %3525 = vmatpush1.bf16.msra.mxu0 %v2605
    %3526 = vmatprep.subr.bf16.mxu0 %v2614
    %3527 = vmatpush1.bf16.msra.mxu0 %v2613
    %3528 = vmatprep.subr.bf16.mxu0 %v2622
    %3529 = vmatpush1.bf16.msra.mxu0 %v2621
    %3530 = vmatprep.subr.bf16.mxu0 %v2630
    %3531 = vmatpush1.bf16.msra.mxu0 %v2629
    %3532 = vmatprep.subr.bf16.mxu0 %v2638
    %3533 = vmatpush1.bf16.msra.mxu0 %v2637
    %3534 = vmatprep.subr.bf16.mxu0 %v2646
    %3535 = vmatpush1.bf16.msra.mxu0 %v2645
    %3536 = vmatprep.subr.bf16.mxu0 %v2654
    %3537 = vmatpush1.bf16.msra.mxu0 %v2653
    %3538 = vmatprep.subr.bf16.mxu0 %v2662
    %3539 = vmatpush1.bf16.msra.mxu0 %v2661
    %3540 = vmatprep.subr.bf16.mxu0 %v2670
    %3541 = vmatpush1.bf16.msra.mxu0 %v2669
    %3542 = vmatprep.subr.bf16.mxu0 %v2678
    %3543 = vmatpush1.bf16.msra.mxu0 %v2677
    %3544 = vmatprep.subr.bf16.mxu0 %v2686
    %3545 = vmatpush1.bf16.msra.mxu0 %v2685
    %3546 = vmatprep.subr.bf16.mxu0 %v2694
    %3547 = vmatpush1.bf16.msra.mxu0 %v2693
    %3548 = vmatprep.subr.bf16.mxu0 %v2702
    %3549 = vmatpush1.bf16.msra.mxu0 %v2701
    %3550 = vmatprep.subr.bf16.mxu0 %v2710
    %3551 = vmatpush1.bf16.msra.mxu0 %v2709
    %3552 = vmatprep.subr.bf16.mxu0 %v2718
    %3553 = vmatpush1.bf16.msra.mxu0 %v2717
    %3554 = vmatprep.mubr.bf16.mxu0 %v120
    %3555 = vmatmul.mubr.bf16.gmra.mrb[0].mxu0 %v119
    %v3556 = vpop.f32.mrb[0].mxu0
    %v3557 = vadd.f32 %v3516, %v3556
    %v3558 = vpop.f32.mrb[0].mxu0
    %v3559 = vadd.f32 %v3518, %v3558
    %v3560 = vpop.f32.mrb[0].mxu0
    %v3561 = vpop.f32.mrb[0].mxu0
    %3562 = vdwg.mxu0
    %3563 = vmatprep.subr.bf16.mxu0 %v2216
    %3564 = vmatpush1.bf16.msra.mxu0 %v2215
    %3565 = vmatprep.subr.bf16.mxu0 %v2224
    %3566 = vmatpush1.bf16.msra.mxu0 %v2223
    %3567 = vmatprep.subr.bf16.mxu0 %v2232
    %3568 = vmatpush1.bf16.msra.mxu0 %v2231
    %3569 = vmatprep.subr.bf16.mxu0 %v2240
    %3570 = vmatpush1.bf16.msra.mxu0 %v2239
    %3571 = vmatprep.subr.bf16.mxu0 %v2248
    %3572 = vmatpush1.bf16.msra.mxu0 %v2247
    %3573 = vmatprep.subr.bf16.mxu0 %v2256
    %3574 = vmatpush1.bf16.msra.mxu0 %v2255
    %3575 = vmatprep.subr.bf16.mxu0 %v2264
    %3576 = vmatpush1.bf16.msra.mxu0 %v2263
    %3577 = vmatprep.subr.bf16.mxu0 %v2272
    %3578 = vmatpush1.bf16.msra.mxu0 %v2271
    %3579 = vmatprep.subr.bf16.mxu0 %v2280
    %3580 = vmatpush1.bf16.msra.mxu0 %v2279
    %3581 = vmatprep.subr.bf16.mxu0 %v2288
    %3582 = vmatpush1.bf16.msra.mxu0 %v2287
    %3583 = vmatprep.subr.bf16.mxu0 %v2296
    %3584 = vmatpush1.bf16.msra.mxu0 %v2295
    %3585 = vmatprep.subr.bf16.mxu0 %v2304
    %3586 = vmatpush1.bf16.msra.mxu0 %v2303
    %3587 = vmatprep.subr.bf16.mxu0 %v2312
    %3588 = vmatpush1.bf16.msra.mxu0 %v2311
    %3589 = vmatprep.subr.bf16.mxu0 %v2320
    %3590 = vmatpush1.bf16.msra.mxu0 %v2319
    %3591 = vmatprep.subr.bf16.mxu0 %v2328
    %3592 = vmatpush1.bf16.msra.mxu0 %v2327
    %3593 = vmatprep.subr.bf16.mxu0 %v2336
    %3594 = vmatpush1.bf16.msra.mxu0 %v2335
    %3595 = vmatprep.mubr.bf16.mxu0 %v114
    %3596 = vmatmul.mubr.bf16.gmra.mrb[0].mxu0 %v113
    %v3597 = vpop.f32.mrb[0].mxu0
    %v3598 = vadd.f32 %v654, %v3597
    %v3599 = vpop.f32.mrb[0].mxu0
    %v3600 = vadd.f32 %v658, %v3599
    %v3601 = vpop.f32.mrb[0].mxu0
    %v3602 = vpop.f32.mrb[0].mxu0
    %3603 = vdwg.mxu0
    %3604 = vmatprep.subr.bf16.mxu0 %v2344
    %3605 = vmatpush1.bf16.msra.mxu0 %v2343
    %3606 = vmatprep.subr.bf16.mxu0 %v2352
    %3607 = vmatpush1.bf16.msra.mxu0 %v2351
    %3608 = vmatprep.subr.bf16.mxu0 %v2360
    %3609 = vmatpush1.bf16.msra.mxu0 %v2359
    %3610 = vmatprep.subr.bf16.mxu0 %v2368
    %3611 = vmatpush1.bf16.msra.mxu0 %v2367
    %3612 = vmatprep.subr.bf16.mxu0 %v2376
    %3613 = vmatpush1.bf16.msra.mxu0 %v2375
    %3614 = vmatprep.subr.bf16.mxu0 %v2384
    %3615 = vmatpush1.bf16.msra.mxu0 %v2383
    %3616 = vmatprep.subr.bf16.mxu0 %v2392
    %3617 = vmatpush1.bf16.msra.mxu0 %v2391
    %3618 = vmatprep.subr.bf16.mxu0 %v2400
    %3619 = vmatpush1.bf16.msra.mxu0 %v2399
    %3620 = vmatprep.subr.bf16.mxu0 %v2408
    %3621 = vmatpush1.bf16.msra.mxu0 %v2407
    %3622 = vmatprep.subr.bf16.mxu0 %v2416
    %3623 = vmatpush1.bf16.msra.mxu0 %v2415
    %3624 = vmatprep.subr.bf16.mxu0 %v2424
    %3625 = vmatpush1.bf16.msra.mxu0 %v2423
    %3626 = vmatprep.subr.bf16.mxu0 %v2432
    %3627 = vmatpush1.bf16.msra.mxu0 %v2431
    %3628 = vmatprep.subr.bf16.mxu0 %v2440
    %3629 = vmatpush1.bf16.msra.mxu0 %v2439
    %3630 = vmatprep.subr.bf16.mxu0 %v2448
    %3631 = vmatpush1.bf16.msra.mxu0 %v2447
    %3632 = vmatprep.subr.bf16.mxu0 %v2456
    %3633 = vmatpush1.bf16.msra.mxu0 %v2455
    %3634 = vmatprep.subr.bf16.mxu0 %v2464
    %3635 = vmatpush1.bf16.msra.mxu0 %v2463
    %3636 = vmatprep.mubr.bf16.mxu0 %v116
    %3637 = vmatmul.mubr.bf16.gmra.mrb[0].mxu0 %v115
    %v3638 = vpop.f32.mrb[0].mxu0
    %v3639 = vadd.f32 %v3598, %v3638
    %v3640 = vpop.f32.mrb[0].mxu0
    %v3641 = vadd.f32 %v3600, %v3640
    %v3642 = vpop.f32.mrb[0].mxu0
    %v3643 = vpop.f32.mrb[0].mxu0
    %3644 = vdwg.mxu0
    %3645 = vmatprep.subr.bf16.mxu0 %v2472
    %3646 = vmatpush1.bf16.msra.mxu0 %v2471
    %3647 = vmatprep.subr.bf16.mxu0 %v2480
    %3648 = vmatpush1.bf16.msra.mxu0 %v2479
    %3649 = vmatprep.subr.bf16.mxu0 %v2488
    %3650 = vmatpush1.bf16.msra.mxu0 %v2487
    %3651 = vmatprep.subr.bf16.mxu0 %v2496
    %3652 = vmatpush1.bf16.msra.mxu0 %v2495
    %3653 = vmatprep.subr.bf16.mxu0 %v2504
    %3654 = vmatpush1.bf16.msra.mxu0 %v2503
    %3655 = vmatprep.subr.bf16.mxu0 %v2512
    %3656 = vmatpush1.bf16.msra.mxu0 %v2511
    %3657 = vmatprep.subr.bf16.mxu0 %v2520
    %3658 = vmatpush1.bf16.msra.mxu0 %v2519
    %3659 = vmatprep.subr.bf16.mxu0 %v2528
    %3660 = vmatpush1.bf16.msra.mxu0 %v2527
    %3661 = vmatprep.subr.bf16.mxu0 %v2536
    %3662 = vmatpush1.bf16.msra.mxu0 %v2535
    %3663 = vmatprep.subr.bf16.mxu0 %v2544
    %3664 = vmatpush1.bf16.msra.mxu0 %v2543
    %3665 = vmatprep.subr.bf16.mxu0 %v2552
    %3666 = vmatpush1.bf16.msra.mxu0 %v2551
    %3667 = vmatprep.subr.bf16.mxu0 %v2560
    %3668 = vmatpush1.bf16.msra.mxu0 %v2559
    %3669 = vmatprep.subr.bf16.mxu0 %v2568
    %3670 = vmatpush1.bf16.msra.mxu0 %v2567
    %3671 = vmatprep.subr.bf16.mxu0 %v2576
    %3672 = vmatpush1.bf16.msra.mxu0 %v2575
    %3673 = vmatprep.subr.bf16.mxu0 %v2584
    %3674 = vmatpush1.bf16.msra.mxu0 %v2583
    %3675 = vmatprep.subr.bf16.mxu0 %v2592
    %3676 = vmatpush1.bf16.msra.mxu0 %v2591
    %3677 = vmatprep.mubr.bf16.mxu0 %v118
    %3678 = vmatmul.mubr.bf16.gmra.mrb[0].mxu0 %v117
    %v3679 = vpop.f32.mrb[0].mxu0
    %v3680 = vadd.f32 %v3639, %v3679
    %v3681 = vpop.f32.mrb[0].mxu0
    %v3682 = vadd.f32 %v3641, %v3681
    %v3683 = vpop.f32.mrb[0].mxu0
    %v3684 = vpop.f32.mrb[0].mxu0
    %3685 = vdwg.mxu0
    %3686 = vmatprep.subr.bf16.mxu0 %v2600
    %3687 = vmatpush1.bf16.msra.mxu0 %v2599
    %3688 = vmatprep.subr.bf16.mxu0 %v2608
    %3689 = vmatpush1.bf16.msra.mxu0 %v2607
    %3690 = vmatprep.subr.bf16.mxu0 %v2616
    %3691 = vmatpush1.bf16.msra.mxu0 %v2615
    %3692 = vmatprep.subr.bf16.mxu0 %v2624
    %3693 = vmatpush1.bf16.msra.mxu0 %v2623
    %3694 = vmatprep.subr.bf16.mxu0 %v2632
    %3695 = vmatpush1.bf16.msra.mxu0 %v2631
    %3696 = vmatprep.subr.bf16.mxu0 %v2640
    %3697 = vmatpush1.bf16.msra.mxu0 %v2639
    %3698 = vmatprep.subr.bf16.mxu0 %v2648
    %3699 = vmatpush1.bf16.msra.mxu0 %v2647
    %3700 = vmatprep.subr.bf16.mxu0 %v2656
    %3701 = vmatpush1.bf16.msra.mxu0 %v2655
    %3702 = vmatprep.subr.bf16.mxu0 %v2664
    %3703 = vmatpush1.bf16.msra.mxu0 %v2663
    %3704 = vmatprep.subr.bf16.mxu0 %v2672
    %3705 = vmatpush1.bf16.msra.mxu0 %v2671
    %3706 = vmatprep.subr.bf16.mxu0 %v2680
    %3707 = vmatpush1.bf16.msra.mxu0 %v2679
    %3708 = vmatprep.subr.bf16.mxu0 %v2688
    %3709 = vmatpush1.bf16.msra.mxu0 %v2687
    %3710 = vmatprep.subr.bf16.mxu0 %v2696
    %3711 = vmatpush1.bf16.msra.mxu0 %v2695
    %3712 = vmatprep.subr.bf16.mxu0 %v2704
    %3713 = vmatpush1.bf16.msra.mxu0 %v2703
    %3714 = vmatprep.subr.bf16.mxu0 %v2712
    %3715 = vmatpush1.bf16.msra.mxu0 %v2711
    %3716 = vmatprep.subr.bf16.mxu0 %v2720
    %3717 = vmatpush1.bf16.msra.mxu0 %v2719
    %3718 = vmatprep.mubr.bf16.mxu0 %v120
    %3719 = vmatmul.mubr.bf16.gmra.mrb[0].mxu0 %v119
    %v3720 = vpop.f32.mrb[0].mxu0
    %v3721 = vadd.f32 %v3680, %v3720
    %v3722 = vpop.f32.mrb[0].mxu0
    %v3723 = vadd.f32 %v3682, %v3722
    %v3724 = vpop.f32.mrb[0].mxu0
    %v3725 = vpop.f32.mrb[0].mxu0
    %3726 = vdwg.mxu0
    %3727 = vmatprep.subr.bf16.mxu0 %v2218
    %3728 = vmatpush1.bf16.msra.mxu0 %v2217
    %3729 = vmatprep.subr.bf16.mxu0 %v2226
    %3730 = vmatpush1.bf16.msra.mxu0 %v2225
    %3731 = vmatprep.subr.bf16.mxu0 %v2234
    %3732 = vmatpush1.bf16.msra.mxu0 %v2233
    %3733 = vmatprep.subr.bf16.mxu0 %v2242
    %3734 = vmatpush1.bf16.msra.mxu0 %v2241
    %3735 = vmatprep.subr.bf16.mxu0 %v2250
    %3736 = vmatpush1.bf16.msra.mxu0 %v2249
    %3737 = vmatprep.subr.bf16.mxu0 %v2258
    %3738 = vmatpush1.bf16.msra.mxu0 %v2257
    %3739 = vmatprep.subr.bf16.mxu0 %v2266
    %3740 = vmatpush1.bf16.msra.mxu0 %v2265
    %3741 = vmatprep.subr.bf16.mxu0 %v2274
    %3742 = vmatpush1.bf16.msra.mxu0 %v2273
    %3743 = vmatprep.subr.bf16.mxu0 %v2282
    %3744 = vmatpush1.bf16.msra.mxu0 %v2281
    %3745 = vmatprep.subr.bf16.mxu0 %v2290
    %3746 = vmatpush1.bf16.msra.mxu0 %v2289
    %3747 = vmatprep.subr.bf16.mxu0 %v2298
    %3748 = vmatpush1.bf16.msra.mxu0 %v2297
    %3749 = vmatprep.subr.bf16.mxu0 %v2306
    %3750 = vmatpush1.bf16.msra.mxu0 %v2305
    %3751 = vmatprep.subr.bf16.mxu0 %v2314
    %3752 = vmatpush1.bf16.msra.mxu0 %v2313
    %3753 = vmatprep.subr.bf16.mxu0 %v2322
    %3754 = vmatpush1.bf16.msra.mxu0 %v2321
    %3755 = vmatprep.subr.bf16.mxu0 %v2330
    %3756 = vmatpush1.bf16.msra.mxu0 %v2329
    %3757 = vmatprep.subr.bf16.mxu0 %v2338
    %3758 = vmatpush1.bf16.msra.mxu0 %v2337
    %3759 = vmatprep.mubr.bf16.mxu0 %v114
    %3760 = vmatmul.mubr.bf16.gmra.mrb[0].mxu0 %v113
    %v3761 = vpop.f32.mrb[0].mxu0
    %v3762 = vadd.f32 %v662, %v3761
    %v3763 = vpop.f32.mrb[0].mxu0
    %v3764 = vadd.f32 %v666, %v3763
    %v3765 = vpop.f32.mrb[0].mxu0
    %v3766 = vpop.f32.mrb[0].mxu0
    %3767 = vdwg.mxu0
    %3768 = vmatprep.subr.bf16.mxu0 %v2346
    %3769 = vmatpush1.bf16.msra.mxu0 %v2345
    %3770 = vmatprep.subr.bf16.mxu0 %v2354
    %3771 = vmatpush1.bf16.msra.mxu0 %v2353
    %3772 = vmatprep.subr.bf16.mxu0 %v2362
    %3773 = vmatpush1.bf16.msra.mxu0 %v2361
    %3774 = vmatprep.subr.bf16.mxu0 %v2370
    %3775 = vmatpush1.bf16.msra.mxu0 %v2369
    %3776 = vmatprep.subr.bf16.mxu0 %v2378
    %3777 = vmatpush1.bf16.msra.mxu0 %v2377
    %3778 = vmatprep.subr.bf16.mxu0 %v2386
    %3779 = vmatpush1.bf16.msra.mxu0 %v2385
    %3780 = vmatprep.subr.bf16.mxu0 %v2394
    %3781 = vmatpush1.bf16.msra.mxu0 %v2393
    %3782 = vmatprep.subr.bf16.mxu0 %v2402
    %3783 = vmatpush1.bf16.msra.mxu0 %v2401
    %3784 = vmatprep.subr.bf16.mxu0 %v2410
    %3785 = vmatpush1.bf16.msra.mxu0 %v2409
    %3786 = vmatprep.subr.bf16.mxu0 %v2418
    %3787 = vmatpush1.bf16.msra.mxu0 %v2417
    %3788 = vmatprep.subr.bf16.mxu0 %v2426
    %3789 = vmatpush1.bf16.msra.mxu0 %v2425
    %3790 = vmatprep.subr.bf16.mxu0 %v2434
    %3791 = vmatpush1.bf16.msra.mxu0 %v2433
    %3792 = vmatprep.subr.bf16.mxu0 %v2442
    %3793 = vmatpush1.bf16.msra.mxu0 %v2441
    %3794 = vmatprep.subr.bf16.mxu0 %v2450
    %3795 = vmatpush1.bf16.msra.mxu0 %v2449
    %3796 = vmatprep.subr.bf16.mxu0 %v2458
    %3797 = vmatpush1.bf16.msra.mxu0 %v2457
    %3798 = vmatprep.subr.bf16.mxu0 %v2466
    %3799 = vmatpush1.bf16.msra.mxu0 %v2465
    %3800 = vmatprep.mubr.bf16.mxu0 %v116
    %3801 = vmatmul.mubr.bf16.gmra.mrb[0].mxu0 %v115
    %v3802 = vpop.f32.mrb[0].mxu0
    %v3803 = vadd.f32 %v3762, %v3802
    %v3804 = vpop.f32.mrb[0].mxu0
    %v3805 = vadd.f32 %v3764, %v3804
    %v3806 = vpop.f32.mrb[0].mxu0
    %v3807 = vpop.f32.mrb[0].mxu0
    %3808 = vdwg.mxu0
    %3809 = vmatprep.subr.bf16.mxu0 %v2474
    %3810 = vmatpush1.bf16.msra.mxu0 %v2473
    %3811 = vmatprep.subr.bf16.mxu0 %v2482
    %3812 = vmatpush1.bf16.msra.mxu0 %v2481
    %3813 = vmatprep.subr.bf16.mxu0 %v2490
    %3814 = vmatpush1.bf16.msra.mxu0 %v2489
    %3815 = vmatprep.subr.bf16.mxu0 %v2498
    %3816 = vmatpush1.bf16.msra.mxu0 %v2497
    %3817 = vmatprep.subr.bf16.mxu0 %v2506
    %3818 = vmatpush1.bf16.msra.mxu0 %v2505
    %3819 = vmatprep.subr.bf16.mxu0 %v2514
    %3820 = vmatpush1.bf16.msra.mxu0 %v2513
    %3821 = vmatprep.subr.bf16.mxu0 %v2522
    %3822 = vmatpush1.bf16.msra.mxu0 %v2521
    %3823 = vmatprep.subr.bf16.mxu0 %v2530
    %3824 = vmatpush1.bf16.msra.mxu0 %v2529
    %3825 = vmatprep.subr.bf16.mxu0 %v2538
    %3826 = vmatpush1.bf16.msra.mxu0 %v2537
    %3827 = vmatprep.subr.bf16.mxu0 %v2546
    %3828 = vmatpush1.bf16.msra.mxu0 %v2545
    %3829 = vmatprep.subr.bf16.mxu0 %v2554
    %3830 = vmatpush1.bf16.msra.mxu0 %v2553
    %3831 = vmatprep.subr.bf16.mxu0 %v2562
    %3832 = vmatpush1.bf16.msra.mxu0 %v2561
    %3833 = vmatprep.subr.bf16.mxu0 %v2570
    %3834 = vmatpush1.bf16.msra.mxu0 %v2569
    %3835 = vmatprep.subr.bf16.mxu0 %v2578
    %3836 = vmatpush1.bf16.msra.mxu0 %v2577
    %3837 = vmatprep.subr.bf16.mxu0 %v2586
    %3838 = vmatpush1.bf16.msra.mxu0 %v2585
    %3839 = vmatprep.subr.bf16.mxu0 %v2594
    %3840 = vmatpush1.bf16.msra.mxu0 %v2593
    %3841 = vmatprep.mubr.bf16.mxu0 %v118
    %3842 = vmatmul.mubr.bf16.gmra.mrb[0].mxu0 %v117
    %v3843 = vpop.f32.mrb[0].mxu0
    %v3844 = vadd.f32 %v3803, %v3843
    %v3845 = vpop.f32.mrb[0].mxu0
    %v3846 = vadd.f32 %v3805, %v3845
    %v3847 = vpop.f32.mrb[0].mxu0
    %v3848 = vpop.f32.mrb[0].mxu0
    %3849 = vdwg.mxu0
    %3850 = vmatprep.subr.bf16.mxu0 %v2602
    %3851 = vmatpush1.bf16.msra.mxu0 %v2601
    %3852 = vmatprep.subr.bf16.mxu0 %v2610
    %3853 = vmatpush1.bf16.msra.mxu0 %v2609
    %3854 = vmatprep.subr.bf16.mxu0 %v2618
    %3855 = vmatpush1.bf16.msra.mxu0 %v2617
    %3856 = vmatprep.subr.bf16.mxu0 %v2626
    %3857 = vmatpush1.bf16.msra.mxu0 %v2625
    %3858 = vmatprep.subr.bf16.mxu0 %v2634
    %3859 = vmatpush1.bf16.msra.mxu0 %v2633
    %3860 = vmatprep.subr.bf16.mxu0 %v2642
    %3861 = vmatpush1.bf16.msra.mxu0 %v2641
    %3862 = vmatprep.subr.bf16.mxu0 %v2650
    %3863 = vmatpush1.bf16.msra.mxu0 %v2649
    %3864 = vmatprep.subr.bf16.mxu0 %v2658
    %3865 = vmatpush1.bf16.msra.mxu0 %v2657
    %3866 = vmatprep.subr.bf16.mxu0 %v2666
    %3867 = vmatpush1.bf16.msra.mxu0 %v2665
    %3868 = vmatprep.subr.bf16.mxu0 %v2674
    %3869 = vmatpush1.bf16.msra.mxu0 %v2673
    %3870 = vmatprep.subr.bf16.mxu0 %v2682
    %3871 = vmatpush1.bf16.msra.mxu0 %v2681
    %3872 = vmatprep.subr.bf16.mxu0 %v2690
    %3873 = vmatpush1.bf16.msra.mxu0 %v2689
    %3874 = vmatprep.subr.bf16.mxu0 %v2698
    %3875 = vmatpush1.bf16.msra.mxu0 %v2697
    %3876 = vmatprep.subr.bf16.mxu0 %v2706
    %3877 = vmatpush1.bf16.msra.mxu0 %v2705
    %3878 = vmatprep.subr.bf16.mxu0 %v2714
    %3879 = vmatpush1.bf16.msra.mxu0 %v2713
    %3880 = vmatprep.subr.bf16.mxu0 %v2722
    %3881 = vmatpush1.bf16.msra.mxu0 %v2721
    %3882 = vmatprep.mubr.bf16.mxu0 %v120
    %3883 = vmatmul.mubr.bf16.gmra.mrb[0].mxu0 %v119
    %v3884 = vpop.f32.mrb[0].mxu0
    %v3885 = vadd.f32 %v3844, %v3884
    %v3886 = vpop.f32.mrb[0].mxu0
    %v3887 = vadd.f32 %v3846, %v3886
    %v3888 = vpop.f32.mrb[0].mxu0
    %v3889 = vpop.f32.mrb[0].mxu0
    %3890 = vdwg.mxu0
    %v3891 = vpack.c.bf16 %v3393, %v3393
    %v3892 = vpack.c.bf16 %v3395, %v3395
    %v3893 = vpack.c.bf16 %v3557, %v3557
    %v3894 = vpack.c.bf16 %v3559, %v3559
    %v3895 = vpack.c.bf16 %v3721, %v3721
    %v3896 = vpack.c.bf16 %v3723, %v3723
    %v3897 = vpack.c.bf16 %v3885, %v3885
    %v3898 = vpack.c.bf16 %v3887, %v3887
    %v3899 = vld [vmem:[#allocation7] sm:$0xff]
    %v3900 = vld [vmem:[#allocation7 + $0x8] sm:$0xff]
    %v3901 = vld [vmem:[#allocation7 + $0x10] sm:$0xff]
    %v3902 = vld [vmem:[#allocation7 + $0x18] sm:$0xff]
    %v3903 = vld [vmem:[#allocation7 + $0x20] sm:$0xff]
    %v3904 = vld [vmem:[#allocation7 + $0x28] sm:$0xff]
    %v3905 = vld [vmem:[#allocation7 + $0x30] sm:$0xff]
    %v3906 = vld [vmem:[#allocation7 + $0x38] sm:$0xff]
    %v3907 = vld [vmem:[#allocation7 + $0x40] sm:$0xff]
    %v3908 = vld [vmem:[#allocation7 + $0x48] sm:$0xff]
    %v3909 = vld [vmem:[#allocation7 + $0x50] sm:$0xff]
    %v3910 = vld [vmem:[#allocation7 + $0x58] sm:$0xff]
    %v3911 = vld [vmem:[#allocation7 + $0x60] sm:$0xff]
    %v3912 = vld [vmem:[#allocation7 + $0x68] sm:$0xff]
    %v3913 = vld [vmem:[#allocation7 + $0x70] sm:$0xff]
    %v3914 = vld [vmem:[#allocation7 + $0x78] sm:$0xff]
    %v3915 = vld [vmem:[#allocation7 + $0x80] sm:$0xff]
    %v3916 = vld [vmem:[#allocation7 + $0x88] sm:$0xff]
    %v3917 = vld [vmem:[#allocation7 + $0x90] sm:$0xff]
    %v3918 = vld [vmem:[#allocation7 + $0x98] sm:$0xff]
    %v3919 = vld [vmem:[#allocation7 + $0xa0] sm:$0xff]
    %v3920 = vld [vmem:[#allocation7 + $0xa8] sm:$0xff]
    %v3921 = vld [vmem:[#allocation7 + $0xb0] sm:$0xff]
    %v3922 = vld [vmem:[#allocation7 + $0xb8] sm:$0xff]
    %v3923 = vld [vmem:[#allocation7 + $0xc0] sm:$0xff]
    %v3924 = vld [vmem:[#allocation7 + $0xc8] sm:$0xff]
    %v3925 = vld [vmem:[#allocation7 + $0xd0] sm:$0xff]
    %v3926 = vld [vmem:[#allocation7 + $0xd8] sm:$0xff]
    %v3927 = vld [vmem:[#allocation7 + $0xe0] sm:$0xff]
    %v3928 = vld [vmem:[#allocation7 + $0xe8] sm:$0xff]
    %v3929 = vld [vmem:[#allocation7 + $0xf0] sm:$0xff]
    %v3930 = vld [vmem:[#allocation7 + $0xf8] sm:$0xff]
    %v3931 = vld [vmem:[#allocation7 + $0x100] sm:$0xff]
    %v3932 = vld [vmem:[#allocation7 + $0x108] sm:$0xff]
    %v3933 = vld [vmem:[#allocation7 + $0x110] sm:$0xff]
    %v3934 = vld [vmem:[#allocation7 + $0x118] sm:$0xff]
    %v3935 = vld [vmem:[#allocation7 + $0x120] sm:$0xff]
    %v3936 = vld [vmem:[#allocation7 + $0x128] sm:$0xff]
    %v3937 = vld [vmem:[#allocation7 + $0x130] sm:$0xff]
    %v3938 = vld [vmem:[#allocation7 + $0x138] sm:$0xff]
    %v3939 = vld [vmem:[#allocation7 + $0x140] sm:$0xff]
    %v3940 = vld [vmem:[#allocation7 + $0x148] sm:$0xff]
    %v3941 = vld [vmem:[#allocation7 + $0x150] sm:$0xff]
    %v3942 = vld [vmem:[#allocation7 + $0x158] sm:$0xff]
    %v3943 = vld [vmem:[#allocation7 + $0x160] sm:$0xff]
    %v3944 = vld [vmem:[#allocation7 + $0x168] sm:$0xff]
    %v3945 = vld [vmem:[#allocation7 + $0x170] sm:$0xff]
    %v3946 = vld [vmem:[#allocation7 + $0x178] sm:$0xff]
    %v3947 = vld [vmem:[#allocation7 + $0x180] sm:$0xff]
    %v3948 = vld [vmem:[#allocation7 + $0x188] sm:$0xff]
    %v3949 = vld [vmem:[#allocation7 + $0x190] sm:$0xff]
    %v3950 = vld [vmem:[#allocation7 + $0x198] sm:$0xff]
    %v3951 = vld [vmem:[#allocation7 + $0x1a0] sm:$0xff]
    %v3952 = vld [vmem:[#allocation7 + $0x1a8] sm:$0xff]
    %v3953 = vld [vmem:[#allocation7 + $0x1b0] sm:$0xff]
    %v3954 = vld [vmem:[#allocation7 + $0x1b8] sm:$0xff]
    %v3955 = vld [vmem:[#allocation7 + $0x1c0] sm:$0xff]
    %v3956 = vld [vmem:[#allocation7 + $0x1c8] sm:$0xff]
    %v3957 = vld [vmem:[#allocation7 + $0x1d0] sm:$0xff]
    %v3958 = vld [vmem:[#allocation7 + $0x1d8] sm:$0xff]
    %v3959 = vld [vmem:[#allocation7 + $0x1e0] sm:$0xff]
    %v3960 = vld [vmem:[#allocation7 + $0x1e8] sm:$0xff]
    %v3961 = vld [vmem:[#allocation7 + $0x1f0] sm:$0xff]
    %v3962 = vld [vmem:[#allocation7 + $0x1f8] sm:$0xff]
    %v3963 = vld [vmem:[#allocation7 + $0x200] sm:$0xff]
    %v3964 = vld [vmem:[#allocation7 + $0x208] sm:$0xff]
    %v3965 = vld [vmem:[#allocation7 + $0x210] sm:$0xff]
    %v3966 = vld [vmem:[#allocation7 + $0x218] sm:$0xff]
    %v3967 = vld [vmem:[#allocation7 + $0x220] sm:$0xff]
    %v3968 = vld [vmem:[#allocation7 + $0x228] sm:$0xff]
    %v3969 = vld [vmem:[#allocation7 + $0x230] sm:$0xff]
    %v3970 = vld [vmem:[#allocation7 + $0x238] sm:$0xff]
    %v3971 = vld [vmem:[#allocation7 + $0x240] sm:$0xff]
    %v3972 = vld [vmem:[#allocation7 + $0x248] sm:$0xff]
    %v3973 = vld [vmem:[#allocation7 + $0x250] sm:$0xff]
    %v3974 = vld [vmem:[#allocation7 + $0x258] sm:$0xff]
    %v3975 = vld [vmem:[#allocation7 + $0x260] sm:$0xff]
    %v3976 = vld [vmem:[#allocation7 + $0x268] sm:$0xff]
    %v3977 = vld [vmem:[#allocation7 + $0x270] sm:$0xff]
    %v3978 = vld [vmem:[#allocation7 + $0x278] sm:$0xff]
    %v3979 = vld [vmem:[#allocation7 + $0x280] sm:$0xff]
    %v3980 = vld [vmem:[#allocation7 + $0x288] sm:$0xff]
    %v3981 = vld [vmem:[#allocation7 + $0x290] sm:$0xff]
    %v3982 = vld [vmem:[#allocation7 + $0x298] sm:$0xff]
    %v3983 = vld [vmem:[#allocation7 + $0x2a0] sm:$0xff]
    %v3984 = vld [vmem:[#allocation7 + $0x2a8] sm:$0xff]
    %v3985 = vld [vmem:[#allocation7 + $0x2b0] sm:$0xff]
    %v3986 = vld [vmem:[#allocation7 + $0x2b8] sm:$0xff]
    %v3987 = vld [vmem:[#allocation7 + $0x2c0] sm:$0xff]
    %v3988 = vld [vmem:[#allocation7 + $0x2c8] sm:$0xff]
    %v3989 = vld [vmem:[#allocation7 + $0x2d0] sm:$0xff]
    %v3990 = vld [vmem:[#allocation7 + $0x2d8] sm:$0xff]
    %v3991 = vld [vmem:[#allocation7 + $0x2e0] sm:$0xff]
    %v3992 = vld [vmem:[#allocation7 + $0x2e8] sm:$0xff]
    %v3993 = vld [vmem:[#allocation7 + $0x2f0] sm:$0xff]
    %v3994 = vld [vmem:[#allocation7 + $0x2f8] sm:$0xff]
    %v3995 = vld [vmem:[#allocation7 + $0x300] sm:$0xff]
    %v3996 = vld [vmem:[#allocation7 + $0x308] sm:$0xff]
    %v3997 = vld [vmem:[#allocation7 + $0x310] sm:$0xff]
    %v3998 = vld [vmem:[#allocation7 + $0x318] sm:$0xff]
    %v3999 = vld [vmem:[#allocation7 + $0x320] sm:$0xff]
    %v4000 = vld [vmem:[#allocation7 + $0x328] sm:$0xff]
    %v4001 = vld [vmem:[#allocation7 + $0x330] sm:$0xff]
    %v4002 = vld [vmem:[#allocation7 + $0x338] sm:$0xff]
    %v4003 = vld [vmem:[#allocation7 + $0x340] sm:$0xff]
    %v4004 = vld [vmem:[#allocation7 + $0x348] sm:$0xff]
    %v4005 = vld [vmem:[#allocation7 + $0x350] sm:$0xff]
    %v4006 = vld [vmem:[#allocation7 + $0x358] sm:$0xff]
    %v4007 = vld [vmem:[#allocation7 + $0x360] sm:$0xff]
    %v4008 = vld [vmem:[#allocation7 + $0x368] sm:$0xff]
    %v4009 = vld [vmem:[#allocation7 + $0x370] sm:$0xff]
    %v4010 = vld [vmem:[#allocation7 + $0x378] sm:$0xff]
    %v4011 = vld [vmem:[#allocation7 + $0x380] sm:$0xff]
    %v4012 = vld [vmem:[#allocation7 + $0x388] sm:$0xff]
    %v4013 = vld [vmem:[#allocation7 + $0x390] sm:$0xff]
    %v4014 = vld [vmem:[#allocation7 + $0x398] sm:$0xff]
    %v4015 = vld [vmem:[#allocation7 + $0x3a0] sm:$0xff]
    %v4016 = vld [vmem:[#allocation7 + $0x3a8] sm:$0xff]
    %v4017 = vld [vmem:[#allocation7 + $0x3b0] sm:$0xff]
    %v4018 = vld [vmem:[#allocation7 + $0x3b8] sm:$0xff]
    %v4019 = vld [vmem:[#allocation7 + $0x3c0] sm:$0xff]
    %v4020 = vld [vmem:[#allocation7 + $0x3c8] sm:$0xff]
    %v4021 = vld [vmem:[#allocation7 + $0x3d0] sm:$0xff]
    %v4022 = vld [vmem:[#allocation7 + $0x3d8] sm:$0xff]
    %v4023 = vld [vmem:[#allocation7 + $0x3e0] sm:$0xff]
    %v4024 = vld [vmem:[#allocation7 + $0x3e8] sm:$0xff]
    %v4025 = vld [vmem:[#allocation7 + $0x3f0] sm:$0xff]
    %v4026 = vld [vmem:[#allocation7 + $0x3f8] sm:$0xff]
    %v4027 = vld [vmem:[#allocation7 + $0x400] sm:$0xff]
    %v4028 = vld [vmem:[#allocation7 + $0x408] sm:$0xff]
    %v4029 = vld [vmem:[#allocation7 + $0x410] sm:$0xff]
    %v4030 = vld [vmem:[#allocation7 + $0x418] sm:$0xff]
    %v4031 = vld [vmem:[#allocation7 + $0x420] sm:$0xff]
    %v4032 = vld [vmem:[#allocation7 + $0x428] sm:$0xff]
    %v4033 = vld [vmem:[#allocation7 + $0x430] sm:$0xff]
    %v4034 = vld [vmem:[#allocation7 + $0x438] sm:$0xff]
    %v4035 = vld [vmem:[#allocation7 + $0x440] sm:$0xff]
    %v4036 = vld [vmem:[#allocation7 + $0x448] sm:$0xff]
    %v4037 = vld [vmem:[#allocation7 + $0x450] sm:$0xff]
    %v4038 = vld [vmem:[#allocation7 + $0x458] sm:$0xff]
    %v4039 = vld [vmem:[#allocation7 + $0x460] sm:$0xff]
    %v4040 = vld [vmem:[#allocation7 + $0x468] sm:$0xff]
    %v4041 = vld [vmem:[#allocation7 + $0x470] sm:$0xff]
    %v4042 = vld [vmem:[#allocation7 + $0x478] sm:$0xff]
    %v4043 = vld [vmem:[#allocation7 + $0x480] sm:$0xff]
    %v4044 = vld [vmem:[#allocation7 + $0x488] sm:$0xff]
    %v4045 = vld [vmem:[#allocation7 + $0x490] sm:$0xff]
    %v4046 = vld [vmem:[#allocation7 + $0x498] sm:$0xff]
    %v4047 = vld [vmem:[#allocation7 + $0x4a0] sm:$0xff]
    %v4048 = vld [vmem:[#allocation7 + $0x4a8] sm:$0xff]
    %v4049 = vld [vmem:[#allocation7 + $0x4b0] sm:$0xff]
    %v4050 = vld [vmem:[#allocation7 + $0x4b8] sm:$0xff]
    %v4051 = vld [vmem:[#allocation7 + $0x4c0] sm:$0xff]
    %v4052 = vld [vmem:[#allocation7 + $0x4c8] sm:$0xff]
    %v4053 = vld [vmem:[#allocation7 + $0x4d0] sm:$0xff]
    %v4054 = vld [vmem:[#allocation7 + $0x4d8] sm:$0xff]
    %v4055 = vld [vmem:[#allocation7 + $0x4e0] sm:$0xff]
    %v4056 = vld [vmem:[#allocation7 + $0x4e8] sm:$0xff]
    %v4057 = vld [vmem:[#allocation7 + $0x4f0] sm:$0xff]
    %v4058 = vld [vmem:[#allocation7 + $0x4f8] sm:$0xff]
    %v4059 = vld [vmem:[#allocation7 + $0x500] sm:$0xff]
    %v4060 = vld [vmem:[#allocation7 + $0x508] sm:$0xff]
    %v4061 = vld [vmem:[#allocation7 + $0x510] sm:$0xff]
    %v4062 = vld [vmem:[#allocation7 + $0x518] sm:$0xff]
    %v4063 = vld [vmem:[#allocation7 + $0x520] sm:$0xff]
    %v4064 = vld [vmem:[#allocation7 + $0x528] sm:$0xff]
    %v4065 = vld [vmem:[#allocation7 + $0x530] sm:$0xff]
    %v4066 = vld [vmem:[#allocation7 + $0x538] sm:$0xff]
    %v4067 = vld [vmem:[#allocation7 + $0x540] sm:$0xff]
    %v4068 = vld [vmem:[#allocation7 + $0x548] sm:$0xff]
    %v4069 = vld [vmem:[#allocation7 + $0x550] sm:$0xff]
    %v4070 = vld [vmem:[#allocation7 + $0x558] sm:$0xff]
    %v4071 = vld [vmem:[#allocation7 + $0x560] sm:$0xff]
    %v4072 = vld [vmem:[#allocation7 + $0x568] sm:$0xff]
    %v4073 = vld [vmem:[#allocation7 + $0x570] sm:$0xff]
    %v4074 = vld [vmem:[#allocation7 + $0x578] sm:$0xff]
    %v4075 = vld [vmem:[#allocation7 + $0x580] sm:$0xff]
    %v4076 = vld [vmem:[#allocation7 + $0x588] sm:$0xff]
    %v4077 = vld [vmem:[#allocation7 + $0x590] sm:$0xff]
    %v4078 = vld [vmem:[#allocation7 + $0x598] sm:$0xff]
    %v4079 = vld [vmem:[#allocation7 + $0x5a0] sm:$0xff]
    %v4080 = vld [vmem:[#allocation7 + $0x5a8] sm:$0xff]
    %v4081 = vld [vmem:[#allocation7 + $0x5b0] sm:$0xff]
    %v4082 = vld [vmem:[#allocation7 + $0x5b8] sm:$0xff]
    %v4083 = vld [vmem:[#allocation7 + $0x5c0] sm:$0xff]
    %v4084 = vld [vmem:[#allocation7 + $0x5c8] sm:$0xff]
    %v4085 = vld [vmem:[#allocation7 + $0x5d0] sm:$0xff]
    %v4086 = vld [vmem:[#allocation7 + $0x5d8] sm:$0xff]
    %v4087 = vld [vmem:[#allocation7 + $0x5e0] sm:$0xff]
    %v4088 = vld [vmem:[#allocation7 + $0x5e8] sm:$0xff]
    %v4089 = vld [vmem:[#allocation7 + $0x5f0] sm:$0xff]
    %v4090 = vld [vmem:[#allocation7 + $0x5f8] sm:$0xff]
    %v4091 = vld [vmem:[#allocation7 + $0x600] sm:$0xff]
    %v4092 = vld [vmem:[#allocation7 + $0x608] sm:$0xff]
    %v4093 = vld [vmem:[#allocation7 + $0x610] sm:$0xff]
    %v4094 = vld [vmem:[#allocation7 + $0x618] sm:$0xff]
    %v4095 = vld [vmem:[#allocation7 + $0x620] sm:$0xff]
    %v4096 = vld [vmem:[#allocation7 + $0x628] sm:$0xff]
    %v4097 = vld [vmem:[#allocation7 + $0x630] sm:$0xff]
    %v4098 = vld [vmem:[#allocation7 + $0x638] sm:$0xff]
    %v4099 = vld [vmem:[#allocation7 + $0x640] sm:$0xff]
    %v4100 = vld [vmem:[#allocation7 + $0x648] sm:$0xff]
    %v4101 = vld [vmem:[#allocation7 + $0x650] sm:$0xff]
    %v4102 = vld [vmem:[#allocation7 + $0x658] sm:$0xff]
    %v4103 = vld [vmem:[#allocation7 + $0x660] sm:$0xff]
    %v4104 = vld [vmem:[#allocation7 + $0x668] sm:$0xff]
    %v4105 = vld [vmem:[#allocation7 + $0x670] sm:$0xff]
    %v4106 = vld [vmem:[#allocation7 + $0x678] sm:$0xff]
    %v4107 = vld [vmem:[#allocation7 + $0x680] sm:$0xff]
    %v4108 = vld [vmem:[#allocation7 + $0x688] sm:$0xff]
    %v4109 = vld [vmem:[#allocation7 + $0x690] sm:$0xff]
    %v4110 = vld [vmem:[#allocation7 + $0x698] sm:$0xff]
    %v4111 = vld [vmem:[#allocation7 + $0x6a0] sm:$0xff]
    %v4112 = vld [vmem:[#allocation7 + $0x6a8] sm:$0xff]
    %v4113 = vld [vmem:[#allocation7 + $0x6b0] sm:$0xff]
    %v4114 = vld [vmem:[#allocation7 + $0x6b8] sm:$0xff]
    %v4115 = vld [vmem:[#allocation7 + $0x6c0] sm:$0xff]
    %v4116 = vld [vmem:[#allocation7 + $0x6c8] sm:$0xff]
    %v4117 = vld [vmem:[#allocation7 + $0x6d0] sm:$0xff]
    %v4118 = vld [vmem:[#allocation7 + $0x6d8] sm:$0xff]
    %v4119 = vld [vmem:[#allocation7 + $0x6e0] sm:$0xff]
    %v4120 = vld [vmem:[#allocation7 + $0x6e8] sm:$0xff]
    %v4121 = vld [vmem:[#allocation7 + $0x6f0] sm:$0xff]
    %v4122 = vld [vmem:[#allocation7 + $0x6f8] sm:$0xff]
    %v4123 = vld [vmem:[#allocation7 + $0x700] sm:$0xff]
    %v4124 = vld [vmem:[#allocation7 + $0x708] sm:$0xff]
    %v4125 = vld [vmem:[#allocation7 + $0x710] sm:$0xff]
    %v4126 = vld [vmem:[#allocation7 + $0x718] sm:$0xff]
    %v4127 = vld [vmem:[#allocation7 + $0x720] sm:$0xff]
    %v4128 = vld [vmem:[#allocation7 + $0x728] sm:$0xff]
    %v4129 = vld [vmem:[#allocation7 + $0x730] sm:$0xff]
    %v4130 = vld [vmem:[#allocation7 + $0x738] sm:$0xff]
    %v4131 = vld [vmem:[#allocation7 + $0x740] sm:$0xff]
    %v4132 = vld [vmem:[#allocation7 + $0x748] sm:$0xff]
    %v4133 = vld [vmem:[#allocation7 + $0x750] sm:$0xff]
    %v4134 = vld [vmem:[#allocation7 + $0x758] sm:$0xff]
    %v4135 = vld [vmem:[#allocation7 + $0x760] sm:$0xff]
    %v4136 = vld [vmem:[#allocation7 + $0x768] sm:$0xff]
    %v4137 = vld [vmem:[#allocation7 + $0x770] sm:$0xff]
    %v4138 = vld [vmem:[#allocation7 + $0x778] sm:$0xff]
    %v4139 = vld [vmem:[#allocation7 + $0x780] sm:$0xff]
    %v4140 = vld [vmem:[#allocation7 + $0x788] sm:$0xff]
    %v4141 = vld [vmem:[#allocation7 + $0x790] sm:$0xff]
    %v4142 = vld [vmem:[#allocation7 + $0x798] sm:$0xff]
    %v4143 = vld [vmem:[#allocation7 + $0x7a0] sm:$0xff]
    %v4144 = vld [vmem:[#allocation7 + $0x7a8] sm:$0xff]
    %v4145 = vld [vmem:[#allocation7 + $0x7b0] sm:$0xff]
    %v4146 = vld [vmem:[#allocation7 + $0x7b8] sm:$0xff]
    %v4147 = vld [vmem:[#allocation7 + $0x7c0] sm:$0xff]
    %v4148 = vld [vmem:[#allocation7 + $0x7c8] sm:$0xff]
    %v4149 = vld [vmem:[#allocation7 + $0x7d0] sm:$0xff]
    %v4150 = vld [vmem:[#allocation7 + $0x7d8] sm:$0xff]
    %v4151 = vld [vmem:[#allocation7 + $0x7e0] sm:$0xff]
    %v4152 = vld [vmem:[#allocation7 + $0x7e8] sm:$0xff]
    %v4153 = vld [vmem:[#allocation7 + $0x7f0] sm:$0xff]
    %v4154 = vld [vmem:[#allocation7 + $0x7f8] sm:$0xff]
    %v4155 = vld [vmem:[#allocation7 + $0x800] sm:$0xff]
    %v4156 = vld [vmem:[#allocation7 + $0x808] sm:$0xff]
    %v4157 = vld [vmem:[#allocation7 + $0x810] sm:$0xff]
    %v4158 = vld [vmem:[#allocation7 + $0x818] sm:$0xff]
    %v4159 = vld [vmem:[#allocation7 + $0x820] sm:$0xff]
    %v4160 = vld [vmem:[#allocation7 + $0x828] sm:$0xff]
    %v4161 = vld [vmem:[#allocation7 + $0x830] sm:$0xff]
    %v4162 = vld [vmem:[#allocation7 + $0x838] sm:$0xff]
    %v4163 = vld [vmem:[#allocation7 + $0x840] sm:$0xff]
    %v4164 = vld [vmem:[#allocation7 + $0x848] sm:$0xff]
    %v4165 = vld [vmem:[#allocation7 + $0x850] sm:$0xff]
    %v4166 = vld [vmem:[#allocation7 + $0x858] sm:$0xff]
    %v4167 = vld [vmem:[#allocation7 + $0x860] sm:$0xff]
    %v4168 = vld [vmem:[#allocation7 + $0x868] sm:$0xff]
    %v4169 = vld [vmem:[#allocation7 + $0x870] sm:$0xff]
    %v4170 = vld [vmem:[#allocation7 + $0x878] sm:$0xff]
    %v4171 = vld [vmem:[#allocation7 + $0x880] sm:$0xff]
    %v4172 = vld [vmem:[#allocation7 + $0x888] sm:$0xff]
    %v4173 = vld [vmem:[#allocation7 + $0x890] sm:$0xff]
    %v4174 = vld [vmem:[#allocation7 + $0x898] sm:$0xff]
    %v4175 = vld [vmem:[#allocation7 + $0x8a0] sm:$0xff]
    %v4176 = vld [vmem:[#allocation7 + $0x8a8] sm:$0xff]
    %v4177 = vld [vmem:[#allocation7 + $0x8b0] sm:$0xff]
    %v4178 = vld [vmem:[#allocation7 + $0x8b8] sm:$0xff]
    %v4179 = vld [vmem:[#allocation7 + $0x8c0] sm:$0xff]
    %v4180 = vld [vmem:[#allocation7 + $0x8c8] sm:$0xff]
    %v4181 = vld [vmem:[#allocation7 + $0x8d0] sm:$0xff]
    %v4182 = vld [vmem:[#allocation7 + $0x8d8] sm:$0xff]
    %v4183 = vld [vmem:[#allocation7 + $0x8e0] sm:$0xff]
    %v4184 = vld [vmem:[#allocation7 + $0x8e8] sm:$0xff]
    %v4185 = vld [vmem:[#allocation7 + $0x8f0] sm:$0xff]
    %v4186 = vld [vmem:[#allocation7 + $0x8f8] sm:$0xff]
    %v4187 = vld [vmem:[#allocation7 + $0x900] sm:$0xff]
    %v4188 = vld [vmem:[#allocation7 + $0x908] sm:$0xff]
    %v4189 = vld [vmem:[#allocation7 + $0x910] sm:$0xff]
    %v4190 = vld [vmem:[#allocation7 + $0x918] sm:$0xff]
    %v4191 = vld [vmem:[#allocation7 + $0x920] sm:$0xff]
    %v4192 = vld [vmem:[#allocation7 + $0x928] sm:$0xff]
    %v4193 = vld [vmem:[#allocation7 + $0x930] sm:$0xff]
    %v4194 = vld [vmem:[#allocation7 + $0x938] sm:$0xff]
    %v4195 = vld [vmem:[#allocation7 + $0x940] sm:$0xff]
    %v4196 = vld [vmem:[#allocation7 + $0x948] sm:$0xff]
    %v4197 = vld [vmem:[#allocation7 + $0x950] sm:$0xff]
    %v4198 = vld [vmem:[#allocation7 + $0x958] sm:$0xff]
    %v4199 = vld [vmem:[#allocation7 + $0x960] sm:$0xff]
    %v4200 = vld [vmem:[#allocation7 + $0x968] sm:$0xff]
    %v4201 = vld [vmem:[#allocation7 + $0x970] sm:$0xff]
    %v4202 = vld [vmem:[#allocation7 + $0x978] sm:$0xff]
    %v4203 = vld [vmem:[#allocation7 + $0x980] sm:$0xff]
    %v4204 = vld [vmem:[#allocation7 + $0x988] sm:$0xff]
    %v4205 = vld [vmem:[#allocation7 + $0x990] sm:$0xff]
    %v4206 = vld [vmem:[#allocation7 + $0x998] sm:$0xff]
    %v4207 = vld [vmem:[#allocation7 + $0x9a0] sm:$0xff]
    %v4208 = vld [vmem:[#allocation7 + $0x9a8] sm:$0xff]
    %v4209 = vld [vmem:[#allocation7 + $0x9b0] sm:$0xff]
    %v4210 = vld [vmem:[#allocation7 + $0x9b8] sm:$0xff]
    %v4211 = vld [vmem:[#allocation7 + $0x9c0] sm:$0xff]
    %v4212 = vld [vmem:[#allocation7 + $0x9c8] sm:$0xff]
    %v4213 = vld [vmem:[#allocation7 + $0x9d0] sm:$0xff]
    %v4214 = vld [vmem:[#allocation7 + $0x9d8] sm:$0xff]
    %v4215 = vld [vmem:[#allocation7 + $0x9e0] sm:$0xff]
    %v4216 = vld [vmem:[#allocation7 + $0x9e8] sm:$0xff]
    %v4217 = vld [vmem:[#allocation7 + $0x9f0] sm:$0xff]
    %v4218 = vld [vmem:[#allocation7 + $0x9f8] sm:$0xff]
    %v4219 = vld [vmem:[#allocation7 + $0xa00] sm:$0xff]
    %v4220 = vld [vmem:[#allocation7 + $0xa08] sm:$0xff]
    %v4221 = vld [vmem:[#allocation7 + $0xa10] sm:$0xff]
    %v4222 = vld [vmem:[#allocation7 + $0xa18] sm:$0xff]
    %v4223 = vld [vmem:[#allocation7 + $0xa20] sm:$0xff]
    %v4224 = vld [vmem:[#allocation7 + $0xa28] sm:$0xff]
    %v4225 = vld [vmem:[#allocation7 + $0xa30] sm:$0xff]
    %v4226 = vld [vmem:[#allocation7 + $0xa38] sm:$0xff]
    %v4227 = vld [vmem:[#allocation7 + $0xa40] sm:$0xff]
    %v4228 = vld [vmem:[#allocation7 + $0xa48] sm:$0xff]
    %v4229 = vld [vmem:[#allocation7 + $0xa50] sm:$0xff]
    %v4230 = vld [vmem:[#allocation7 + $0xa58] sm:$0xff]
    %v4231 = vld [vmem:[#allocation7 + $0xa60] sm:$0xff]
    %v4232 = vld [vmem:[#allocation7 + $0xa68] sm:$0xff]
    %v4233 = vld [vmem:[#allocation7 + $0xa70] sm:$0xff]
    %v4234 = vld [vmem:[#allocation7 + $0xa78] sm:$0xff]
    %v4235 = vld [vmem:[#allocation7 + $0xa80] sm:$0xff]
    %v4236 = vld [vmem:[#allocation7 + $0xa88] sm:$0xff]
    %v4237 = vld [vmem:[#allocation7 + $0xa90] sm:$0xff]
    %v4238 = vld [vmem:[#allocation7 + $0xa98] sm:$0xff]
    %v4239 = vld [vmem:[#allocation7 + $0xaa0] sm:$0xff]
    %v4240 = vld [vmem:[#allocation7 + $0xaa8] sm:$0xff]
    %v4241 = vld [vmem:[#allocation7 + $0xab0] sm:$0xff]
    %v4242 = vld [vmem:[#allocation7 + $0xab8] sm:$0xff]
    %v4243 = vld [vmem:[#allocation7 + $0xac0] sm:$0xff]
    %v4244 = vld [vmem:[#allocation7 + $0xac8] sm:$0xff]
    %v4245 = vld [vmem:[#allocation7 + $0xad0] sm:$0xff]
    %v4246 = vld [vmem:[#allocation7 + $0xad8] sm:$0xff]
    %v4247 = vld [vmem:[#allocation7 + $0xae0] sm:$0xff]
    %v4248 = vld [vmem:[#allocation7 + $0xae8] sm:$0xff]
    %v4249 = vld [vmem:[#allocation7 + $0xaf0] sm:$0xff]
    %v4250 = vld [vmem:[#allocation7 + $0xaf8] sm:$0xff]
    %v4251 = vld [vmem:[#allocation7 + $0xb00] sm:$0xff]
    %v4252 = vld [vmem:[#allocation7 + $0xb08] sm:$0xff]
    %v4253 = vld [vmem:[#allocation7 + $0xb10] sm:$0xff]
    %v4254 = vld [vmem:[#allocation7 + $0xb18] sm:$0xff]
    %v4255 = vld [vmem:[#allocation7 + $0xb20] sm:$0xff]
    %v4256 = vld [vmem:[#allocation7 + $0xb28] sm:$0xff]
    %v4257 = vld [vmem:[#allocation7 + $0xb30] sm:$0xff]
    %v4258 = vld [vmem:[#allocation7 + $0xb38] sm:$0xff]
    %v4259 = vld [vmem:[#allocation7 + $0xb40] sm:$0xff]
    %v4260 = vld [vmem:[#allocation7 + $0xb48] sm:$0xff]
    %v4261 = vld [vmem:[#allocation7 + $0xb50] sm:$0xff]
    %v4262 = vld [vmem:[#allocation7 + $0xb58] sm:$0xff]
    %v4263 = vld [vmem:[#allocation7 + $0xb60] sm:$0xff]
    %v4264 = vld [vmem:[#allocation7 + $0xb68] sm:$0xff]
    %v4265 = vld [vmem:[#allocation7 + $0xb70] sm:$0xff]
    %v4266 = vld [vmem:[#allocation7 + $0xb78] sm:$0xff]
    %v4267 = vld [vmem:[#allocation7 + $0xb80] sm:$0xff]
    %v4268 = vld [vmem:[#allocation7 + $0xb88] sm:$0xff]
    %v4269 = vld [vmem:[#allocation7 + $0xb90] sm:$0xff]
    %v4270 = vld [vmem:[#allocation7 + $0xb98] sm:$0xff]
    %v4271 = vld [vmem:[#allocation7 + $0xba0] sm:$0xff]
    %v4272 = vld [vmem:[#allocation7 + $0xba8] sm:$0xff]
    %v4273 = vld [vmem:[#allocation7 + $0xbb0] sm:$0xff]
    %v4274 = vld [vmem:[#allocation7 + $0xbb8] sm:$0xff]
    %v4275 = vld [vmem:[#allocation7 + $0xbc0] sm:$0xff]
    %v4276 = vld [vmem:[#allocation7 + $0xbc8] sm:$0xff]
    %v4277 = vld [vmem:[#allocation7 + $0xbd0] sm:$0xff]
    %v4278 = vld [vmem:[#allocation7 + $0xbd8] sm:$0xff]
    %v4279 = vld [vmem:[#allocation7 + $0xbe0] sm:$0xff]
    %v4280 = vld [vmem:[#allocation7 + $0xbe8] sm:$0xff]
    %v4281 = vld [vmem:[#allocation7 + $0xbf0] sm:$0xff]
    %v4282 = vld [vmem:[#allocation7 + $0xbf8] sm:$0xff]
    %v4283 = vld [vmem:[#allocation7 + $0xc00] sm:$0xff]
    %v4284 = vld [vmem:[#allocation7 + $0xc08] sm:$0xff]
    %v4285 = vld [vmem:[#allocation7 + $0xc10] sm:$0xff]
    %v4286 = vld [vmem:[#allocation7 + $0xc18] sm:$0xff]
    %v4287 = vld [vmem:[#allocation7 + $0xc20] sm:$0xff]
    %v4288 = vld [vmem:[#allocation7 + $0xc28] sm:$0xff]
    %v4289 = vld [vmem:[#allocation7 + $0xc30] sm:$0xff]
    %v4290 = vld [vmem:[#allocation7 + $0xc38] sm:$0xff]
    %v4291 = vld [vmem:[#allocation7 + $0xc40] sm:$0xff]
    %v4292 = vld [vmem:[#allocation7 + $0xc48] sm:$0xff]
    %v4293 = vld [vmem:[#allocation7 + $0xc50] sm:$0xff]
    %v4294 = vld [vmem:[#allocation7 + $0xc58] sm:$0xff]
    %v4295 = vld [vmem:[#allocation7 + $0xc60] sm:$0xff]
    %v4296 = vld [vmem:[#allocation7 + $0xc68] sm:$0xff]
    %v4297 = vld [vmem:[#allocation7 + $0xc70] sm:$0xff]
    %v4298 = vld [vmem:[#allocation7 + $0xc78] sm:$0xff]
    %v4299 = vld [vmem:[#allocation7 + $0xc80] sm:$0xff]
    %v4300 = vld [vmem:[#allocation7 + $0xc88] sm:$0xff]
    %v4301 = vld [vmem:[#allocation7 + $0xc90] sm:$0xff]
    %v4302 = vld [vmem:[#allocation7 + $0xc98] sm:$0xff]
    %v4303 = vld [vmem:[#allocation7 + $0xca0] sm:$0xff]
    %v4304 = vld [vmem:[#allocation7 + $0xca8] sm:$0xff]
    %v4305 = vld [vmem:[#allocation7 + $0xcb0] sm:$0xff]
    %v4306 = vld [vmem:[#allocation7 + $0xcb8] sm:$0xff]
    %v4307 = vld [vmem:[#allocation7 + $0xcc0] sm:$0xff]
    %v4308 = vld [vmem:[#allocation7 + $0xcc8] sm:$0xff]
    %v4309 = vld [vmem:[#allocation7 + $0xcd0] sm:$0xff]
    %v4310 = vld [vmem:[#allocation7 + $0xcd8] sm:$0xff]
    %v4311 = vld [vmem:[#allocation7 + $0xce0] sm:$0xff]
    %v4312 = vld [vmem:[#allocation7 + $0xce8] sm:$0xff]
    %v4313 = vld [vmem:[#allocation7 + $0xcf0] sm:$0xff]
    %v4314 = vld [vmem:[#allocation7 + $0xcf8] sm:$0xff]
    %v4315 = vld [vmem:[#allocation7 + $0xd00] sm:$0xff]
    %v4316 = vld [vmem:[#allocation7 + $0xd08] sm:$0xff]
    %v4317 = vld [vmem:[#allocation7 + $0xd10] sm:$0xff]
    %v4318 = vld [vmem:[#allocation7 + $0xd18] sm:$0xff]
    %v4319 = vld [vmem:[#allocation7 + $0xd20] sm:$0xff]
    %v4320 = vld [vmem:[#allocation7 + $0xd28] sm:$0xff]
    %v4321 = vld [vmem:[#allocation7 + $0xd30] sm:$0xff]
    %v4322 = vld [vmem:[#allocation7 + $0xd38] sm:$0xff]
    %v4323 = vld [vmem:[#allocation7 + $0xd40] sm:$0xff]
    %v4324 = vld [vmem:[#allocation7 + $0xd48] sm:$0xff]
    %v4325 = vld [vmem:[#allocation7 + $0xd50] sm:$0xff]
    %v4326 = vld [vmem:[#allocation7 + $0xd58] sm:$0xff]
    %v4327 = vld [vmem:[#allocation7 + $0xd60] sm:$0xff]
    %v4328 = vld [vmem:[#allocation7 + $0xd68] sm:$0xff]
    %v4329 = vld [vmem:[#allocation7 + $0xd70] sm:$0xff]
    %v4330 = vld [vmem:[#allocation7 + $0xd78] sm:$0xff]
    %v4331 = vld [vmem:[#allocation7 + $0xd80] sm:$0xff]
    %v4332 = vld [vmem:[#allocation7 + $0xd88] sm:$0xff]
    %v4333 = vld [vmem:[#allocation7 + $0xd90] sm:$0xff]
    %v4334 = vld [vmem:[#allocation7 + $0xd98] sm:$0xff]
    %v4335 = vld [vmem:[#allocation7 + $0xda0] sm:$0xff]
    %v4336 = vld [vmem:[#allocation7 + $0xda8] sm:$0xff]
    %v4337 = vld [vmem:[#allocation7 + $0xdb0] sm:$0xff]
    %v4338 = vld [vmem:[#allocation7 + $0xdb8] sm:$0xff]
    %v4339 = vld [vmem:[#allocation7 + $0xdc0] sm:$0xff]
    %v4340 = vld [vmem:[#allocation7 + $0xdc8] sm:$0xff]
    %v4341 = vld [vmem:[#allocation7 + $0xdd0] sm:$0xff]
    %v4342 = vld [vmem:[#allocation7 + $0xdd8] sm:$0xff]
    %v4343 = vld [vmem:[#allocation7 + $0xde0] sm:$0xff]
    %v4344 = vld [vmem:[#allocation7 + $0xde8] sm:$0xff]
    %v4345 = vld [vmem:[#allocation7 + $0xdf0] sm:$0xff]
    %v4346 = vld [vmem:[#allocation7 + $0xdf8] sm:$0xff]
    %v4347 = vld [vmem:[#allocation7 + $0xe00] sm:$0xff]
    %v4348 = vld [vmem:[#allocation7 + $0xe08] sm:$0xff]
    %v4349 = vld [vmem:[#allocation7 + $0xe10] sm:$0xff]
    %v4350 = vld [vmem:[#allocation7 + $0xe18] sm:$0xff]
    %v4351 = vld [vmem:[#allocation7 + $0xe20] sm:$0xff]
    %v4352 = vld [vmem:[#allocation7 + $0xe28] sm:$0xff]
    %v4353 = vld [vmem:[#allocation7 + $0xe30] sm:$0xff]
    %v4354 = vld [vmem:[#allocation7 + $0xe38] sm:$0xff]
    %v4355 = vld [vmem:[#allocation7 + $0xe40] sm:$0xff]
    %v4356 = vld [vmem:[#allocation7 + $0xe48] sm:$0xff]
    %v4357 = vld [vmem:[#allocation7 + $0xe50] sm:$0xff]
    %v4358 = vld [vmem:[#allocation7 + $0xe58] sm:$0xff]
    %v4359 = vld [vmem:[#allocation7 + $0xe60] sm:$0xff]
    %v4360 = vld [vmem:[#allocation7 + $0xe68] sm:$0xff]
    %v4361 = vld [vmem:[#allocation7 + $0xe70] sm:$0xff]
    %v4362 = vld [vmem:[#allocation7 + $0xe78] sm:$0xff]
    %v4363 = vld [vmem:[#allocation7 + $0xe80] sm:$0xff]
    %v4364 = vld [vmem:[#allocation7 + $0xe88] sm:$0xff]
    %v4365 = vld [vmem:[#allocation7 + $0xe90] sm:$0xff]
    %v4366 = vld [vmem:[#allocation7 + $0xe98] sm:$0xff]
    %v4367 = vld [vmem:[#allocation7 + $0xea0] sm:$0xff]
    %v4368 = vld [vmem:[#allocation7 + $0xea8] sm:$0xff]
    %v4369 = vld [vmem:[#allocation7 + $0xeb0] sm:$0xff]
    %v4370 = vld [vmem:[#allocation7 + $0xeb8] sm:$0xff]
    %v4371 = vld [vmem:[#allocation7 + $0xec0] sm:$0xff]
    %v4372 = vld [vmem:[#allocation7 + $0xec8] sm:$0xff]
    %v4373 = vld [vmem:[#allocation7 + $0xed0] sm:$0xff]
    %v4374 = vld [vmem:[#allocation7 + $0xed8] sm:$0xff]
    %v4375 = vld [vmem:[#allocation7 + $0xee0] sm:$0xff]
    %v4376 = vld [vmem:[#allocation7 + $0xee8] sm:$0xff]
    %v4377 = vld [vmem:[#allocation7 + $0xef0] sm:$0xff]
    %v4378 = vld [vmem:[#allocation7 + $0xef8] sm:$0xff]
    %v4379 = vld [vmem:[#allocation7 + $0xf00] sm:$0xff]
    %v4380 = vld [vmem:[#allocation7 + $0xf08] sm:$0xff]
    %v4381 = vld [vmem:[#allocation7 + $0xf10] sm:$0xff]
    %v4382 = vld [vmem:[#allocation7 + $0xf18] sm:$0xff]
    %v4383 = vld [vmem:[#allocation7 + $0xf20] sm:$0xff]
    %v4384 = vld [vmem:[#allocation7 + $0xf28] sm:$0xff]
    %v4385 = vld [vmem:[#allocation7 + $0xf30] sm:$0xff]
    %v4386 = vld [vmem:[#allocation7 + $0xf38] sm:$0xff]
    %v4387 = vld [vmem:[#allocation7 + $0xf40] sm:$0xff]
    %v4388 = vld [vmem:[#allocation7 + $0xf48] sm:$0xff]
    %v4389 = vld [vmem:[#allocation7 + $0xf50] sm:$0xff]
    %v4390 = vld [vmem:[#allocation7 + $0xf58] sm:$0xff]
    %v4391 = vld [vmem:[#allocation7 + $0xf60] sm:$0xff]
    %v4392 = vld [vmem:[#allocation7 + $0xf68] sm:$0xff]
    %v4393 = vld [vmem:[#allocation7 + $0xf70] sm:$0xff]
    %v4394 = vld [vmem:[#allocation7 + $0xf78] sm:$0xff]
    %v4395 = vld [vmem:[#allocation7 + $0xf80] sm:$0xff]
    %v4396 = vld [vmem:[#allocation7 + $0xf88] sm:$0xff]
    %v4397 = vld [vmem:[#allocation7 + $0xf90] sm:$0xff]
    %v4398 = vld [vmem:[#allocation7 + $0xf98] sm:$0xff]
    %v4399 = vld [vmem:[#allocation7 + $0xfa0] sm:$0xff]
    %v4400 = vld [vmem:[#allocation7 + $0xfa8] sm:$0xff]
    %v4401 = vld [vmem:[#allocation7 + $0xfb0] sm:$0xff]
    %v4402 = vld [vmem:[#allocation7 + $0xfb8] sm:$0xff]
    %v4403 = vld [vmem:[#allocation7 + $0xfc0] sm:$0xff]
    %v4404 = vld [vmem:[#allocation7 + $0xfc8] sm:$0xff]
    %v4405 = vld [vmem:[#allocation7 + $0xfd0] sm:$0xff]
    %v4406 = vld [vmem:[#allocation7 + $0xfd8] sm:$0xff]
    %v4407 = vld [vmem:[#allocation7 + $0xfe0] sm:$0xff]
    %v4408 = vld [vmem:[#allocation7 + $0xfe8] sm:$0xff]
    %v4409 = vld [vmem:[#allocation7 + $0xff0] sm:$0xff]
    %v4410 = vld [vmem:[#allocation7 + $0xff8] sm:$0xff]
    %v4411 = vld [vmem:[#allocation8] sm:$0xff]
    %v4413 = vlaneseq
    %v4414 = vshrl.u32 %v4413, 7
    %v4415 = vsub.s32 0, %v4414
    %v4416 = vrot.slane %v4411, %v4415
    %v4417 = vlaneseq
    %v4418 = vshrl.u32 %v4417, 7
    %v4419 = vsub.s32 1, %v4418
    %v4420 = vrot.slane %v4411, %v4419
    %v4421 = vlaneseq
    %v4422 = vshrl.u32 %v4421, 7
    %v4423 = vsub.s32 2, %v4422
    %v4424 = vrot.slane %v4411, %v4423
    %v4425 = vlaneseq
    %v4426 = vshrl.u32 %v4425, 7
    %v4427 = vsub.s32 3, %v4426
    %v4428 = vrot.slane %v4411, %v4427
    %v4429 = vlaneseq
    %v4430 = vshrl.u32 %v4429, 7
    %v4431 = vsub.s32 4, %v4430
    %v4432 = vrot.slane %v4411, %v4431
    %v4433 = vlaneseq
    %v4434 = vshrl.u32 %v4433, 7
    %v4435 = vsub.s32 5, %v4434
    %v4436 = vrot.slane %v4411, %v4435
    %v4437 = vlaneseq
    %v4438 = vshrl.u32 %v4437, 7
    %v4439 = vsub.s32 6, %v4438
    %v4440 = vrot.slane %v4411, %v4439
    %v4441 = vlaneseq
    %v4442 = vshrl.u32 %v4441, 7
    %v4443 = vsub.s32 7, %v4442
    %v4444 = vrot.slane %v4411, %v4443
    %v4965 = vunpack.c.l.b16 %v3899
    %v4966 = vunpack.c.h.b16 %v3899
    %v4967 = vunpack.c.l.b16 %v3900
    %v4968 = vunpack.c.h.b16 %v3900
    %v4969 = vunpack.c.l.b16 %v3901
    %v4970 = vunpack.c.h.b16 %v3901
    %v4971 = vunpack.c.l.b16 %v3902
    %v4972 = vunpack.c.h.b16 %v3902
    %v4973 = vunpack.c.l.b16 %v3903
    %v4974 = vunpack.c.h.b16 %v3903
    %v4975 = vunpack.c.l.b16 %v3904
    %v4976 = vunpack.c.h.b16 %v3904
    %v4977 = vunpack.c.l.b16 %v3905
    %v4978 = vunpack.c.h.b16 %v3905
    %v4979 = vunpack.c.l.b16 %v3906
    %v4980 = vunpack.c.h.b16 %v3906
    %v4981 = vunpack.c.l.b16 %v3907
    %v4982 = vunpack.c.h.b16 %v3907
    %v4983 = vunpack.c.l.b16 %v3908
    %v4984 = vunpack.c.h.b16 %v3908
    %v4985 = vunpack.c.l.b16 %v3909
    %v4986 = vunpack.c.h.b16 %v3909
    %v4987 = vunpack.c.l.b16 %v3910
    %v4988 = vunpack.c.h.b16 %v3910
    %v4989 = vunpack.c.l.b16 %v3911
    %v4990 = vunpack.c.h.b16 %v3911
    %v4991 = vunpack.c.l.b16 %v3912
    %v4992 = vunpack.c.h.b16 %v3912
    %v4993 = vunpack.c.l.b16 %v3913
    %v4994 = vunpack.c.h.b16 %v3913
    %v4995 = vunpack.c.l.b16 %v3914
    %v4996 = vunpack.c.h.b16 %v3914
    %v4997 = vunpack.c.l.b16 %v3915
    %v4998 = vunpack.c.h.b16 %v3915
    %v4999 = vunpack.c.l.b16 %v3916
    %v5000 = vunpack.c.h.b16 %v3916
    %v5001 = vunpack.c.l.b16 %v3917
    %v5002 = vunpack.c.h.b16 %v3917
    %v5003 = vunpack.c.l.b16 %v3918
    %v5004 = vunpack.c.h.b16 %v3918
    %v5005 = vunpack.c.l.b16 %v3919
    %v5006 = vunpack.c.h.b16 %v3919
    %v5007 = vunpack.c.l.b16 %v3920
    %v5008 = vunpack.c.h.b16 %v3920
    %v5009 = vunpack.c.l.b16 %v3921
    %v5010 = vunpack.c.h.b16 %v3921
    %v5011 = vunpack.c.l.b16 %v3922
    %v5012 = vunpack.c.h.b16 %v3922
    %v5013 = vunpack.c.l.b16 %v3923
    %v5014 = vunpack.c.h.b16 %v3923
    %v5015 = vunpack.c.l.b16 %v3924
    %v5016 = vunpack.c.h.b16 %v3924
    %v5017 = vunpack.c.l.b16 %v3925
    %v5018 = vunpack.c.h.b16 %v3925
    %v5019 = vunpack.c.l.b16 %v3926
    %v5020 = vunpack.c.h.b16 %v3926
    %v5021 = vunpack.c.l.b16 %v3927
    %v5022 = vunpack.c.h.b16 %v3927
    %v5023 = vunpack.c.l.b16 %v3928
    %v5024 = vunpack.c.h.b16 %v3928
    %v5025 = vunpack.c.l.b16 %v3929
    %v5026 = vunpack.c.h.b16 %v3929
    %v5027 = vunpack.c.l.b16 %v3930
    %v5028 = vunpack.c.h.b16 %v3930
    %v5029 = vunpack.c.l.b16 %v3931
    %v5030 = vunpack.c.h.b16 %v3931
    %v5031 = vunpack.c.l.b16 %v3932
    %v5032 = vunpack.c.h.b16 %v3932
    %v5033 = vunpack.c.l.b16 %v3933
    %v5034 = vunpack.c.h.b16 %v3933
    %v5035 = vunpack.c.l.b16 %v3934
    %v5036 = vunpack.c.h.b16 %v3934
    %v5037 = vunpack.c.l.b16 %v3935
    %v5038 = vunpack.c.h.b16 %v3935
    %v5039 = vunpack.c.l.b16 %v3936
    %v5040 = vunpack.c.h.b16 %v3936
    %v5041 = vunpack.c.l.b16 %v3937
    %v5042 = vunpack.c.h.b16 %v3937
    %v5043 = vunpack.c.l.b16 %v3938
    %v5044 = vunpack.c.h.b16 %v3938
    %v5045 = vunpack.c.l.b16 %v3939
    %v5046 = vunpack.c.h.b16 %v3939
    %v5047 = vunpack.c.l.b16 %v3940
    %v5048 = vunpack.c.h.b16 %v3940
    %v5049 = vunpack.c.l.b16 %v3941
    %v5050 = vunpack.c.h.b16 %v3941
    %v5051 = vunpack.c.l.b16 %v3942
    %v5052 = vunpack.c.h.b16 %v3942
    %v5053 = vunpack.c.l.b16 %v3943
    %v5054 = vunpack.c.h.b16 %v3943
    %v5055 = vunpack.c.l.b16 %v3944
    %v5056 = vunpack.c.h.b16 %v3944
    %v5057 = vunpack.c.l.b16 %v3945
    %v5058 = vunpack.c.h.b16 %v3945
    %v5059 = vunpack.c.l.b16 %v3946
    %v5060 = vunpack.c.h.b16 %v3946
    %v5061 = vunpack.c.l.b16 %v3947
    %v5062 = vunpack.c.h.b16 %v3947
    %v5063 = vunpack.c.l.b16 %v3948
    %v5064 = vunpack.c.h.b16 %v3948
    %v5065 = vunpack.c.l.b16 %v3949
    %v5066 = vunpack.c.h.b16 %v3949
    %v5067 = vunpack.c.l.b16 %v3950
    %v5068 = vunpack.c.h.b16 %v3950
    %v5069 = vunpack.c.l.b16 %v3951
    %v5070 = vunpack.c.h.b16 %v3951
    %v5071 = vunpack.c.l.b16 %v3952
    %v5072 = vunpack.c.h.b16 %v3952
    %v5073 = vunpack.c.l.b16 %v3953
    %v5074 = vunpack.c.h.b16 %v3953
    %v5075 = vunpack.c.l.b16 %v3954
    %v5076 = vunpack.c.h.b16 %v3954
    %v5077 = vunpack.c.l.b16 %v3955
    %v5078 = vunpack.c.h.b16 %v3955
    %v5079 = vunpack.c.l.b16 %v3956
    %v5080 = vunpack.c.h.b16 %v3956
    %v5081 = vunpack.c.l.b16 %v3957
    %v5082 = vunpack.c.h.b16 %v3957
    %v5083 = vunpack.c.l.b16 %v3958
    %v5084 = vunpack.c.h.b16 %v3958
    %v5085 = vunpack.c.l.b16 %v3959
    %v5086 = vunpack.c.h.b16 %v3959
    %v5087 = vunpack.c.l.b16 %v3960
    %v5088 = vunpack.c.h.b16 %v3960
    %v5089 = vunpack.c.l.b16 %v3961
    %v5090 = vunpack.c.h.b16 %v3961
    %v5091 = vunpack.c.l.b16 %v3962
    %v5092 = vunpack.c.h.b16 %v3962
    %v5093 = vunpack.c.l.b16 %v3963
    %v5094 = vunpack.c.h.b16 %v3963
    %v5095 = vunpack.c.l.b16 %v3964
    %v5096 = vunpack.c.h.b16 %v3964
    %v5097 = vunpack.c.l.b16 %v3965
    %v5098 = vunpack.c.h.b16 %v3965
    %v5099 = vunpack.c.l.b16 %v3966
    %v5100 = vunpack.c.h.b16 %v3966
    %v5101 = vunpack.c.l.b16 %v3967
    %v5102 = vunpack.c.h.b16 %v3967
    %v5103 = vunpack.c.l.b16 %v3968
    %v5104 = vunpack.c.h.b16 %v3968
    %v5105 = vunpack.c.l.b16 %v3969
    %v5106 = vunpack.c.h.b16 %v3969
    %v5107 = vunpack.c.l.b16 %v3970
    %v5108 = vunpack.c.h.b16 %v3970
    %v5109 = vunpack.c.l.b16 %v3971
    %v5110 = vunpack.c.h.b16 %v3971
    %v5111 = vunpack.c.l.b16 %v3972
    %v5112 = vunpack.c.h.b16 %v3972
    %v5113 = vunpack.c.l.b16 %v3973
    %v5114 = vunpack.c.h.b16 %v3973
    %v5115 = vunpack.c.l.b16 %v3974
    %v5116 = vunpack.c.h.b16 %v3974
    %v5117 = vunpack.c.l.b16 %v3975
    %v5118 = vunpack.c.h.b16 %v3975
    %v5119 = vunpack.c.l.b16 %v3976
    %v5120 = vunpack.c.h.b16 %v3976
    %v5121 = vunpack.c.l.b16 %v3977
    %v5122 = vunpack.c.h.b16 %v3977
    %v5123 = vunpack.c.l.b16 %v3978
    %v5124 = vunpack.c.h.b16 %v3978
    %v5125 = vunpack.c.l.b16 %v3979
    %v5126 = vunpack.c.h.b16 %v3979
    %v5127 = vunpack.c.l.b16 %v3980
    %v5128 = vunpack.c.h.b16 %v3980
    %v5129 = vunpack.c.l.b16 %v3981
    %v5130 = vunpack.c.h.b16 %v3981
    %v5131 = vunpack.c.l.b16 %v3982
    %v5132 = vunpack.c.h.b16 %v3982
    %v5133 = vunpack.c.l.b16 %v3983
    %v5134 = vunpack.c.h.b16 %v3983
    %v5135 = vunpack.c.l.b16 %v3984
    %v5136 = vunpack.c.h.b16 %v3984
    %v5137 = vunpack.c.l.b16 %v3985
    %v5138 = vunpack.c.h.b16 %v3985
    %v5139 = vunpack.c.l.b16 %v3986
    %v5140 = vunpack.c.h.b16 %v3986
    %v5141 = vunpack.c.l.b16 %v3987
    %v5142 = vunpack.c.h.b16 %v3987
    %v5143 = vunpack.c.l.b16 %v3988
    %v5144 = vunpack.c.h.b16 %v3988
    %v5145 = vunpack.c.l.b16 %v3989
    %v5146 = vunpack.c.h.b16 %v3989
    %v5147 = vunpack.c.l.b16 %v3990
    %v5148 = vunpack.c.h.b16 %v3990
    %v5149 = vunpack.c.l.b16 %v3991
    %v5150 = vunpack.c.h.b16 %v3991
    %v5151 = vunpack.c.l.b16 %v3992
    %v5152 = vunpack.c.h.b16 %v3992
    %v5153 = vunpack.c.l.b16 %v3993
    %v5154 = vunpack.c.h.b16 %v3993
    %v5155 = vunpack.c.l.b16 %v3994
    %v5156 = vunpack.c.h.b16 %v3994
    %v5157 = vunpack.c.l.b16 %v3995
    %v5158 = vunpack.c.h.b16 %v3995
    %v5159 = vunpack.c.l.b16 %v3996
    %v5160 = vunpack.c.h.b16 %v3996
    %v5161 = vunpack.c.l.b16 %v3997
    %v5162 = vunpack.c.h.b16 %v3997
    %v5163 = vunpack.c.l.b16 %v3998
    %v5164 = vunpack.c.h.b16 %v3998
    %v5165 = vunpack.c.l.b16 %v3999
    %v5166 = vunpack.c.h.b16 %v3999
    %v5167 = vunpack.c.l.b16 %v4000
    %v5168 = vunpack.c.h.b16 %v4000
    %v5169 = vunpack.c.l.b16 %v4001
    %v5170 = vunpack.c.h.b16 %v4001
    %v5171 = vunpack.c.l.b16 %v4002
    %v5172 = vunpack.c.h.b16 %v4002
    %v5173 = vunpack.c.l.b16 %v4003
    %v5174 = vunpack.c.h.b16 %v4003
    %v5175 = vunpack.c.l.b16 %v4004
    %v5176 = vunpack.c.h.b16 %v4004
    %v5177 = vunpack.c.l.b16 %v4005
    %v5178 = vunpack.c.h.b16 %v4005
    %v5179 = vunpack.c.l.b16 %v4006
    %v5180 = vunpack.c.h.b16 %v4006
    %v5181 = vunpack.c.l.b16 %v4007
    %v5182 = vunpack.c.h.b16 %v4007
    %v5183 = vunpack.c.l.b16 %v4008
    %v5184 = vunpack.c.h.b16 %v4008
    %v5185 = vunpack.c.l.b16 %v4009
    %v5186 = vunpack.c.h.b16 %v4009
    %v5187 = vunpack.c.l.b16 %v4010
    %v5188 = vunpack.c.h.b16 %v4010
    %v5189 = vunpack.c.l.b16 %v4011
    %v5190 = vunpack.c.h.b16 %v4011
    %v5191 = vunpack.c.l.b16 %v4012
    %v5192 = vunpack.c.h.b16 %v4012
    %v5193 = vunpack.c.l.b16 %v4013
    %v5194 = vunpack.c.h.b16 %v4013
    %v5195 = vunpack.c.l.b16 %v4014
    %v5196 = vunpack.c.h.b16 %v4014
    %v5197 = vunpack.c.l.b16 %v4015
    %v5198 = vunpack.c.h.b16 %v4015
    %v5199 = vunpack.c.l.b16 %v4016
    %v5200 = vunpack.c.h.b16 %v4016
    %v5201 = vunpack.c.l.b16 %v4017
    %v5202 = vunpack.c.h.b16 %v4017
    %v5203 = vunpack.c.l.b16 %v4018
    %v5204 = vunpack.c.h.b16 %v4018
    %v5205 = vunpack.c.l.b16 %v4019
    %v5206 = vunpack.c.h.b16 %v4019
    %v5207 = vunpack.c.l.b16 %v4020
    %v5208 = vunpack.c.h.b16 %v4020
    %v5209 = vunpack.c.l.b16 %v4021
    %v5210 = vunpack.c.h.b16 %v4021
    %v5211 = vunpack.c.l.b16 %v4022
    %v5212 = vunpack.c.h.b16 %v4022
    %v5213 = vunpack.c.l.b16 %v4023
    %v5214 = vunpack.c.h.b16 %v4023
    %v5215 = vunpack.c.l.b16 %v4024
    %v5216 = vunpack.c.h.b16 %v4024
    %v5217 = vunpack.c.l.b16 %v4025
    %v5218 = vunpack.c.h.b16 %v4025
    %v5219 = vunpack.c.l.b16 %v4026
    %v5220 = vunpack.c.h.b16 %v4026
    %v5221 = vunpack.c.l.b16 %v4027
    %v5222 = vunpack.c.h.b16 %v4027
    %v5223 = vunpack.c.l.b16 %v4028
    %v5224 = vunpack.c.h.b16 %v4028
    %v5225 = vunpack.c.l.b16 %v4029
    %v5226 = vunpack.c.h.b16 %v4029
    %v5227 = vunpack.c.l.b16 %v4030
    %v5228 = vunpack.c.h.b16 %v4030
    %v5229 = vunpack.c.l.b16 %v4031
    %v5230 = vunpack.c.h.b16 %v4031
    %v5231 = vunpack.c.l.b16 %v4032
    %v5232 = vunpack.c.h.b16 %v4032
    %v5233 = vunpack.c.l.b16 %v4033
    %v5234 = vunpack.c.h.b16 %v4033
    %v5235 = vunpack.c.l.b16 %v4034
    %v5236 = vunpack.c.h.b16 %v4034
    %v5237 = vunpack.c.l.b16 %v4035
    %v5238 = vunpack.c.h.b16 %v4035
    %v5239 = vunpack.c.l.b16 %v4036
    %v5240 = vunpack.c.h.b16 %v4036
    %v5241 = vunpack.c.l.b16 %v4037
    %v5242 = vunpack.c.h.b16 %v4037
    %v5243 = vunpack.c.l.b16 %v4038
    %v5244 = vunpack.c.h.b16 %v4038
    %v5245 = vunpack.c.l.b16 %v4039
    %v5246 = vunpack.c.h.b16 %v4039
    %v5247 = vunpack.c.l.b16 %v4040
    %v5248 = vunpack.c.h.b16 %v4040
    %v5249 = vunpack.c.l.b16 %v4041
    %v5250 = vunpack.c.h.b16 %v4041
    %v5251 = vunpack.c.l.b16 %v4042
    %v5252 = vunpack.c.h.b16 %v4042
    %v5253 = vunpack.c.l.b16 %v4043
    %v5254 = vunpack.c.h.b16 %v4043
    %v5255 = vunpack.c.l.b16 %v4044
    %v5256 = vunpack.c.h.b16 %v4044
    %v5257 = vunpack.c.l.b16 %v4045
    %v5258 = vunpack.c.h.b16 %v4045
    %v5259 = vunpack.c.l.b16 %v4046
    %v5260 = vunpack.c.h.b16 %v4046
    %v5261 = vunpack.c.l.b16 %v4047
    %v5262 = vunpack.c.h.b16 %v4047
    %v5263 = vunpack.c.l.b16 %v4048
    %v5264 = vunpack.c.h.b16 %v4048
    %v5265 = vunpack.c.l.b16 %v4049
    %v5266 = vunpack.c.h.b16 %v4049
    %v5267 = vunpack.c.l.b16 %v4050
    %v5268 = vunpack.c.h.b16 %v4050
    %v5269 = vunpack.c.l.b16 %v4051
    %v5270 = vunpack.c.h.b16 %v4051
    %v5271 = vunpack.c.l.b16 %v4052
    %v5272 = vunpack.c.h.b16 %v4052
    %v5273 = vunpack.c.l.b16 %v4053
    %v5274 = vunpack.c.h.b16 %v4053
    %v5275 = vunpack.c.l.b16 %v4054
    %v5276 = vunpack.c.h.b16 %v4054
    %v5277 = vunpack.c.l.b16 %v4055
    %v5278 = vunpack.c.h.b16 %v4055
    %v5279 = vunpack.c.l.b16 %v4056
    %v5280 = vunpack.c.h.b16 %v4056
    %v5281 = vunpack.c.l.b16 %v4057
    %v5282 = vunpack.c.h.b16 %v4057
    %v5283 = vunpack.c.l.b16 %v4058
    %v5284 = vunpack.c.h.b16 %v4058
    %v5285 = vunpack.c.l.b16 %v4059
    %v5286 = vunpack.c.h.b16 %v4059
    %v5287 = vunpack.c.l.b16 %v4060
    %v5288 = vunpack.c.h.b16 %v4060
    %v5289 = vunpack.c.l.b16 %v4061
    %v5290 = vunpack.c.h.b16 %v4061
    %v5291 = vunpack.c.l.b16 %v4062
    %v5292 = vunpack.c.h.b16 %v4062
    %v5293 = vunpack.c.l.b16 %v4063
    %v5294 = vunpack.c.h.b16 %v4063
    %v5295 = vunpack.c.l.b16 %v4064
    %v5296 = vunpack.c.h.b16 %v4064
    %v5297 = vunpack.c.l.b16 %v4065
    %v5298 = vunpack.c.h.b16 %v4065
    %v5299 = vunpack.c.l.b16 %v4066
    %v5300 = vunpack.c.h.b16 %v4066
    %v5301 = vunpack.c.l.b16 %v4067
    %v5302 = vunpack.c.h.b16 %v4067
    %v5303 = vunpack.c.l.b16 %v4068
    %v5304 = vunpack.c.h.b16 %v4068
    %v5305 = vunpack.c.l.b16 %v4069
    %v5306 = vunpack.c.h.b16 %v4069
    %v5307 = vunpack.c.l.b16 %v4070
    %v5308 = vunpack.c.h.b16 %v4070
    %v5309 = vunpack.c.l.b16 %v4071
    %v5310 = vunpack.c.h.b16 %v4071
    %v5311 = vunpack.c.l.b16 %v4072
    %v5312 = vunpack.c.h.b16 %v4072
    %v5313 = vunpack.c.l.b16 %v4073
    %v5314 = vunpack.c.h.b16 %v4073
    %v5315 = vunpack.c.l.b16 %v4074
    %v5316 = vunpack.c.h.b16 %v4074
    %v5317 = vunpack.c.l.b16 %v4075
    %v5318 = vunpack.c.h.b16 %v4075
    %v5319 = vunpack.c.l.b16 %v4076
    %v5320 = vunpack.c.h.b16 %v4076
    %v5321 = vunpack.c.l.b16 %v4077
    %v5322 = vunpack.c.h.b16 %v4077
    %v5323 = vunpack.c.l.b16 %v4078
    %v5324 = vunpack.c.h.b16 %v4078
    %v5325 = vunpack.c.l.b16 %v4079
    %v5326 = vunpack.c.h.b16 %v4079
    %v5327 = vunpack.c.l.b16 %v4080
    %v5328 = vunpack.c.h.b16 %v4080
    %v5329 = vunpack.c.l.b16 %v4081
    %v5330 = vunpack.c.h.b16 %v4081
    %v5331 = vunpack.c.l.b16 %v4082
    %v5332 = vunpack.c.h.b16 %v4082
    %v5333 = vunpack.c.l.b16 %v4083
    %v5334 = vunpack.c.h.b16 %v4083
    %v5335 = vunpack.c.l.b16 %v4084
    %v5336 = vunpack.c.h.b16 %v4084
    %v5337 = vunpack.c.l.b16 %v4085
    %v5338 = vunpack.c.h.b16 %v4085
    %v5339 = vunpack.c.l.b16 %v4086
    %v5340 = vunpack.c.h.b16 %v4086
    %v5341 = vunpack.c.l.b16 %v4087
    %v5342 = vunpack.c.h.b16 %v4087
    %v5343 = vunpack.c.l.b16 %v4088
    %v5344 = vunpack.c.h.b16 %v4088
    %v5345 = vunpack.c.l.b16 %v4089
    %v5346 = vunpack.c.h.b16 %v4089
    %v5347 = vunpack.c.l.b16 %v4090
    %v5348 = vunpack.c.h.b16 %v4090
    %v5349 = vunpack.c.l.b16 %v4091
    %v5350 = vunpack.c.h.b16 %v4091
    %v5351 = vunpack.c.l.b16 %v4092
    %v5352 = vunpack.c.h.b16 %v4092
    %v5353 = vunpack.c.l.b16 %v4093
    %v5354 = vunpack.c.h.b16 %v4093
    %v5355 = vunpack.c.l.b16 %v4094
    %v5356 = vunpack.c.h.b16 %v4094
    %v5357 = vunpack.c.l.b16 %v4095
    %v5358 = vunpack.c.h.b16 %v4095
    %v5359 = vunpack.c.l.b16 %v4096
    %v5360 = vunpack.c.h.b16 %v4096
    %v5361 = vunpack.c.l.b16 %v4097
    %v5362 = vunpack.c.h.b16 %v4097
    %v5363 = vunpack.c.l.b16 %v4098
    %v5364 = vunpack.c.h.b16 %v4098
    %v5365 = vunpack.c.l.b16 %v4099
    %v5366 = vunpack.c.h.b16 %v4099
    %v5367 = vunpack.c.l.b16 %v4100
    %v5368 = vunpack.c.h.b16 %v4100
    %v5369 = vunpack.c.l.b16 %v4101
    %v5370 = vunpack.c.h.b16 %v4101
    %v5371 = vunpack.c.l.b16 %v4102
    %v5372 = vunpack.c.h.b16 %v4102
    %v5373 = vunpack.c.l.b16 %v4103
    %v5374 = vunpack.c.h.b16 %v4103
    %v5375 = vunpack.c.l.b16 %v4104
    %v5376 = vunpack.c.h.b16 %v4104
    %v5377 = vunpack.c.l.b16 %v4105
    %v5378 = vunpack.c.h.b16 %v4105
    %v5379 = vunpack.c.l.b16 %v4106
    %v5380 = vunpack.c.h.b16 %v4106
    %v5381 = vunpack.c.l.b16 %v4107
    %v5382 = vunpack.c.h.b16 %v4107
    %v5383 = vunpack.c.l.b16 %v4108
    %v5384 = vunpack.c.h.b16 %v4108
    %v5385 = vunpack.c.l.b16 %v4109
    %v5386 = vunpack.c.h.b16 %v4109
    %v5387 = vunpack.c.l.b16 %v4110
    %v5388 = vunpack.c.h.b16 %v4110
    %v5389 = vunpack.c.l.b16 %v4111
    %v5390 = vunpack.c.h.b16 %v4111
    %v5391 = vunpack.c.l.b16 %v4112
    %v5392 = vunpack.c.h.b16 %v4112
    %v5393 = vunpack.c.l.b16 %v4113
    %v5394 = vunpack.c.h.b16 %v4113
    %v5395 = vunpack.c.l.b16 %v4114
    %v5396 = vunpack.c.h.b16 %v4114
    %v5397 = vunpack.c.l.b16 %v4115
    %v5398 = vunpack.c.h.b16 %v4115
    %v5399 = vunpack.c.l.b16 %v4116
    %v5400 = vunpack.c.h.b16 %v4116
    %v5401 = vunpack.c.l.b16 %v4117
    %v5402 = vunpack.c.h.b16 %v4117
    %v5403 = vunpack.c.l.b16 %v4118
    %v5404 = vunpack.c.h.b16 %v4118
    %v5405 = vunpack.c.l.b16 %v4119
    %v5406 = vunpack.c.h.b16 %v4119
    %v5407 = vunpack.c.l.b16 %v4120
    %v5408 = vunpack.c.h.b16 %v4120
    %v5409 = vunpack.c.l.b16 %v4121
    %v5410 = vunpack.c.h.b16 %v4121
    %v5411 = vunpack.c.l.b16 %v4122
    %v5412 = vunpack.c.h.b16 %v4122
    %v5413 = vunpack.c.l.b16 %v4123
    %v5414 = vunpack.c.h.b16 %v4123
    %v5415 = vunpack.c.l.b16 %v4124
    %v5416 = vunpack.c.h.b16 %v4124
    %v5417 = vunpack.c.l.b16 %v4125
    %v5418 = vunpack.c.h.b16 %v4125
    %v5419 = vunpack.c.l.b16 %v4126
    %v5420 = vunpack.c.h.b16 %v4126
    %v5421 = vunpack.c.l.b16 %v4127
    %v5422 = vunpack.c.h.b16 %v4127
    %v5423 = vunpack.c.l.b16 %v4128
    %v5424 = vunpack.c.h.b16 %v4128
    %v5425 = vunpack.c.l.b16 %v4129
    %v5426 = vunpack.c.h.b16 %v4129
    %v5427 = vunpack.c.l.b16 %v4130
    %v5428 = vunpack.c.h.b16 %v4130
    %v5429 = vunpack.c.l.b16 %v4131
    %v5430 = vunpack.c.h.b16 %v4131
    %v5431 = vunpack.c.l.b16 %v4132
    %v5432 = vunpack.c.h.b16 %v4132
    %v5433 = vunpack.c.l.b16 %v4133
    %v5434 = vunpack.c.h.b16 %v4133
    %v5435 = vunpack.c.l.b16 %v4134
    %v5436 = vunpack.c.h.b16 %v4134
    %v5437 = vunpack.c.l.b16 %v4135
    %v5438 = vunpack.c.h.b16 %v4135
    %v5439 = vunpack.c.l.b16 %v4136
    %v5440 = vunpack.c.h.b16 %v4136
    %v5441 = vunpack.c.l.b16 %v4137
    %v5442 = vunpack.c.h.b16 %v4137
    %v5443 = vunpack.c.l.b16 %v4138
    %v5444 = vunpack.c.h.b16 %v4138
    %v5445 = vunpack.c.l.b16 %v4139
    %v5446 = vunpack.c.h.b16 %v4139
    %v5447 = vunpack.c.l.b16 %v4140
    %v5448 = vunpack.c.h.b16 %v4140
    %v5449 = vunpack.c.l.b16 %v4141
    %v5450 = vunpack.c.h.b16 %v4141
    %v5451 = vunpack.c.l.b16 %v4142
    %v5452 = vunpack.c.h.b16 %v4142
    %v5453 = vunpack.c.l.b16 %v4143
    %v5454 = vunpack.c.h.b16 %v4143
    %v5455 = vunpack.c.l.b16 %v4144
    %v5456 = vunpack.c.h.b16 %v4144
    %v5457 = vunpack.c.l.b16 %v4145
    %v5458 = vunpack.c.h.b16 %v4145
    %v5459 = vunpack.c.l.b16 %v4146
    %v5460 = vunpack.c.h.b16 %v4146
    %v5461 = vunpack.c.l.b16 %v4147
    %v5462 = vunpack.c.h.b16 %v4147
    %v5463 = vunpack.c.l.b16 %v4148
    %v5464 = vunpack.c.h.b16 %v4148
    %v5465 = vunpack.c.l.b16 %v4149
    %v5466 = vunpack.c.h.b16 %v4149
    %v5467 = vunpack.c.l.b16 %v4150
    %v5468 = vunpack.c.h.b16 %v4150
    %v5469 = vunpack.c.l.b16 %v4151
    %v5470 = vunpack.c.h.b16 %v4151
    %v5471 = vunpack.c.l.b16 %v4152
    %v5472 = vunpack.c.h.b16 %v4152
    %v5473 = vunpack.c.l.b16 %v4153
    %v5474 = vunpack.c.h.b16 %v4153
    %v5475 = vunpack.c.l.b16 %v4154
    %v5476 = vunpack.c.h.b16 %v4154
    %v5477 = vunpack.c.l.b16 %v4155
    %v5478 = vunpack.c.h.b16 %v4155
    %v5479 = vunpack.c.l.b16 %v4156
    %v5480 = vunpack.c.h.b16 %v4156
    %v5481 = vunpack.c.l.b16 %v4157
    %v5482 = vunpack.c.h.b16 %v4157
    %v5483 = vunpack.c.l.b16 %v4158
    %v5484 = vunpack.c.h.b16 %v4158
    %v5485 = vunpack.c.l.b16 %v4159
    %v5486 = vunpack.c.h.b16 %v4159
    %v5487 = vunpack.c.l.b16 %v4160
    %v5488 = vunpack.c.h.b16 %v4160
    %v5489 = vunpack.c.l.b16 %v4161
    %v5490 = vunpack.c.h.b16 %v4161
    %v5491 = vunpack.c.l.b16 %v4162
    %v5492 = vunpack.c.h.b16 %v4162
    %v5493 = vunpack.c.l.b16 %v4163
    %v5494 = vunpack.c.h.b16 %v4163
    %v5495 = vunpack.c.l.b16 %v4164
    %v5496 = vunpack.c.h.b16 %v4164
    %v5497 = vunpack.c.l.b16 %v4165
    %v5498 = vunpack.c.h.b16 %v4165
    %v5499 = vunpack.c.l.b16 %v4166
    %v5500 = vunpack.c.h.b16 %v4166
    %v5501 = vunpack.c.l.b16 %v4167
    %v5502 = vunpack.c.h.b16 %v4167
    %v5503 = vunpack.c.l.b16 %v4168
    %v5504 = vunpack.c.h.b16 %v4168
    %v5505 = vunpack.c.l.b16 %v4169
    %v5506 = vunpack.c.h.b16 %v4169
    %v5507 = vunpack.c.l.b16 %v4170
    %v5508 = vunpack.c.h.b16 %v4170
    %v5509 = vunpack.c.l.b16 %v4171
    %v5510 = vunpack.c.h.b16 %v4171
    %v5511 = vunpack.c.l.b16 %v4172
    %v5512 = vunpack.c.h.b16 %v4172
    %v5513 = vunpack.c.l.b16 %v4173
    %v5514 = vunpack.c.h.b16 %v4173
    %v5515 = vunpack.c.l.b16 %v4174
    %v5516 = vunpack.c.h.b16 %v4174
    %v5517 = vunpack.c.l.b16 %v4175
    %v5518 = vunpack.c.h.b16 %v4175
    %v5519 = vunpack.c.l.b16 %v4176
    %v5520 = vunpack.c.h.b16 %v4176
    %v5521 = vunpack.c.l.b16 %v4177
    %v5522 = vunpack.c.h.b16 %v4177
    %v5523 = vunpack.c.l.b16 %v4178
    %v5524 = vunpack.c.h.b16 %v4178
    %v5525 = vunpack.c.l.b16 %v4179
    %v5526 = vunpack.c.h.b16 %v4179
    %v5527 = vunpack.c.l.b16 %v4180
    %v5528 = vunpack.c.h.b16 %v4180
    %v5529 = vunpack.c.l.b16 %v4181
    %v5530 = vunpack.c.h.b16 %v4181
    %v5531 = vunpack.c.l.b16 %v4182
    %v5532 = vunpack.c.h.b16 %v4182
    %v5533 = vunpack.c.l.b16 %v4183
    %v5534 = vunpack.c.h.b16 %v4183
    %v5535 = vunpack.c.l.b16 %v4184
    %v5536 = vunpack.c.h.b16 %v4184
    %v5537 = vunpack.c.l.b16 %v4185
    %v5538 = vunpack.c.h.b16 %v4185
    %v5539 = vunpack.c.l.b16 %v4186
    %v5540 = vunpack.c.h.b16 %v4186
    %v5541 = vunpack.c.l.b16 %v4187
    %v5542 = vunpack.c.h.b16 %v4187
    %v5543 = vunpack.c.l.b16 %v4188
    %v5544 = vunpack.c.h.b16 %v4188
    %v5545 = vunpack.c.l.b16 %v4189
    %v5546 = vunpack.c.h.b16 %v4189
    %v5547 = vunpack.c.l.b16 %v4190
    %v5548 = vunpack.c.h.b16 %v4190
    %v5549 = vunpack.c.l.b16 %v4191
    %v5550 = vunpack.c.h.b16 %v4191
    %v5551 = vunpack.c.l.b16 %v4192
    %v5552 = vunpack.c.h.b16 %v4192
    %v5553 = vunpack.c.l.b16 %v4193
    %v5554 = vunpack.c.h.b16 %v4193
    %v5555 = vunpack.c.l.b16 %v4194
    %v5556 = vunpack.c.h.b16 %v4194
    %v5557 = vunpack.c.l.b16 %v4195
    %v5558 = vunpack.c.h.b16 %v4195
    %v5559 = vunpack.c.l.b16 %v4196
    %v5560 = vunpack.c.h.b16 %v4196
    %v5561 = vunpack.c.l.b16 %v4197
    %v5562 = vunpack.c.h.b16 %v4197
    %v5563 = vunpack.c.l.b16 %v4198
    %v5564 = vunpack.c.h.b16 %v4198
    %v5565 = vunpack.c.l.b16 %v4199
    %v5566 = vunpack.c.h.b16 %v4199
    %v5567 = vunpack.c.l.b16 %v4200
    %v5568 = vunpack.c.h.b16 %v4200
    %v5569 = vunpack.c.l.b16 %v4201
    %v5570 = vunpack.c.h.b16 %v4201
    %v5571 = vunpack.c.l.b16 %v4202
    %v5572 = vunpack.c.h.b16 %v4202
    %v5573 = vunpack.c.l.b16 %v4203
    %v5574 = vunpack.c.h.b16 %v4203
    %v5575 = vunpack.c.l.b16 %v4204
    %v5576 = vunpack.c.h.b16 %v4204
    %v5577 = vunpack.c.l.b16 %v4205
    %v5578 = vunpack.c.h.b16 %v4205
    %v5579 = vunpack.c.l.b16 %v4206
    %v5580 = vunpack.c.h.b16 %v4206
    %v5581 = vunpack.c.l.b16 %v4207
    %v5582 = vunpack.c.h.b16 %v4207
    %v5583 = vunpack.c.l.b16 %v4208
    %v5584 = vunpack.c.h.b16 %v4208
    %v5585 = vunpack.c.l.b16 %v4209
    %v5586 = vunpack.c.h.b16 %v4209
    %v5587 = vunpack.c.l.b16 %v4210
    %v5588 = vunpack.c.h.b16 %v4210
    %v5589 = vunpack.c.l.b16 %v4211
    %v5590 = vunpack.c.h.b16 %v4211
    %v5591 = vunpack.c.l.b16 %v4212
    %v5592 = vunpack.c.h.b16 %v4212
    %v5593 = vunpack.c.l.b16 %v4213
    %v5594 = vunpack.c.h.b16 %v4213
    %v5595 = vunpack.c.l.b16 %v4214
    %v5596 = vunpack.c.h.b16 %v4214
    %v5597 = vunpack.c.l.b16 %v4215
    %v5598 = vunpack.c.h.b16 %v4215
    %v5599 = vunpack.c.l.b16 %v4216
    %v5600 = vunpack.c.h.b16 %v4216
    %v5601 = vunpack.c.l.b16 %v4217
    %v5602 = vunpack.c.h.b16 %v4217
    %v5603 = vunpack.c.l.b16 %v4218
    %v5604 = vunpack.c.h.b16 %v4218
    %v5605 = vunpack.c.l.b16 %v4219
    %v5606 = vunpack.c.h.b16 %v4219
    %v5607 = vunpack.c.l.b16 %v4220
    %v5608 = vunpack.c.h.b16 %v4220
    %v5609 = vunpack.c.l.b16 %v4221
    %v5610 = vunpack.c.h.b16 %v4221
    %v5611 = vunpack.c.l.b16 %v4222
    %v5612 = vunpack.c.h.b16 %v4222
    %v5613 = vunpack.c.l.b16 %v4223
    %v5614 = vunpack.c.h.b16 %v4223
    %v5615 = vunpack.c.l.b16 %v4224
    %v5616 = vunpack.c.h.b16 %v4224
    %v5617 = vunpack.c.l.b16 %v4225
    %v5618 = vunpack.c.h.b16 %v4225
    %v5619 = vunpack.c.l.b16 %v4226
    %v5620 = vunpack.c.h.b16 %v4226
    %v5621 = vunpack.c.l.b16 %v4227
    %v5622 = vunpack.c.h.b16 %v4227
    %v5623 = vunpack.c.l.b16 %v4228
    %v5624 = vunpack.c.h.b16 %v4228
    %v5625 = vunpack.c.l.b16 %v4229
    %v5626 = vunpack.c.h.b16 %v4229
    %v5627 = vunpack.c.l.b16 %v4230
    %v5628 = vunpack.c.h.b16 %v4230
    %v5629 = vunpack.c.l.b16 %v4231
    %v5630 = vunpack.c.h.b16 %v4231
    %v5631 = vunpack.c.l.b16 %v4232
    %v5632 = vunpack.c.h.b16 %v4232
    %v5633 = vunpack.c.l.b16 %v4233
    %v5634 = vunpack.c.h.b16 %v4233
    %v5635 = vunpack.c.l.b16 %v4234
    %v5636 = vunpack.c.h.b16 %v4234
    %v5637 = vunpack.c.l.b16 %v4235
    %v5638 = vunpack.c.h.b16 %v4235
    %v5639 = vunpack.c.l.b16 %v4236
    %v5640 = vunpack.c.h.b16 %v4236
    %v5641 = vunpack.c.l.b16 %v4237
    %v5642 = vunpack.c.h.b16 %v4237
    %v5643 = vunpack.c.l.b16 %v4238
    %v5644 = vunpack.c.h.b16 %v4238
    %v5645 = vunpack.c.l.b16 %v4239
    %v5646 = vunpack.c.h.b16 %v4239
    %v5647 = vunpack.c.l.b16 %v4240
    %v5648 = vunpack.c.h.b16 %v4240
    %v5649 = vunpack.c.l.b16 %v4241
    %v5650 = vunpack.c.h.b16 %v4241
    %v5651 = vunpack.c.l.b16 %v4242
    %v5652 = vunpack.c.h.b16 %v4242
    %v5653 = vunpack.c.l.b16 %v4243
    %v5654 = vunpack.c.h.b16 %v4243
    %v5655 = vunpack.c.l.b16 %v4244
    %v5656 = vunpack.c.h.b16 %v4244
    %v5657 = vunpack.c.l.b16 %v4245
    %v5658 = vunpack.c.h.b16 %v4245
    %v5659 = vunpack.c.l.b16 %v4246
    %v5660 = vunpack.c.h.b16 %v4246
    %v5661 = vunpack.c.l.b16 %v4247
    %v5662 = vunpack.c.h.b16 %v4247
    %v5663 = vunpack.c.l.b16 %v4248
    %v5664 = vunpack.c.h.b16 %v4248
    %v5665 = vunpack.c.l.b16 %v4249
    %v5666 = vunpack.c.h.b16 %v4249
    %v5667 = vunpack.c.l.b16 %v4250
    %v5668 = vunpack.c.h.b16 %v4250
    %v5669 = vunpack.c.l.b16 %v4251
    %v5670 = vunpack.c.h.b16 %v4251
    %v5671 = vunpack.c.l.b16 %v4252
    %v5672 = vunpack.c.h.b16 %v4252
    %v5673 = vunpack.c.l.b16 %v4253
    %v5674 = vunpack.c.h.b16 %v4253
    %v5675 = vunpack.c.l.b16 %v4254
    %v5676 = vunpack.c.h.b16 %v4254
    %v5677 = vunpack.c.l.b16 %v4255
    %v5678 = vunpack.c.h.b16 %v4255
    %v5679 = vunpack.c.l.b16 %v4256
    %v5680 = vunpack.c.h.b16 %v4256
    %v5681 = vunpack.c.l.b16 %v4257
    %v5682 = vunpack.c.h.b16 %v4257
    %v5683 = vunpack.c.l.b16 %v4258
    %v5684 = vunpack.c.h.b16 %v4258
    %v5685 = vunpack.c.l.b16 %v4259
    %v5686 = vunpack.c.h.b16 %v4259
    %v5687 = vunpack.c.l.b16 %v4260
    %v5688 = vunpack.c.h.b16 %v4260
    %v5689 = vunpack.c.l.b16 %v4261
    %v5690 = vunpack.c.h.b16 %v4261
    %v5691 = vunpack.c.l.b16 %v4262
    %v5692 = vunpack.c.h.b16 %v4262
    %v5693 = vunpack.c.l.b16 %v4263
    %v5694 = vunpack.c.h.b16 %v4263
    %v5695 = vunpack.c.l.b16 %v4264
    %v5696 = vunpack.c.h.b16 %v4264
    %v5697 = vunpack.c.l.b16 %v4265
    %v5698 = vunpack.c.h.b16 %v4265
    %v5699 = vunpack.c.l.b16 %v4266
    %v5700 = vunpack.c.h.b16 %v4266
    %v5701 = vunpack.c.l.b16 %v4267
    %v5702 = vunpack.c.h.b16 %v4267
    %v5703 = vunpack.c.l.b16 %v4268
    %v5704 = vunpack.c.h.b16 %v4268
    %v5705 = vunpack.c.l.b16 %v4269
    %v5706 = vunpack.c.h.b16 %v4269
    %v5707 = vunpack.c.l.b16 %v4270
    %v5708 = vunpack.c.h.b16 %v4270
    %v5709 = vunpack.c.l.b16 %v4271
    %v5710 = vunpack.c.h.b16 %v4271
    %v5711 = vunpack.c.l.b16 %v4272
    %v5712 = vunpack.c.h.b16 %v4272
    %v5713 = vunpack.c.l.b16 %v4273
    %v5714 = vunpack.c.h.b16 %v4273
    %v5715 = vunpack.c.l.b16 %v4274
    %v5716 = vunpack.c.h.b16 %v4274
    %v5717 = vunpack.c.l.b16 %v4275
    %v5718 = vunpack.c.h.b16 %v4275
    %v5719 = vunpack.c.l.b16 %v4276
    %v5720 = vunpack.c.h.b16 %v4276
    %v5721 = vunpack.c.l.b16 %v4277
    %v5722 = vunpack.c.h.b16 %v4277
    %v5723 = vunpack.c.l.b16 %v4278
    %v5724 = vunpack.c.h.b16 %v4278
    %v5725 = vunpack.c.l.b16 %v4279
    %v5726 = vunpack.c.h.b16 %v4279
    %v5727 = vunpack.c.l.b16 %v4280
    %v5728 = vunpack.c.h.b16 %v4280
    %v5729 = vunpack.c.l.b16 %v4281
    %v5730 = vunpack.c.h.b16 %v4281
    %v5731 = vunpack.c.l.b16 %v4282
    %v5732 = vunpack.c.h.b16 %v4282
    %v5733 = vunpack.c.l.b16 %v4283
    %v5734 = vunpack.c.h.b16 %v4283
    %v5735 = vunpack.c.l.b16 %v4284
    %v5736 = vunpack.c.h.b16 %v4284
    %v5737 = vunpack.c.l.b16 %v4285
    %v5738 = vunpack.c.h.b16 %v4285
    %v5739 = vunpack.c.l.b16 %v4286
    %v5740 = vunpack.c.h.b16 %v4286
    %v5741 = vunpack.c.l.b16 %v4287
    %v5742 = vunpack.c.h.b16 %v4287
    %v5743 = vunpack.c.l.b16 %v4288
    %v5744 = vunpack.c.h.b16 %v4288
    %v5745 = vunpack.c.l.b16 %v4289
    %v5746 = vunpack.c.h.b16 %v4289
    %v5747 = vunpack.c.l.b16 %v4290
    %v5748 = vunpack.c.h.b16 %v4290
    %v5749 = vunpack.c.l.b16 %v4291
    %v5750 = vunpack.c.h.b16 %v4291
    %v5751 = vunpack.c.l.b16 %v4292
    %v5752 = vunpack.c.h.b16 %v4292
    %v5753 = vunpack.c.l.b16 %v4293
    %v5754 = vunpack.c.h.b16 %v4293
    %v5755 = vunpack.c.l.b16 %v4294
    %v5756 = vunpack.c.h.b16 %v4294
    %v5757 = vunpack.c.l.b16 %v4295
    %v5758 = vunpack.c.h.b16 %v4295
    %v5759 = vunpack.c.l.b16 %v4296
    %v5760 = vunpack.c.h.b16 %v4296
    %v5761 = vunpack.c.l.b16 %v4297
    %v5762 = vunpack.c.h.b16 %v4297
    %v5763 = vunpack.c.l.b16 %v4298
    %v5764 = vunpack.c.h.b16 %v4298
    %v5765 = vunpack.c.l.b16 %v4299
    %v5766 = vunpack.c.h.b16 %v4299
    %v5767 = vunpack.c.l.b16 %v4300
    %v5768 = vunpack.c.h.b16 %v4300
    %v5769 = vunpack.c.l.b16 %v4301
    %v5770 = vunpack.c.h.b16 %v4301
    %v5771 = vunpack.c.l.b16 %v4302
    %v5772 = vunpack.c.h.b16 %v4302
    %v5773 = vunpack.c.l.b16 %v4303
    %v5774 = vunpack.c.h.b16 %v4303
    %v5775 = vunpack.c.l.b16 %v4304
    %v5776 = vunpack.c.h.b16 %v4304
    %v5777 = vunpack.c.l.b16 %v4305
    %v5778 = vunpack.c.h.b16 %v4305
    %v5779 = vunpack.c.l.b16 %v4306
    %v5780 = vunpack.c.h.b16 %v4306
    %v5781 = vunpack.c.l.b16 %v4307
    %v5782 = vunpack.c.h.b16 %v4307
    %v5783 = vunpack.c.l.b16 %v4308
    %v5784 = vunpack.c.h.b16 %v4308
    %v5785 = vunpack.c.l.b16 %v4309
    %v5786 = vunpack.c.h.b16 %v4309
    %v5787 = vunpack.c.l.b16 %v4310
    %v5788 = vunpack.c.h.b16 %v4310
    %v5789 = vunpack.c.l.b16 %v4311
    %v5790 = vunpack.c.h.b16 %v4311
    %v5791 = vunpack.c.l.b16 %v4312
    %v5792 = vunpack.c.h.b16 %v4312
    %v5793 = vunpack.c.l.b16 %v4313
    %v5794 = vunpack.c.h.b16 %v4313
    %v5795 = vunpack.c.l.b16 %v4314
    %v5796 = vunpack.c.h.b16 %v4314
    %v5797 = vunpack.c.l.b16 %v4315
    %v5798 = vunpack.c.h.b16 %v4315
    %v5799 = vunpack.c.l.b16 %v4316
    %v5800 = vunpack.c.h.b16 %v4316
    %v5801 = vunpack.c.l.b16 %v4317
    %v5802 = vunpack.c.h.b16 %v4317
    %v5803 = vunpack.c.l.b16 %v4318
    %v5804 = vunpack.c.h.b16 %v4318
    %v5805 = vunpack.c.l.b16 %v4319
    %v5806 = vunpack.c.h.b16 %v4319
    %v5807 = vunpack.c.l.b16 %v4320
    %v5808 = vunpack.c.h.b16 %v4320
    %v5809 = vunpack.c.l.b16 %v4321
    %v5810 = vunpack.c.h.b16 %v4321
    %v5811 = vunpack.c.l.b16 %v4322
    %v5812 = vunpack.c.h.b16 %v4322
    %v5813 = vunpack.c.l.b16 %v4323
    %v5814 = vunpack.c.h.b16 %v4323
    %v5815 = vunpack.c.l.b16 %v4324
    %v5816 = vunpack.c.h.b16 %v4324
    %v5817 = vunpack.c.l.b16 %v4325
    %v5818 = vunpack.c.h.b16 %v4325
    %v5819 = vunpack.c.l.b16 %v4326
    %v5820 = vunpack.c.h.b16 %v4326
    %v5821 = vunpack.c.l.b16 %v4327
    %v5822 = vunpack.c.h.b16 %v4327
    %v5823 = vunpack.c.l.b16 %v4328
    %v5824 = vunpack.c.h.b16 %v4328
    %v5825 = vunpack.c.l.b16 %v4329
    %v5826 = vunpack.c.h.b16 %v4329
    %v5827 = vunpack.c.l.b16 %v4330
    %v5828 = vunpack.c.h.b16 %v4330
    %v5829 = vunpack.c.l.b16 %v4331
    %v5830 = vunpack.c.h.b16 %v4331
    %v5831 = vunpack.c.l.b16 %v4332
    %v5832 = vunpack.c.h.b16 %v4332
    %v5833 = vunpack.c.l.b16 %v4333
    %v5834 = vunpack.c.h.b16 %v4333
    %v5835 = vunpack.c.l.b16 %v4334
    %v5836 = vunpack.c.h.b16 %v4334
    %v5837 = vunpack.c.l.b16 %v4335
    %v5838 = vunpack.c.h.b16 %v4335
    %v5839 = vunpack.c.l.b16 %v4336
    %v5840 = vunpack.c.h.b16 %v4336
    %v5841 = vunpack.c.l.b16 %v4337
    %v5842 = vunpack.c.h.b16 %v4337
    %v5843 = vunpack.c.l.b16 %v4338
    %v5844 = vunpack.c.h.b16 %v4338
    %v5845 = vunpack.c.l.b16 %v4339
    %v5846 = vunpack.c.h.b16 %v4339
    %v5847 = vunpack.c.l.b16 %v4340
    %v5848 = vunpack.c.h.b16 %v4340
    %v5849 = vunpack.c.l.b16 %v4341
    %v5850 = vunpack.c.h.b16 %v4341
    %v5851 = vunpack.c.l.b16 %v4342
    %v5852 = vunpack.c.h.b16 %v4342
    %v5853 = vunpack.c.l.b16 %v4343
    %v5854 = vunpack.c.h.b16 %v4343
    %v5855 = vunpack.c.l.b16 %v4344
    %v5856 = vunpack.c.h.b16 %v4344
    %v5857 = vunpack.c.l.b16 %v4345
    %v5858 = vunpack.c.h.b16 %v4345
    %v5859 = vunpack.c.l.b16 %v4346
    %v5860 = vunpack.c.h.b16 %v4346
    %v5861 = vunpack.c.l.b16 %v4347
    %v5862 = vunpack.c.h.b16 %v4347
    %v5863 = vunpack.c.l.b16 %v4348
    %v5864 = vunpack.c.h.b16 %v4348
    %v5865 = vunpack.c.l.b16 %v4349
    %v5866 = vunpack.c.h.b16 %v4349
    %v5867 = vunpack.c.l.b16 %v4350
    %v5868 = vunpack.c.h.b16 %v4350
    %v5869 = vunpack.c.l.b16 %v4351
    %v5870 = vunpack.c.h.b16 %v4351
    %v5871 = vunpack.c.l.b16 %v4352
    %v5872 = vunpack.c.h.b16 %v4352
    %v5873 = vunpack.c.l.b16 %v4353
    %v5874 = vunpack.c.h.b16 %v4353
    %v5875 = vunpack.c.l.b16 %v4354
    %v5876 = vunpack.c.h.b16 %v4354
    %v5877 = vunpack.c.l.b16 %v4355
    %v5878 = vunpack.c.h.b16 %v4355
    %v5879 = vunpack.c.l.b16 %v4356
    %v5880 = vunpack.c.h.b16 %v4356
    %v5881 = vunpack.c.l.b16 %v4357
    %v5882 = vunpack.c.h.b16 %v4357
    %v5883 = vunpack.c.l.b16 %v4358
    %v5884 = vunpack.c.h.b16 %v4358
    %v5885 = vunpack.c.l.b16 %v4359
    %v5886 = vunpack.c.h.b16 %v4359
    %v5887 = vunpack.c.l.b16 %v4360
    %v5888 = vunpack.c.h.b16 %v4360
    %v5889 = vunpack.c.l.b16 %v4361
    %v5890 = vunpack.c.h.b16 %v4361
    %v5891 = vunpack.c.l.b16 %v4362
    %v5892 = vunpack.c.h.b16 %v4362
    %v5893 = vunpack.c.l.b16 %v4363
    %v5894 = vunpack.c.h.b16 %v4363
    %v5895 = vunpack.c.l.b16 %v4364
    %v5896 = vunpack.c.h.b16 %v4364
    %v5897 = vunpack.c.l.b16 %v4365
    %v5898 = vunpack.c.h.b16 %v4365
    %v5899 = vunpack.c.l.b16 %v4366
    %v5900 = vunpack.c.h.b16 %v4366
    %v5901 = vunpack.c.l.b16 %v4367
    %v5902 = vunpack.c.h.b16 %v4367
    %v5903 = vunpack.c.l.b16 %v4368
    %v5904 = vunpack.c.h.b16 %v4368
    %v5905 = vunpack.c.l.b16 %v4369
    %v5906 = vunpack.c.h.b16 %v4369
    %v5907 = vunpack.c.l.b16 %v4370
    %v5908 = vunpack.c.h.b16 %v4370
    %v5909 = vunpack.c.l.b16 %v4371
    %v5910 = vunpack.c.h.b16 %v4371
    %v5911 = vunpack.c.l.b16 %v4372
    %v5912 = vunpack.c.h.b16 %v4372
    %v5913 = vunpack.c.l.b16 %v4373
    %v5914 = vunpack.c.h.b16 %v4373
    %v5915 = vunpack.c.l.b16 %v4374
    %v5916 = vunpack.c.h.b16 %v4374
    %v5917 = vunpack.c.l.b16 %v4375
    %v5918 = vunpack.c.h.b16 %v4375
    %v5919 = vunpack.c.l.b16 %v4376
    %v5920 = vunpack.c.h.b16 %v4376
    %v5921 = vunpack.c.l.b16 %v4377
    %v5922 = vunpack.c.h.b16 %v4377
    %v5923 = vunpack.c.l.b16 %v4378
    %v5924 = vunpack.c.h.b16 %v4378
    %v5925 = vunpack.c.l.b16 %v4379
    %v5926 = vunpack.c.h.b16 %v4379
    %v5927 = vunpack.c.l.b16 %v4380
    %v5928 = vunpack.c.h.b16 %v4380
    %v5929 = vunpack.c.l.b16 %v4381
    %v5930 = vunpack.c.h.b16 %v4381
    %v5931 = vunpack.c.l.b16 %v4382
    %v5932 = vunpack.c.h.b16 %v4382
    %v5933 = vunpack.c.l.b16 %v4383
    %v5934 = vunpack.c.h.b16 %v4383
    %v5935 = vunpack.c.l.b16 %v4384
    %v5936 = vunpack.c.h.b16 %v4384
    %v5937 = vunpack.c.l.b16 %v4385
    %v5938 = vunpack.c.h.b16 %v4385
    %v5939 = vunpack.c.l.b16 %v4386
    %v5940 = vunpack.c.h.b16 %v4386
    %v5941 = vunpack.c.l.b16 %v4387
    %v5942 = vunpack.c.h.b16 %v4387
    %v5943 = vunpack.c.l.b16 %v4388
    %v5944 = vunpack.c.h.b16 %v4388
    %v5945 = vunpack.c.l.b16 %v4389
    %v5946 = vunpack.c.h.b16 %v4389
    %v5947 = vunpack.c.l.b16 %v4390
    %v5948 = vunpack.c.h.b16 %v4390
    %v5949 = vunpack.c.l.b16 %v4391
    %v5950 = vunpack.c.h.b16 %v4391
    %v5951 = vunpack.c.l.b16 %v4392
    %v5952 = vunpack.c.h.b16 %v4392
    %v5953 = vunpack.c.l.b16 %v4393
    %v5954 = vunpack.c.h.b16 %v4393
    %v5955 = vunpack.c.l.b16 %v4394
    %v5956 = vunpack.c.h.b16 %v4394
    %v5957 = vunpack.c.l.b16 %v4395
    %v5958 = vunpack.c.h.b16 %v4395
    %v5959 = vunpack.c.l.b16 %v4396
    %v5960 = vunpack.c.h.b16 %v4396
    %v5961 = vunpack.c.l.b16 %v4397
    %v5962 = vunpack.c.h.b16 %v4397
    %v5963 = vunpack.c.l.b16 %v4398
    %v5964 = vunpack.c.h.b16 %v4398
    %v5965 = vunpack.c.l.b16 %v4399
    %v5966 = vunpack.c.h.b16 %v4399
    %v5967 = vunpack.c.l.b16 %v4400
    %v5968 = vunpack.c.h.b16 %v4400
    %v5969 = vunpack.c.l.b16 %v4401
    %v5970 = vunpack.c.h.b16 %v4401
    %v5971 = vunpack.c.l.b16 %v4402
    %v5972 = vunpack.c.h.b16 %v4402
    %v5973 = vunpack.c.l.b16 %v4403
    %v5974 = vunpack.c.h.b16 %v4403
    %v5975 = vunpack.c.l.b16 %v4404
    %v5976 = vunpack.c.h.b16 %v4404
    %v5977 = vunpack.c.l.b16 %v4405
    %v5978 = vunpack.c.h.b16 %v4405
    %v5979 = vunpack.c.l.b16 %v4406
    %v5980 = vunpack.c.h.b16 %v4406
    %v5981 = vunpack.c.l.b16 %v4407
    %v5982 = vunpack.c.h.b16 %v4407
    %v5983 = vunpack.c.l.b16 %v4408
    %v5984 = vunpack.c.h.b16 %v4408
    %v5985 = vunpack.c.l.b16 %v4409
    %v5986 = vunpack.c.h.b16 %v4409
    %v5987 = vunpack.c.l.b16 %v4410
    %v5988 = vunpack.c.h.b16 %v4410
    %v5989 = vpack.c.b16 %v4973, %v4965
    %v5990 = vpack.c.b16 %v4974, %v4966
    %v5991 = vpack.c.b16 %v4975, %v4967
    %v5992 = vpack.c.b16 %v4976, %v4968
    %v5993 = vpack.c.b16 %v4977, %v4969
    %v5994 = vpack.c.b16 %v4978, %v4970
    %v5995 = vpack.c.b16 %v4979, %v4971
    %v5996 = vpack.c.b16 %v4980, %v4972
    %v5997 = vpack.c.b16 %v4989, %v4981
    %v5998 = vpack.c.b16 %v4990, %v4982
    %v5999 = vpack.c.b16 %v4991, %v4983
    %v6000 = vpack.c.b16 %v4992, %v4984
    %v6001 = vpack.c.b16 %v4993, %v4985
    %v6002 = vpack.c.b16 %v4994, %v4986
    %v6003 = vpack.c.b16 %v4995, %v4987
    %v6004 = vpack.c.b16 %v4996, %v4988
    %v6005 = vpack.c.b16 %v5005, %v4997
    %v6006 = vpack.c.b16 %v5006, %v4998
    %v6007 = vpack.c.b16 %v5007, %v4999
    %v6008 = vpack.c.b16 %v5008, %v5000
    %v6009 = vpack.c.b16 %v5009, %v5001
    %v6010 = vpack.c.b16 %v5010, %v5002
    %v6011 = vpack.c.b16 %v5011, %v5003
    %v6012 = vpack.c.b16 %v5012, %v5004
    %v6013 = vpack.c.b16 %v5021, %v5013
    %v6014 = vpack.c.b16 %v5022, %v5014
    %v6015 = vpack.c.b16 %v5023, %v5015
    %v6016 = vpack.c.b16 %v5024, %v5016
    %v6017 = vpack.c.b16 %v5025, %v5017
    %v6018 = vpack.c.b16 %v5026, %v5018
    %v6019 = vpack.c.b16 %v5027, %v5019
    %v6020 = vpack.c.b16 %v5028, %v5020
    %v6021 = vpack.c.b16 %v5037, %v5029
    %v6022 = vpack.c.b16 %v5038, %v5030
    %v6023 = vpack.c.b16 %v5039, %v5031
    %v6024 = vpack.c.b16 %v5040, %v5032
    %v6025 = vpack.c.b16 %v5041, %v5033
    %v6026 = vpack.c.b16 %v5042, %v5034
    %v6027 = vpack.c.b16 %v5043, %v5035
    %v6028 = vpack.c.b16 %v5044, %v5036
    %v6029 = vpack.c.b16 %v5053, %v5045
    %v6030 = vpack.c.b16 %v5054, %v5046
    %v6031 = vpack.c.b16 %v5055, %v5047
    %v6032 = vpack.c.b16 %v5056, %v5048
    %v6033 = vpack.c.b16 %v5057, %v5049
    %v6034 = vpack.c.b16 %v5058, %v5050
    %v6035 = vpack.c.b16 %v5059, %v5051
    %v6036 = vpack.c.b16 %v5060, %v5052
    %v6037 = vpack.c.b16 %v5069, %v5061
    %v6038 = vpack.c.b16 %v5070, %v5062
    %v6039 = vpack.c.b16 %v5071, %v5063
    %v6040 = vpack.c.b16 %v5072, %v5064
    %v6041 = vpack.c.b16 %v5073, %v5065
    %v6042 = vpack.c.b16 %v5074, %v5066
    %v6043 = vpack.c.b16 %v5075, %v5067
    %v6044 = vpack.c.b16 %v5076, %v5068
    %v6045 = vpack.c.b16 %v5085, %v5077
    %v6046 = vpack.c.b16 %v5086, %v5078
    %v6047 = vpack.c.b16 %v5087, %v5079
    %v6048 = vpack.c.b16 %v5088, %v5080
    %v6049 = vpack.c.b16 %v5089, %v5081
    %v6050 = vpack.c.b16 %v5090, %v5082
    %v6051 = vpack.c.b16 %v5091, %v5083
    %v6052 = vpack.c.b16 %v5092, %v5084
    %v6053 = vpack.c.b16 %v5101, %v5093
    %v6054 = vpack.c.b16 %v5102, %v5094
    %v6055 = vpack.c.b16 %v5103, %v5095
    %v6056 = vpack.c.b16 %v5104, %v5096
    %v6057 = vpack.c.b16 %v5105, %v5097
    %v6058 = vpack.c.b16 %v5106, %v5098
    %v6059 = vpack.c.b16 %v5107, %v5099
    %v6060 = vpack.c.b16 %v5108, %v5100
    %v6061 = vpack.c.b16 %v5117, %v5109
    %v6062 = vpack.c.b16 %v5118, %v5110
    %v6063 = vpack.c.b16 %v5119, %v5111
    %v6064 = vpack.c.b16 %v5120, %v5112
    %v6065 = vpack.c.b16 %v5121, %v5113
    %v6066 = vpack.c.b16 %v5122, %v5114
    %v6067 = vpack.c.b16 %v5123, %v5115
    %v6068 = vpack.c.b16 %v5124, %v5116
    %v6069 = vpack.c.b16 %v5133, %v5125
    %v6070 = vpack.c.b16 %v5134, %v5126
    %v6071 = vpack.c.b16 %v5135, %v5127
    %v6072 = vpack.c.b16 %v5136, %v5128
    %v6073 = vpack.c.b16 %v5137, %v5129
    %v6074 = vpack.c.b16 %v5138, %v5130
    %v6075 = vpack.c.b16 %v5139, %v5131
    %v6076 = vpack.c.b16 %v5140, %v5132
    %v6077 = vpack.c.b16 %v5149, %v5141
    %v6078 = vpack.c.b16 %v5150, %v5142
    %v6079 = vpack.c.b16 %v5151, %v5143
    %v6080 = vpack.c.b16 %v5152, %v5144
    %v6081 = vpack.c.b16 %v5153, %v5145
    %v6082 = vpack.c.b16 %v5154, %v5146
    %v6083 = vpack.c.b16 %v5155, %v5147
    %v6084 = vpack.c.b16 %v5156, %v5148
    %v6085 = vpack.c.b16 %v5165, %v5157
    %v6086 = vpack.c.b16 %v5166, %v5158
    %v6087 = vpack.c.b16 %v5167, %v5159
    %v6088 = vpack.c.b16 %v5168, %v5160
    %v6089 = vpack.c.b16 %v5169, %v5161
    %v6090 = vpack.c.b16 %v5170, %v5162
    %v6091 = vpack.c.b16 %v5171, %v5163
    %v6092 = vpack.c.b16 %v5172, %v5164
    %v6093 = vpack.c.b16 %v5181, %v5173
    %v6094 = vpack.c.b16 %v5182, %v5174
    %v6095 = vpack.c.b16 %v5183, %v5175
    %v6096 = vpack.c.b16 %v5184, %v5176
    %v6097 = vpack.c.b16 %v5185, %v5177
    %v6098 = vpack.c.b16 %v5186, %v5178
    %v6099 = vpack.c.b16 %v5187, %v5179
    %v6100 = vpack.c.b16 %v5188, %v5180
    %v6101 = vpack.c.b16 %v5197, %v5189
    %v6102 = vpack.c.b16 %v5198, %v5190
    %v6103 = vpack.c.b16 %v5199, %v5191
    %v6104 = vpack.c.b16 %v5200, %v5192
    %v6105 = vpack.c.b16 %v5201, %v5193
    %v6106 = vpack.c.b16 %v5202, %v5194
    %v6107 = vpack.c.b16 %v5203, %v5195
    %v6108 = vpack.c.b16 %v5204, %v5196
    %v6109 = vpack.c.b16 %v5213, %v5205
    %v6110 = vpack.c.b16 %v5214, %v5206
    %v6111 = vpack.c.b16 %v5215, %v5207
    %v6112 = vpack.c.b16 %v5216, %v5208
    %v6113 = vpack.c.b16 %v5217, %v5209
    %v6114 = vpack.c.b16 %v5218, %v5210
    %v6115 = vpack.c.b16 %v5219, %v5211
    %v6116 = vpack.c.b16 %v5220, %v5212
    %v6117 = vpack.c.b16 %v5229, %v5221
    %v6118 = vpack.c.b16 %v5230, %v5222
    %v6119 = vpack.c.b16 %v5231, %v5223
    %v6120 = vpack.c.b16 %v5232, %v5224
    %v6121 = vpack.c.b16 %v5233, %v5225
    %v6122 = vpack.c.b16 %v5234, %v5226
    %v6123 = vpack.c.b16 %v5235, %v5227
    %v6124 = vpack.c.b16 %v5236, %v5228
    %v6125 = vpack.c.b16 %v5245, %v5237
    %v6126 = vpack.c.b16 %v5246, %v5238
    %v6127 = vpack.c.b16 %v5247, %v5239
    %v6128 = vpack.c.b16 %v5248, %v5240
    %v6129 = vpack.c.b16 %v5249, %v5241
    %v6130 = vpack.c.b16 %v5250, %v5242
    %v6131 = vpack.c.b16 %v5251, %v5243
    %v6132 = vpack.c.b16 %v5252, %v5244
    %v6133 = vpack.c.b16 %v5261, %v5253
    %v6134 = vpack.c.b16 %v5262, %v5254
    %v6135 = vpack.c.b16 %v5263, %v5255
    %v6136 = vpack.c.b16 %v5264, %v5256
    %v6137 = vpack.c.b16 %v5265, %v5257
    %v6138 = vpack.c.b16 %v5266, %v5258
    %v6139 = vpack.c.b16 %v5267, %v5259
    %v6140 = vpack.c.b16 %v5268, %v5260
    %v6141 = vpack.c.b16 %v5277, %v5269
    %v6142 = vpack.c.b16 %v5278, %v5270
    %v6143 = vpack.c.b16 %v5279, %v5271
    %v6144 = vpack.c.b16 %v5280, %v5272
    %v6145 = vpack.c.b16 %v5281, %v5273
    %v6146 = vpack.c.b16 %v5282, %v5274
    %v6147 = vpack.c.b16 %v5283, %v5275
    %v6148 = vpack.c.b16 %v5284, %v5276
    %v6149 = vpack.c.b16 %v5293, %v5285
    %v6150 = vpack.c.b16 %v5294, %v5286
    %v6151 = vpack.c.b16 %v5295, %v5287
    %v6152 = vpack.c.b16 %v5296, %v5288
    %v6153 = vpack.c.b16 %v5297, %v5289
    %v6154 = vpack.c.b16 %v5298, %v5290
    %v6155 = vpack.c.b16 %v5299, %v5291
    %v6156 = vpack.c.b16 %v5300, %v5292
    %v6157 = vpack.c.b16 %v5309, %v5301
    %v6158 = vpack.c.b16 %v5310, %v5302
    %v6159 = vpack.c.b16 %v5311, %v5303
    %v6160 = vpack.c.b16 %v5312, %v5304
    %v6161 = vpack.c.b16 %v5313, %v5305
    %v6162 = vpack.c.b16 %v5314, %v5306
    %v6163 = vpack.c.b16 %v5315, %v5307
    %v6164 = vpack.c.b16 %v5316, %v5308
    %v6165 = vpack.c.b16 %v5325, %v5317
    %v6166 = vpack.c.b16 %v5326, %v5318
    %v6167 = vpack.c.b16 %v5327, %v5319
    %v6168 = vpack.c.b16 %v5328, %v5320
    %v6169 = vpack.c.b16 %v5329, %v5321
    %v6170 = vpack.c.b16 %v5330, %v5322
    %v6171 = vpack.c.b16 %v5331, %v5323
    %v6172 = vpack.c.b16 %v5332, %v5324
    %v6173 = vpack.c.b16 %v5341, %v5333
    %v6174 = vpack.c.b16 %v5342, %v5334
    %v6175 = vpack.c.b16 %v5343, %v5335
    %v6176 = vpack.c.b16 %v5344, %v5336
    %v6177 = vpack.c.b16 %v5345, %v5337
    %v6178 = vpack.c.b16 %v5346, %v5338
    %v6179 = vpack.c.b16 %v5347, %v5339
    %v6180 = vpack.c.b16 %v5348, %v5340
    %v6181 = vpack.c.b16 %v5357, %v5349
    %v6182 = vpack.c.b16 %v5358, %v5350
    %v6183 = vpack.c.b16 %v5359, %v5351
    %v6184 = vpack.c.b16 %v5360, %v5352
    %v6185 = vpack.c.b16 %v5361, %v5353
    %v6186 = vpack.c.b16 %v5362, %v5354
    %v6187 = vpack.c.b16 %v5363, %v5355
    %v6188 = vpack.c.b16 %v5364, %v5356
    %v6189 = vpack.c.b16 %v5373, %v5365
    %v6190 = vpack.c.b16 %v5374, %v5366
    %v6191 = vpack.c.b16 %v5375, %v5367
    %v6192 = vpack.c.b16 %v5376, %v5368
    %v6193 = vpack.c.b16 %v5377, %v5369
    %v6194 = vpack.c.b16 %v5378, %v5370
    %v6195 = vpack.c.b16 %v5379, %v5371
    %v6196 = vpack.c.b16 %v5380, %v5372
    %v6197 = vpack.c.b16 %v5389, %v5381
    %v6198 = vpack.c.b16 %v5390, %v5382
    %v6199 = vpack.c.b16 %v5391, %v5383
    %v6200 = vpack.c.b16 %v5392, %v5384
    %v6201 = vpack.c.b16 %v5393, %v5385
    %v6202 = vpack.c.b16 %v5394, %v5386
    %v6203 = vpack.c.b16 %v5395, %v5387
    %v6204 = vpack.c.b16 %v5396, %v5388
    %v6205 = vpack.c.b16 %v5405, %v5397
    %v6206 = vpack.c.b16 %v5406, %v5398
    %v6207 = vpack.c.b16 %v5407, %v5399
    %v6208 = vpack.c.b16 %v5408, %v5400
    %v6209 = vpack.c.b16 %v5409, %v5401
    %v6210 = vpack.c.b16 %v5410, %v5402
    %v6211 = vpack.c.b16 %v5411, %v5403
    %v6212 = vpack.c.b16 %v5412, %v5404
    %v6213 = vpack.c.b16 %v5421, %v5413
    %v6214 = vpack.c.b16 %v5422, %v5414
    %v6215 = vpack.c.b16 %v5423, %v5415
    %v6216 = vpack.c.b16 %v5424, %v5416
    %v6217 = vpack.c.b16 %v5425, %v5417
    %v6218 = vpack.c.b16 %v5426, %v5418
    %v6219 = vpack.c.b16 %v5427, %v5419
    %v6220 = vpack.c.b16 %v5428, %v5420
    %v6221 = vpack.c.b16 %v5437, %v5429
    %v6222 = vpack.c.b16 %v5438, %v5430
    %v6223 = vpack.c.b16 %v5439, %v5431
    %v6224 = vpack.c.b16 %v5440, %v5432
    %v6225 = vpack.c.b16 %v5441, %v5433
    %v6226 = vpack.c.b16 %v5442, %v5434
    %v6227 = vpack.c.b16 %v5443, %v5435
    %v6228 = vpack.c.b16 %v5444, %v5436
    %v6229 = vpack.c.b16 %v5453, %v5445
    %v6230 = vpack.c.b16 %v5454, %v5446
    %v6231 = vpack.c.b16 %v5455, %v5447
    %v6232 = vpack.c.b16 %v5456, %v5448
    %v6233 = vpack.c.b16 %v5457, %v5449
    %v6234 = vpack.c.b16 %v5458, %v5450
    %v6235 = vpack.c.b16 %v5459, %v5451
    %v6236 = vpack.c.b16 %v5460, %v5452
    %v6237 = vpack.c.b16 %v5469, %v5461
    %v6238 = vpack.c.b16 %v5470, %v5462
    %v6239 = vpack.c.b16 %v5471, %v5463
    %v6240 = vpack.c.b16 %v5472, %v5464
    %v6241 = vpack.c.b16 %v5473, %v5465
    %v6242 = vpack.c.b16 %v5474, %v5466
    %v6243 = vpack.c.b16 %v5475, %v5467
    %v6244 = vpack.c.b16 %v5476, %v5468
    %v6245 = vpack.c.b16 %v5485, %v5477
    %v6246 = vpack.c.b16 %v5486, %v5478
    %v6247 = vpack.c.b16 %v5487, %v5479
    %v6248 = vpack.c.b16 %v5488, %v5480
    %v6249 = vpack.c.b16 %v5489, %v5481
    %v6250 = vpack.c.b16 %v5490, %v5482
    %v6251 = vpack.c.b16 %v5491, %v5483
    %v6252 = vpack.c.b16 %v5492, %v5484
    %v6253 = vpack.c.b16 %v5501, %v5493
    %v6254 = vpack.c.b16 %v5502, %v5494
    %v6255 = vpack.c.b16 %v5503, %v5495
    %v6256 = vpack.c.b16 %v5504, %v5496
    %v6257 = vpack.c.b16 %v5505, %v5497
    %v6258 = vpack.c.b16 %v5506, %v5498
    %v6259 = vpack.c.b16 %v5507, %v5499
    %v6260 = vpack.c.b16 %v5508, %v5500
    %v6261 = vpack.c.b16 %v5517, %v5509
    %v6262 = vpack.c.b16 %v5518, %v5510
    %v6263 = vpack.c.b16 %v5519, %v5511
    %v6264 = vpack.c.b16 %v5520, %v5512
    %v6265 = vpack.c.b16 %v5521, %v5513
    %v6266 = vpack.c.b16 %v5522, %v5514
    %v6267 = vpack.c.b16 %v5523, %v5515
    %v6268 = vpack.c.b16 %v5524, %v5516
    %v6269 = vpack.c.b16 %v5533, %v5525
    %v6270 = vpack.c.b16 %v5534, %v5526
    %v6271 = vpack.c.b16 %v5535, %v5527
    %v6272 = vpack.c.b16 %v5536, %v5528
    %v6273 = vpack.c.b16 %v5537, %v5529
    %v6274 = vpack.c.b16 %v5538, %v5530
    %v6275 = vpack.c.b16 %v5539, %v5531
    %v6276 = vpack.c.b16 %v5540, %v5532
    %v6277 = vpack.c.b16 %v5549, %v5541
    %v6278 = vpack.c.b16 %v5550, %v5542
    %v6279 = vpack.c.b16 %v5551, %v5543
    %v6280 = vpack.c.b16 %v5552, %v5544
    %v6281 = vpack.c.b16 %v5553, %v5545
    %v6282 = vpack.c.b16 %v5554, %v5546
    %v6283 = vpack.c.b16 %v5555, %v5547
    %v6284 = vpack.c.b16 %v5556, %v5548
    %v6285 = vpack.c.b16 %v5565, %v5557
    %v6286 = vpack.c.b16 %v5566, %v5558
    %v6287 = vpack.c.b16 %v5567, %v5559
    %v6288 = vpack.c.b16 %v5568, %v5560
    %v6289 = vpack.c.b16 %v5569, %v5561
    %v6290 = vpack.c.b16 %v5570, %v5562
    %v6291 = vpack.c.b16 %v5571, %v5563
    %v6292 = vpack.c.b16 %v5572, %v5564
    %v6293 = vpack.c.b16 %v5581, %v5573
    %v6294 = vpack.c.b16 %v5582, %v5574
    %v6295 = vpack.c.b16 %v5583, %v5575
    %v6296 = vpack.c.b16 %v5584, %v5576
    %v6297 = vpack.c.b16 %v5585, %v5577
    %v6298 = vpack.c.b16 %v5586, %v5578
    %v6299 = vpack.c.b16 %v5587, %v5579
    %v6300 = vpack.c.b16 %v5588, %v5580
    %v6301 = vpack.c.b16 %v5597, %v5589
    %v6302 = vpack.c.b16 %v5598, %v5590
    %v6303 = vpack.c.b16 %v5599, %v5591
    %v6304 = vpack.c.b16 %v5600, %v5592
    %v6305 = vpack.c.b16 %v5601, %v5593
    %v6306 = vpack.c.b16 %v5602, %v5594
    %v6307 = vpack.c.b16 %v5603, %v5595
    %v6308 = vpack.c.b16 %v5604, %v5596
    %v6309 = vpack.c.b16 %v5613, %v5605
    %v6310 = vpack.c.b16 %v5614, %v5606
    %v6311 = vpack.c.b16 %v5615, %v5607
    %v6312 = vpack.c.b16 %v5616, %v5608
    %v6313 = vpack.c.b16 %v5617, %v5609
    %v6314 = vpack.c.b16 %v5618, %v5610
    %v6315 = vpack.c.b16 %v5619, %v5611
    %v6316 = vpack.c.b16 %v5620, %v5612
    %v6317 = vpack.c.b16 %v5629, %v5621
    %v6318 = vpack.c.b16 %v5630, %v5622
    %v6319 = vpack.c.b16 %v5631, %v5623
    %v6320 = vpack.c.b16 %v5632, %v5624
    %v6321 = vpack.c.b16 %v5633, %v5625
    %v6322 = vpack.c.b16 %v5634, %v5626
    %v6323 = vpack.c.b16 %v5635, %v5627
    %v6324 = vpack.c.b16 %v5636, %v5628
    %v6325 = vpack.c.b16 %v5645, %v5637
    %v6326 = vpack.c.b16 %v5646, %v5638
    %v6327 = vpack.c.b16 %v5647, %v5639
    %v6328 = vpack.c.b16 %v5648, %v5640
    %v6329 = vpack.c.b16 %v5649, %v5641
    %v6330 = vpack.c.b16 %v5650, %v5642
    %v6331 = vpack.c.b16 %v5651, %v5643
    %v6332 = vpack.c.b16 %v5652, %v5644
    %v6333 = vpack.c.b16 %v5661, %v5653
    %v6334 = vpack.c.b16 %v5662, %v5654
    %v6335 = vpack.c.b16 %v5663, %v5655
    %v6336 = vpack.c.b16 %v5664, %v5656
    %v6337 = vpack.c.b16 %v5665, %v5657
    %v6338 = vpack.c.b16 %v5666, %v5658
    %v6339 = vpack.c.b16 %v5667, %v5659
    %v6340 = vpack.c.b16 %v5668, %v5660
    %v6341 = vpack.c.b16 %v5677, %v5669
    %v6342 = vpack.c.b16 %v5678, %v5670
    %v6343 = vpack.c.b16 %v5679, %v5671
    %v6344 = vpack.c.b16 %v5680, %v5672
    %v6345 = vpack.c.b16 %v5681, %v5673
    %v6346 = vpack.c.b16 %v5682, %v5674
    %v6347 = vpack.c.b16 %v5683, %v5675
    %v6348 = vpack.c.b16 %v5684, %v5676
    %v6349 = vpack.c.b16 %v5693, %v5685
    %v6350 = vpack.c.b16 %v5694, %v5686
    %v6351 = vpack.c.b16 %v5695, %v5687
    %v6352 = vpack.c.b16 %v5696, %v5688
    %v6353 = vpack.c.b16 %v5697, %v5689
    %v6354 = vpack.c.b16 %v5698, %v5690
    %v6355 = vpack.c.b16 %v5699, %v5691
    %v6356 = vpack.c.b16 %v5700, %v5692
    %v6357 = vpack.c.b16 %v5709, %v5701
    %v6358 = vpack.c.b16 %v5710, %v5702
    %v6359 = vpack.c.b16 %v5711, %v5703
    %v6360 = vpack.c.b16 %v5712, %v5704
    %v6361 = vpack.c.b16 %v5713, %v5705
    %v6362 = vpack.c.b16 %v5714, %v5706
    %v6363 = vpack.c.b16 %v5715, %v5707
    %v6364 = vpack.c.b16 %v5716, %v5708
    %v6365 = vpack.c.b16 %v5725, %v5717
    %v6366 = vpack.c.b16 %v5726, %v5718
    %v6367 = vpack.c.b16 %v5727, %v5719
    %v6368 = vpack.c.b16 %v5728, %v5720
    %v6369 = vpack.c.b16 %v5729, %v5721
    %v6370 = vpack.c.b16 %v5730, %v5722
    %v6371 = vpack.c.b16 %v5731, %v5723
    %v6372 = vpack.c.b16 %v5732, %v5724
    %v6373 = vpack.c.b16 %v5741, %v5733
    %v6374 = vpack.c.b16 %v5742, %v5734
    %v6375 = vpack.c.b16 %v5743, %v5735
    %v6376 = vpack.c.b16 %v5744, %v5736
    %v6377 = vpack.c.b16 %v5745, %v5737
    %v6378 = vpack.c.b16 %v5746, %v5738
    %v6379 = vpack.c.b16 %v5747, %v5739
    %v6380 = vpack.c.b16 %v5748, %v5740
    %v6381 = vpack.c.b16 %v5757, %v5749
    %v6382 = vpack.c.b16 %v5758, %v5750
    %v6383 = vpack.c.b16 %v5759, %v5751
    %v6384 = vpack.c.b16 %v5760, %v5752
    %v6385 = vpack.c.b16 %v5761, %v5753
    %v6386 = vpack.c.b16 %v5762, %v5754
    %v6387 = vpack.c.b16 %v5763, %v5755
    %v6388 = vpack.c.b16 %v5764, %v5756
    %v6389 = vpack.c.b16 %v5773, %v5765
    %v6390 = vpack.c.b16 %v5774, %v5766
    %v6391 = vpack.c.b16 %v5775, %v5767
    %v6392 = vpack.c.b16 %v5776, %v5768
    %v6393 = vpack.c.b16 %v5777, %v5769
    %v6394 = vpack.c.b16 %v5778, %v5770
    %v6395 = vpack.c.b16 %v5779, %v5771
    %v6396 = vpack.c.b16 %v5780, %v5772
    %v6397 = vpack.c.b16 %v5789, %v5781
    %v6398 = vpack.c.b16 %v5790, %v5782
    %v6399 = vpack.c.b16 %v5791, %v5783
    %v6400 = vpack.c.b16 %v5792, %v5784
    %v6401 = vpack.c.b16 %v5793, %v5785
    %v6402 = vpack.c.b16 %v5794, %v5786
    %v6403 = vpack.c.b16 %v5795, %v5787
    %v6404 = vpack.c.b16 %v5796, %v5788
    %v6405 = vpack.c.b16 %v5805, %v5797
    %v6406 = vpack.c.b16 %v5806, %v5798
    %v6407 = vpack.c.b16 %v5807, %v5799
    %v6408 = vpack.c.b16 %v5808, %v5800
    %v6409 = vpack.c.b16 %v5809, %v5801
    %v6410 = vpack.c.b16 %v5810, %v5802
    %v6411 = vpack.c.b16 %v5811, %v5803
    %v6412 = vpack.c.b16 %v5812, %v5804
    %v6413 = vpack.c.b16 %v5821, %v5813
    %v6414 = vpack.c.b16 %v5822, %v5814
    %v6415 = vpack.c.b16 %v5823, %v5815
    %v6416 = vpack.c.b16 %v5824, %v5816
    %v6417 = vpack.c.b16 %v5825, %v5817
    %v6418 = vpack.c.b16 %v5826, %v5818
    %v6419 = vpack.c.b16 %v5827, %v5819
    %v6420 = vpack.c.b16 %v5828, %v5820
    %v6421 = vpack.c.b16 %v5837, %v5829
    %v6422 = vpack.c.b16 %v5838, %v5830
    %v6423 = vpack.c.b16 %v5839, %v5831
    %v6424 = vpack.c.b16 %v5840, %v5832
    %v6425 = vpack.c.b16 %v5841, %v5833
    %v6426 = vpack.c.b16 %v5842, %v5834
    %v6427 = vpack.c.b16 %v5843, %v5835
    %v6428 = vpack.c.b16 %v5844, %v5836
    %v6429 = vpack.c.b16 %v5853, %v5845
    %v6430 = vpack.c.b16 %v5854, %v5846
    %v6431 = vpack.c.b16 %v5855, %v5847
    %v6432 = vpack.c.b16 %v5856, %v5848
    %v6433 = vpack.c.b16 %v5857, %v5849
    %v6434 = vpack.c.b16 %v5858, %v5850
    %v6435 = vpack.c.b16 %v5859, %v5851
    %v6436 = vpack.c.b16 %v5860, %v5852
    %v6437 = vpack.c.b16 %v5869, %v5861
    %v6438 = vpack.c.b16 %v5870, %v5862
    %v6439 = vpack.c.b16 %v5871, %v5863
    %v6440 = vpack.c.b16 %v5872, %v5864
    %v6441 = vpack.c.b16 %v5873, %v5865
    %v6442 = vpack.c.b16 %v5874, %v5866
    %v6443 = vpack.c.b16 %v5875, %v5867
    %v6444 = vpack.c.b16 %v5876, %v5868
    %v6445 = vpack.c.b16 %v5885, %v5877
    %v6446 = vpack.c.b16 %v5886, %v5878
    %v6447 = vpack.c.b16 %v5887, %v5879
    %v6448 = vpack.c.b16 %v5888, %v5880
    %v6449 = vpack.c.b16 %v5889, %v5881
    %v6450 = vpack.c.b16 %v5890, %v5882
    %v6451 = vpack.c.b16 %v5891, %v5883
    %v6452 = vpack.c.b16 %v5892, %v5884
    %v6453 = vpack.c.b16 %v5901, %v5893
    %v6454 = vpack.c.b16 %v5902, %v5894
    %v6455 = vpack.c.b16 %v5903, %v5895
    %v6456 = vpack.c.b16 %v5904, %v5896
    %v6457 = vpack.c.b16 %v5905, %v5897
    %v6458 = vpack.c.b16 %v5906, %v5898
    %v6459 = vpack.c.b16 %v5907, %v5899
    %v6460 = vpack.c.b16 %v5908, %v5900
    %v6461 = vpack.c.b16 %v5917, %v5909
    %v6462 = vpack.c.b16 %v5918, %v5910
    %v6463 = vpack.c.b16 %v5919, %v5911
    %v6464 = vpack.c.b16 %v5920, %v5912
    %v6465 = vpack.c.b16 %v5921, %v5913
    %v6466 = vpack.c.b16 %v5922, %v5914
    %v6467 = vpack.c.b16 %v5923, %v5915
    %v6468 = vpack.c.b16 %v5924, %v5916
    %v6469 = vpack.c.b16 %v5933, %v5925
    %v6470 = vpack.c.b16 %v5934, %v5926
    %v6471 = vpack.c.b16 %v5935, %v5927
    %v6472 = vpack.c.b16 %v5936, %v5928
    %v6473 = vpack.c.b16 %v5937, %v5929
    %v6474 = vpack.c.b16 %v5938, %v5930
    %v6475 = vpack.c.b16 %v5939, %v5931
    %v6476 = vpack.c.b16 %v5940, %v5932
    %v6477 = vpack.c.b16 %v5949, %v5941
    %v6478 = vpack.c.b16 %v5950, %v5942
    %v6479 = vpack.c.b16 %v5951, %v5943
    %v6480 = vpack.c.b16 %v5952, %v5944
    %v6481 = vpack.c.b16 %v5953, %v5945
    %v6482 = vpack.c.b16 %v5954, %v5946
    %v6483 = vpack.c.b16 %v5955, %v5947
    %v6484 = vpack.c.b16 %v5956, %v5948
    %v6485 = vpack.c.b16 %v5965, %v5957
    %v6486 = vpack.c.b16 %v5966, %v5958
    %v6487 = vpack.c.b16 %v5967, %v5959
    %v6488 = vpack.c.b16 %v5968, %v5960
    %v6489 = vpack.c.b16 %v5969, %v5961
    %v6490 = vpack.c.b16 %v5970, %v5962
    %v6491 = vpack.c.b16 %v5971, %v5963
    %v6492 = vpack.c.b16 %v5972, %v5964
    %v6493 = vpack.c.b16 %v5981, %v5973
    %v6494 = vpack.c.b16 %v5982, %v5974
    %v6495 = vpack.c.b16 %v5983, %v5975
    %v6496 = vpack.c.b16 %v5984, %v5976
    %v6497 = vpack.c.b16 %v5985, %v5977
    %v6498 = vpack.c.b16 %v5986, %v5978
    %v6499 = vpack.c.b16 %v5987, %v5979
    %v6500 = vpack.c.b16 %v5988, %v5980
    %7013 = vmatprep.subr.bf16.mxu0 %v5990
    %7014 = vmatpush1.bf16.msra.mxu0 %v5989
    %7015 = vmatprep.subr.bf16.mxu0 %v5998
    %7016 = vmatpush1.bf16.msra.mxu0 %v5997
    %7017 = vmatprep.subr.bf16.mxu0 %v6006
    %7018 = vmatpush1.bf16.msra.mxu0 %v6005
    %7019 = vmatprep.subr.bf16.mxu0 %v6014
    %7020 = vmatpush1.bf16.msra.mxu0 %v6013
    %7021 = vmatprep.subr.bf16.mxu0 %v6022
    %7022 = vmatpush1.bf16.msra.mxu0 %v6021
    %7023 = vmatprep.subr.bf16.mxu0 %v6030
    %7024 = vmatpush1.bf16.msra.mxu0 %v6029
    %7025 = vmatprep.subr.bf16.mxu0 %v6038
    %7026 = vmatpush1.bf16.msra.mxu0 %v6037
    %7027 = vmatprep.subr.bf16.mxu0 %v6046
    %7028 = vmatpush1.bf16.msra.mxu0 %v6045
    %7029 = vmatprep.subr.bf16.mxu0 %v6054
    %7030 = vmatpush1.bf16.msra.mxu0 %v6053
    %7031 = vmatprep.subr.bf16.mxu0 %v6062
    %7032 = vmatpush1.bf16.msra.mxu0 %v6061
    %7033 = vmatprep.subr.bf16.mxu0 %v6070
    %7034 = vmatpush1.bf16.msra.mxu0 %v6069
    %7035 = vmatprep.subr.bf16.mxu0 %v6078
    %7036 = vmatpush1.bf16.msra.mxu0 %v6077
    %7037 = vmatprep.subr.bf16.mxu0 %v6086
    %7038 = vmatpush1.bf16.msra.mxu0 %v6085
    %7039 = vmatprep.subr.bf16.mxu0 %v6094
    %7040 = vmatpush1.bf16.msra.mxu0 %v6093
    %7041 = vmatprep.subr.bf16.mxu0 %v6102
    %7042 = vmatpush1.bf16.msra.mxu0 %v6101
    %7043 = vmatprep.subr.bf16.mxu0 %v6110
    %7044 = vmatpush1.bf16.msra.mxu0 %v6109
    %7045 = vmatprep.mubr.bf16.mxu0 %v3892
    %7046 = vmatmul.mubr.bf16.gmra.mrb[0].mxu0 %v3891
    %v7047 = vpop.f32.mrb[0].mxu0
    %v7048 = vadd.f32 %v4416, %v7047
    %v7049 = vpop.f32.mrb[0].mxu0
    %v7050 = vadd.f32 %v4420, %v7049
    %v7051 = vpop.f32.mrb[0].mxu0
    %v7052 = vpop.f32.mrb[0].mxu0
    %7053 = vdwg.mxu0
    %7054 = vmatprep.subr.bf16.mxu0 %v6118
    %7055 = vmatpush1.bf16.msra.mxu0 %v6117
    %7056 = vmatprep.subr.bf16.mxu0 %v6126
    %7057 = vmatpush1.bf16.msra.mxu0 %v6125
    %7058 = vmatprep.subr.bf16.mxu0 %v6134
    %7059 = vmatpush1.bf16.msra.mxu0 %v6133
    %7060 = vmatprep.subr.bf16.mxu0 %v6142
    %7061 = vmatpush1.bf16.msra.mxu0 %v6141
    %7062 = vmatprep.subr.bf16.mxu0 %v6150
    %7063 = vmatpush1.bf16.msra.mxu0 %v6149
    %7064 = vmatprep.subr.bf16.mxu0 %v6158
    %7065 = vmatpush1.bf16.msra.mxu0 %v6157
    %7066 = vmatprep.subr.bf16.mxu0 %v6166
    %7067 = vmatpush1.bf16.msra.mxu0 %v6165
    %7068 = vmatprep.subr.bf16.mxu0 %v6174
    %7069 = vmatpush1.bf16.msra.mxu0 %v6173
    %7070 = vmatprep.subr.bf16.mxu0 %v6182
    %7071 = vmatpush1.bf16.msra.mxu0 %v6181
    %7072 = vmatprep.subr.bf16.mxu0 %v6190
    %7073 = vmatpush1.bf16.msra.mxu0 %v6189
    %7074 = vmatprep.subr.bf16.mxu0 %v6198
    %7075 = vmatpush1.bf16.msra.mxu0 %v6197
    %7076 = vmatprep.subr.bf16.mxu0 %v6206
    %7077 = vmatpush1.bf16.msra.mxu0 %v6205
    %7078 = vmatprep.subr.bf16.mxu0 %v6214
    %7079 = vmatpush1.bf16.msra.mxu0 %v6213
    %7080 = vmatprep.subr.bf16.mxu0 %v6222
    %7081 = vmatpush1.bf16.msra.mxu0 %v6221
    %7082 = vmatprep.subr.bf16.mxu0 %v6230
    %7083 = vmatpush1.bf16.msra.mxu0 %v6229
    %7084 = vmatprep.subr.bf16.mxu0 %v6238
    %7085 = vmatpush1.bf16.msra.mxu0 %v6237
    %7086 = vmatprep.mubr.bf16.mxu0 %v3894
    %7087 = vmatmul.mubr.bf16.gmra.mrb[0].mxu0 %v3893
    %v7088 = vpop.f32.mrb[0].mxu0
    %v7089 = vadd.f32 %v7048, %v7088
    %v7090 = vpop.f32.mrb[0].mxu0
    %v7091 = vadd.f32 %v7050, %v7090
    %v7092 = vpop.f32.mrb[0].mxu0
    %v7093 = vpop.f32.mrb[0].mxu0
    %7094 = vdwg.mxu0
    %7095 = vmatprep.subr.bf16.mxu0 %v6246
    %7096 = vmatpush1.bf16.msra.mxu0 %v6245
    %7097 = vmatprep.subr.bf16.mxu0 %v6254
    %7098 = vmatpush1.bf16.msra.mxu0 %v6253
    %7099 = vmatprep.subr.bf16.mxu0 %v6262
    %7100 = vmatpush1.bf16.msra.mxu0 %v6261
    %7101 = vmatprep.subr.bf16.mxu0 %v6270
    %7102 = vmatpush1.bf16.msra.mxu0 %v6269
    %7103 = vmatprep.subr.bf16.mxu0 %v6278
    %7104 = vmatpush1.bf16.msra.mxu0 %v6277
    %7105 = vmatprep.subr.bf16.mxu0 %v6286
    %7106 = vmatpush1.bf16.msra.mxu0 %v6285
    %7107 = vmatprep.subr.bf16.mxu0 %v6294
    %7108 = vmatpush1.bf16.msra.mxu0 %v6293
    %7109 = vmatprep.subr.bf16.mxu0 %v6302
    %7110 = vmatpush1.bf16.msra.mxu0 %v6301
    %7111 = vmatprep.subr.bf16.mxu0 %v6310
    %7112 = vmatpush1.bf16.msra.mxu0 %v6309
    %7113 = vmatprep.subr.bf16.mxu0 %v6318
    %7114 = vmatpush1.bf16.msra.mxu0 %v6317
    %7115 = vmatprep.subr.bf16.mxu0 %v6326
    %7116 = vmatpush1.bf16.msra.mxu0 %v6325
    %7117 = vmatprep.subr.bf16.mxu0 %v6334
    %7118 = vmatpush1.bf16.msra.mxu0 %v6333
    %7119 = vmatprep.subr.bf16.mxu0 %v6342
    %7120 = vmatpush1.bf16.msra.mxu0 %v6341
    %7121 = vmatprep.subr.bf16.mxu0 %v6350
    %7122 = vmatpush1.bf16.msra.mxu0 %v6349
    %7123 = vmatprep.subr.bf16.mxu0 %v6358
    %7124 = vmatpush1.bf16.msra.mxu0 %v6357
    %7125 = vmatprep.subr.bf16.mxu0 %v6366
    %7126 = vmatpush1.bf16.msra.mxu0 %v6365
    %7127 = vmatprep.mubr.bf16.mxu0 %v3896
    %7128 = vmatmul.mubr.bf16.gmra.mrb[0].mxu0 %v3895
    %v7129 = vpop.f32.mrb[0].mxu0
    %v7130 = vadd.f32 %v7089, %v7129
    %v7131 = vpop.f32.mrb[0].mxu0
    %v7132 = vadd.f32 %v7091, %v7131
    %v7133 = vpop.f32.mrb[0].mxu0
    %v7134 = vpop.f32.mrb[0].mxu0
    %7135 = vdwg.mxu0
    %7136 = vmatprep.subr.bf16.mxu0 %v6374
    %7137 = vmatpush1.bf16.msra.mxu0 %v6373
    %7138 = vmatprep.subr.bf16.mxu0 %v6382
    %7139 = vmatpush1.bf16.msra.mxu0 %v6381
    %7140 = vmatprep.subr.bf16.mxu0 %v6390
    %7141 = vmatpush1.bf16.msra.mxu0 %v6389
    %7142 = vmatprep.subr.bf16.mxu0 %v6398
    %7143 = vmatpush1.bf16.msra.mxu0 %v6397
    %7144 = vmatprep.subr.bf16.mxu0 %v6406
    %7145 = vmatpush1.bf16.msra.mxu0 %v6405
    %7146 = vmatprep.subr.bf16.mxu0 %v6414
    %7147 = vmatpush1.bf16.msra.mxu0 %v6413
    %7148 = vmatprep.subr.bf16.mxu0 %v6422
    %7149 = vmatpush1.bf16.msra.mxu0 %v6421
    %7150 = vmatprep.subr.bf16.mxu0 %v6430
    %7151 = vmatpush1.bf16.msra.mxu0 %v6429
    %7152 = vmatprep.subr.bf16.mxu0 %v6438
    %7153 = vmatpush1.bf16.msra.mxu0 %v6437
    %7154 = vmatprep.subr.bf16.mxu0 %v6446
    %7155 = vmatpush1.bf16.msra.mxu0 %v6445
    %7156 = vmatprep.subr.bf16.mxu0 %v6454
    %7157 = vmatpush1.bf16.msra.mxu0 %v6453
    %7158 = vmatprep.subr.bf16.mxu0 %v6462
    %7159 = vmatpush1.bf16.msra.mxu0 %v6461
    %7160 = vmatprep.subr.bf16.mxu0 %v6470
    %7161 = vmatpush1.bf16.msra.mxu0 %v6469
    %7162 = vmatprep.subr.bf16.mxu0 %v6478
    %7163 = vmatpush1.bf16.msra.mxu0 %v6477
    %7164 = vmatprep.subr.bf16.mxu0 %v6486
    %7165 = vmatpush1.bf16.msra.mxu0 %v6485
    %7166 = vmatprep.subr.bf16.mxu0 %v6494
    %7167 = vmatpush1.bf16.msra.mxu0 %v6493
    %7168 = vmatprep.mubr.bf16.mxu0 %v3898
    %7169 = vmatmul.mubr.bf16.gmra.mrb[0].mxu0 %v3897
    %v7170 = vpop.f32.mrb[0].mxu0
    %v7171 = vadd.f32 %v7130, %v7170
    %v7172 = vpop.f32.mrb[0].mxu0
    %v7173 = vadd.f32 %v7132, %v7172
    %v7174 = vpop.f32.mrb[0].mxu0
    %v7175 = vpop.f32.mrb[0].mxu0
    %7176 = vdwg.mxu0
    %7177 = vmatprep.subr.bf16.mxu0 %v5992
    %7178 = vmatpush1.bf16.msra.mxu0 %v5991
    %7179 = vmatprep.subr.bf16.mxu0 %v6000
    %7180 = vmatpush1.bf16.msra.mxu0 %v5999
    %7181 = vmatprep.subr.bf16.mxu0 %v6008
    %7182 = vmatpush1.bf16.msra.mxu0 %v6007
    %7183 = vmatprep.subr.bf16.mxu0 %v6016
    %7184 = vmatpush1.bf16.msra.mxu0 %v6015
    %7185 = vmatprep.subr.bf16.mxu0 %v6024
    %7186 = vmatpush1.bf16.msra.mxu0 %v6023
    %7187 = vmatprep.subr.bf16.mxu0 %v6032
    %7188 = vmatpush1.bf16.msra.mxu0 %v6031
    %7189 = vmatprep.subr.bf16.mxu0 %v6040
    %7190 = vmatpush1.bf16.msra.mxu0 %v6039
    %7191 = vmatprep.subr.bf16.mxu0 %v6048
    %7192 = vmatpush1.bf16.msra.mxu0 %v6047
    %7193 = vmatprep.subr.bf16.mxu0 %v6056
    %7194 = vmatpush1.bf16.msra.mxu0 %v6055
    %7195 = vmatprep.subr.bf16.mxu0 %v6064
    %7196 = vmatpush1.bf16.msra.mxu0 %v6063
    %7197 = vmatprep.subr.bf16.mxu0 %v6072
    %7198 = vmatpush1.bf16.msra.mxu0 %v6071
    %7199 = vmatprep.subr.bf16.mxu0 %v6080
    %7200 = vmatpush1.bf16.msra.mxu0 %v6079
    %7201 = vmatprep.subr.bf16.mxu0 %v6088
    %7202 = vmatpush1.bf16.msra.mxu0 %v6087
    %7203 = vmatprep.subr.bf16.mxu0 %v6096
    %7204 = vmatpush1.bf16.msra.mxu0 %v6095
    %7205 = vmatprep.subr.bf16.mxu0 %v6104
    %7206 = vmatpush1.bf16.msra.mxu0 %v6103
    %7207 = vmatprep.subr.bf16.mxu0 %v6112
    %7208 = vmatpush1.bf16.msra.mxu0 %v6111
    %7209 = vmatprep.mubr.bf16.mxu0 %v3892
    %7210 = vmatmul.mubr.bf16.gmra.mrb[0].mxu0 %v3891
    %v7211 = vpop.f32.mrb[0].mxu0
    %v7212 = vadd.f32 %v4424, %v7211
    %v7213 = vpop.f32.mrb[0].mxu0
    %v7214 = vadd.f32 %v4428, %v7213
    %v7215 = vpop.f32.mrb[0].mxu0
    %v7216 = vpop.f32.mrb[0].mxu0
    %7217 = vdwg.mxu0
    %7218 = vmatprep.subr.bf16.mxu0 %v6120
    %7219 = vmatpush1.bf16.msra.mxu0 %v6119
    %7220 = vmatprep.subr.bf16.mxu0 %v6128
    %7221 = vmatpush1.bf16.msra.mxu0 %v6127
    %7222 = vmatprep.subr.bf16.mxu0 %v6136
    %7223 = vmatpush1.bf16.msra.mxu0 %v6135
    %7224 = vmatprep.subr.bf16.mxu0 %v6144
    %7225 = vmatpush1.bf16.msra.mxu0 %v6143
    %7226 = vmatprep.subr.bf16.mxu0 %v6152
    %7227 = vmatpush1.bf16.msra.mxu0 %v6151
    %7228 = vmatprep.subr.bf16.mxu0 %v6160
    %7229 = vmatpush1.bf16.msra.mxu0 %v6159
    %7230 = vmatprep.subr.bf16.mxu0 %v6168
    %7231 = vmatpush1.bf16.msra.mxu0 %v6167
    %7232 = vmatprep.subr.bf16.mxu0 %v6176
    %7233 = vmatpush1.bf16.msra.mxu0 %v6175
    %7234 = vmatprep.subr.bf16.mxu0 %v6184
    %7235 = vmatpush1.bf16.msra.mxu0 %v6183
    %7236 = vmatprep.subr.bf16.mxu0 %v6192
    %7237 = vmatpush1.bf16.msra.mxu0 %v6191
    %7238 = vmatprep.subr.bf16.mxu0 %v6200
    %7239 = vmatpush1.bf16.msra.mxu0 %v6199
    %7240 = vmatprep.subr.bf16.mxu0 %v6208
    %7241 = vmatpush1.bf16.msra.mxu0 %v6207
    %7242 = vmatprep.subr.bf16.mxu0 %v6216
    %7243 = vmatpush1.bf16.msra.mxu0 %v6215
    %7244 = vmatprep.subr.bf16.mxu0 %v6224
    %7245 = vmatpush1.bf16.msra.mxu0 %v6223
    %7246 = vmatprep.subr.bf16.mxu0 %v6232
    %7247 = vmatpush1.bf16.msra.mxu0 %v6231
    %7248 = vmatprep.subr.bf16.mxu0 %v6240
    %7249 = vmatpush1.bf16.msra.mxu0 %v6239
    %7250 = vmatprep.mubr.bf16.mxu0 %v3894
    %7251 = vmatmul.mubr.bf16.gmra.mrb[0].mxu0 %v3893
    %v7252 = vpop.f32.mrb[0].mxu0
    %v7253 = vadd.f32 %v7212, %v7252
    %v7254 = vpop.f32.mrb[0].mxu0
    %v7255 = vadd.f32 %v7214, %v7254
    %v7256 = vpop.f32.mrb[0].mxu0
    %v7257 = vpop.f32.mrb[0].mxu0
    %7258 = vdwg.mxu0
    %7259 = vmatprep.subr.bf16.mxu0 %v6248
    %7260 = vmatpush1.bf16.msra.mxu0 %v6247
    %7261 = vmatprep.subr.bf16.mxu0 %v6256
    %7262 = vmatpush1.bf16.msra.mxu0 %v6255
    %7263 = vmatprep.subr.bf16.mxu0 %v6264
    %7264 = vmatpush1.bf16.msra.mxu0 %v6263
    %7265 = vmatprep.subr.bf16.mxu0 %v6272
    %7266 = vmatpush1.bf16.msra.mxu0 %v6271
    %7267 = vmatprep.subr.bf16.mxu0 %v6280
    %7268 = vmatpush1.bf16.msra.mxu0 %v6279
    %7269 = vmatprep.subr.bf16.mxu0 %v6288
    %7270 = vmatpush1.bf16.msra.mxu0 %v6287
    %7271 = vmatprep.subr.bf16.mxu0 %v6296
    %7272 = vmatpush1.bf16.msra.mxu0 %v6295
    %7273 = vmatprep.subr.bf16.mxu0 %v6304
    %7274 = vmatpush1.bf16.msra.mxu0 %v6303
    %7275 = vmatprep.subr.bf16.mxu0 %v6312
    %7276 = vmatpush1.bf16.msra.mxu0 %v6311
    %7277 = vmatprep.subr.bf16.mxu0 %v6320
    %7278 = vmatpush1.bf16.msra.mxu0 %v6319
    %7279 = vmatprep.subr.bf16.mxu0 %v6328
    %7280 = vmatpush1.bf16.msra.mxu0 %v6327
    %7281 = vmatprep.subr.bf16.mxu0 %v6336
    %7282 = vmatpush1.bf16.msra.mxu0 %v6335
    %7283 = vmatprep.subr.bf16.mxu0 %v6344
    %7284 = vmatpush1.bf16.msra.mxu0 %v6343
    %7285 = vmatprep.subr.bf16.mxu0 %v6352
    %7286 = vmatpush1.bf16.msra.mxu0 %v6351
    %7287 = vmatprep.subr.bf16.mxu0 %v6360
    %7288 = vmatpush1.bf16.msra.mxu0 %v6359
    %7289 = vmatprep.subr.bf16.mxu0 %v6368
    %7290 = vmatpush1.bf16.msra.mxu0 %v6367
    %7291 = vmatprep.mubr.bf16.mxu0 %v3896
    %7292 = vmatmul.mubr.bf16.gmra.mrb[0].mxu0 %v3895
    %v7293 = vpop.f32.mrb[0].mxu0
    %v7294 = vadd.f32 %v7253, %v7293
    %v7295 = vpop.f32.mrb[0].mxu0
    %v7296 = vadd.f32 %v7255, %v7295
    %v7297 = vpop.f32.mrb[0].mxu0
    %v7298 = vpop.f32.mrb[0].mxu0
    %7299 = vdwg.mxu0
    %7300 = vmatprep.subr.bf16.mxu0 %v6376
    %7301 = vmatpush1.bf16.msra.mxu0 %v6375
    %7302 = vmatprep.subr.bf16.mxu0 %v6384
    %7303 = vmatpush1.bf16.msra.mxu0 %v6383
    %7304 = vmatprep.subr.bf16.mxu0 %v6392
    %7305 = vmatpush1.bf16.msra.mxu0 %v6391
    %7306 = vmatprep.subr.bf16.mxu0 %v6400
    %7307 = vmatpush1.bf16.msra.mxu0 %v6399
    %7308 = vmatprep.subr.bf16.mxu0 %v6408
    %7309 = vmatpush1.bf16.msra.mxu0 %v6407
    %7310 = vmatprep.subr.bf16.mxu0 %v6416
    %7311 = vmatpush1.bf16.msra.mxu0 %v6415
    %7312 = vmatprep.subr.bf16.mxu0 %v6424
    %7313 = vmatpush1.bf16.msra.mxu0 %v6423
    %7314 = vmatprep.subr.bf16.mxu0 %v6432
    %7315 = vmatpush1.bf16.msra.mxu0 %v6431
    %7316 = vmatprep.subr.bf16.mxu0 %v6440
    %7317 = vmatpush1.bf16.msra.mxu0 %v6439
    %7318 = vmatprep.subr.bf16.mxu0 %v6448
    %7319 = vmatpush1.bf16.msra.mxu0 %v6447
    %7320 = vmatprep.subr.bf16.mxu0 %v6456
    %7321 = vmatpush1.bf16.msra.mxu0 %v6455
    %7322 = vmatprep.subr.bf16.mxu0 %v6464
    %7323 = vmatpush1.bf16.msra.mxu0 %v6463
    %7324 = vmatprep.subr.bf16.mxu0 %v6472
    %7325 = vmatpush1.bf16.msra.mxu0 %v6471
    %7326 = vmatprep.subr.bf16.mxu0 %v6480
    %7327 = vmatpush1.bf16.msra.mxu0 %v6479
    %7328 = vmatprep.subr.bf16.mxu0 %v6488
    %7329 = vmatpush1.bf16.msra.mxu0 %v6487
    %7330 = vmatprep.subr.bf16.mxu0 %v6496
    %7331 = vmatpush1.bf16.msra.mxu0 %v6495
    %7332 = vmatprep.mubr.bf16.mxu0 %v3898
    %7333 = vmatmul.mubr.bf16.gmra.mrb[0].mxu0 %v3897
    %v7334 = vpop.f32.mrb[0].mxu0
    %v7335 = vadd.f32 %v7294, %v7334
    %v7336 = vpop.f32.mrb[0].mxu0
    %v7337 = vadd.f32 %v7296, %v7336
    %v7338 = vpop.f32.mrb[0].mxu0
    %v7339 = vpop.f32.mrb[0].mxu0
    %7340 = vdwg.mxu0
    %7341 = vmatprep.subr.bf16.mxu0 %v5994
    %7342 = vmatpush1.bf16.msra.mxu0 %v5993
    %7343 = vmatprep.subr.bf16.mxu0 %v6002
    %7344 = vmatpush1.bf16.msra.mxu0 %v6001
    %7345 = vmatprep.subr.bf16.mxu0 %v6010
    %7346 = vmatpush1.bf16.msra.mxu0 %v6009
    %7347 = vmatprep.subr.bf16.mxu0 %v6018
    %7348 = vmatpush1.bf16.msra.mxu0 %v6017
    %7349 = vmatprep.subr.bf16.mxu0 %v6026
    %7350 = vmatpush1.bf16.msra.mxu0 %v6025
    %7351 = vmatprep.subr.bf16.mxu0 %v6034
    %7352 = vmatpush1.bf16.msra.mxu0 %v6033
    %7353 = vmatprep.subr.bf16.mxu0 %v6042
    %7354 = vmatpush1.bf16.msra.mxu0 %v6041
    %7355 = vmatprep.subr.bf16.mxu0 %v6050
    %7356 = vmatpush1.bf16.msra.mxu0 %v6049
    %7357 = vmatprep.subr.bf16.mxu0 %v6058
    %7358 = vmatpush1.bf16.msra.mxu0 %v6057
    %7359 = vmatprep.subr.bf16.mxu0 %v6066
    %7360 = vmatpush1.bf16.msra.mxu0 %v6065
    %7361 = vmatprep.subr.bf16.mxu0 %v6074
    %7362 = vmatpush1.bf16.msra.mxu0 %v6073
    %7363 = vmatprep.subr.bf16.mxu0 %v6082
    %7364 = vmatpush1.bf16.msra.mxu0 %v6081
    %7365 = vmatprep.subr.bf16.mxu0 %v6090
    %7366 = vmatpush1.bf16.msra.mxu0 %v6089
    %7367 = vmatprep.subr.bf16.mxu0 %v6098
    %7368 = vmatpush1.bf16.msra.mxu0 %v6097
    %7369 = vmatprep.subr.bf16.mxu0 %v6106
    %7370 = vmatpush1.bf16.msra.mxu0 %v6105
    %7371 = vmatprep.subr.bf16.mxu0 %v6114
    %7372 = vmatpush1.bf16.msra.mxu0 %v6113
    %7373 = vmatprep.mubr.bf16.mxu0 %v3892
    %7374 = vmatmul.mubr.bf16.gmra.mrb[0].mxu0 %v3891
    %v7375 = vpop.f32.mrb[0].mxu0
    %v7376 = vadd.f32 %v4432, %v7375
    %v7377 = vpop.f32.mrb[0].mxu0
    %v7378 = vadd.f32 %v4436, %v7377
    %v7379 = vpop.f32.mrb[0].mxu0
    %v7380 = vpop.f32.mrb[0].mxu0
    %7381 = vdwg.mxu0
    %7382 = vmatprep.subr.bf16.mxu0 %v6122
    %7383 = vmatpush1.bf16.msra.mxu0 %v6121
    %7384 = vmatprep.subr.bf16.mxu0 %v6130
    %7385 = vmatpush1.bf16.msra.mxu0 %v6129
    %7386 = vmatprep.subr.bf16.mxu0 %v6138
    %7387 = vmatpush1.bf16.msra.mxu0 %v6137
    %7388 = vmatprep.subr.bf16.mxu0 %v6146
    %7389 = vmatpush1.bf16.msra.mxu0 %v6145
    %7390 = vmatprep.subr.bf16.mxu0 %v6154
    %7391 = vmatpush1.bf16.msra.mxu0 %v6153
    %7392 = vmatprep.subr.bf16.mxu0 %v6162
    %7393 = vmatpush1.bf16.msra.mxu0 %v6161
    %7394 = vmatprep.subr.bf16.mxu0 %v6170
    %7395 = vmatpush1.bf16.msra.mxu0 %v6169
    %7396 = vmatprep.subr.bf16.mxu0 %v6178
    %7397 = vmatpush1.bf16.msra.mxu0 %v6177
    %7398 = vmatprep.subr.bf16.mxu0 %v6186
    %7399 = vmatpush1.bf16.msra.mxu0 %v6185
    %7400 = vmatprep.subr.bf16.mxu0 %v6194
    %7401 = vmatpush1.bf16.msra.mxu0 %v6193
    %7402 = vmatprep.subr.bf16.mxu0 %v6202
    %7403 = vmatpush1.bf16.msra.mxu0 %v6201
    %7404 = vmatprep.subr.bf16.mxu0 %v6210
    %7405 = vmatpush1.bf16.msra.mxu0 %v6209
    %7406 = vmatprep.subr.bf16.mxu0 %v6218
    %7407 = vmatpush1.bf16.msra.mxu0 %v6217
    %7408 = vmatprep.subr.bf16.mxu0 %v6226
    %7409 = vmatpush1.bf16.msra.mxu0 %v6225
    %7410 = vmatprep.subr.bf16.mxu0 %v6234
    %7411 = vmatpush1.bf16.msra.mxu0 %v6233
    %7412 = vmatprep.subr.bf16.mxu0 %v6242
    %7413 = vmatpush1.bf16.msra.mxu0 %v6241
    %7414 = vmatprep.mubr.bf16.mxu0 %v3894
    %7415 = vmatmul.mubr.bf16.gmra.mrb[0].mxu0 %v3893
    %v7416 = vpop.f32.mrb[0].mxu0
    %v7417 = vadd.f32 %v7376, %v7416
    %v7418 = vpop.f32.mrb[0].mxu0
    %v7419 = vadd.f32 %v7378, %v7418
    %v7420 = vpop.f32.mrb[0].mxu0
    %v7421 = vpop.f32.mrb[0].mxu0
    %7422 = vdwg.mxu0
    %7423 = vmatprep.subr.bf16.mxu0 %v6250
    %7424 = vmatpush1.bf16.msra.mxu0 %v6249
    %7425 = vmatprep.subr.bf16.mxu0 %v6258
    %7426 = vmatpush1.bf16.msra.mxu0 %v6257
    %7427 = vmatprep.subr.bf16.mxu0 %v6266
    %7428 = vmatpush1.bf16.msra.mxu0 %v6265
    %7429 = vmatprep.subr.bf16.mxu0 %v6274
    %7430 = vmatpush1.bf16.msra.mxu0 %v6273
    %7431 = vmatprep.subr.bf16.mxu0 %v6282
    %7432 = vmatpush1.bf16.msra.mxu0 %v6281
    %7433 = vmatprep.subr.bf16.mxu0 %v6290
    %7434 = vmatpush1.bf16.msra.mxu0 %v6289
    %7435 = vmatprep.subr.bf16.mxu0 %v6298
    %7436 = vmatpush1.bf16.msra.mxu0 %v6297
    %7437 = vmatprep.subr.bf16.mxu0 %v6306
    %7438 = vmatpush1.bf16.msra.mxu0 %v6305
    %7439 = vmatprep.subr.bf16.mxu0 %v6314
    %7440 = vmatpush1.bf16.msra.mxu0 %v6313
    %7441 = vmatprep.subr.bf16.mxu0 %v6322
    %7442 = vmatpush1.bf16.msra.mxu0 %v6321
    %7443 = vmatprep.subr.bf16.mxu0 %v6330
    %7444 = vmatpush1.bf16.msra.mxu0 %v6329
    %7445 = vmatprep.subr.bf16.mxu0 %v6338
    %7446 = vmatpush1.bf16.msra.mxu0 %v6337
    %7447 = vmatprep.subr.bf16.mxu0 %v6346
    %7448 = vmatpush1.bf16.msra.mxu0 %v6345
    %7449 = vmatprep.subr.bf16.mxu0 %v6354
    %7450 = vmatpush1.bf16.msra.mxu0 %v6353
    %7451 = vmatprep.subr.bf16.mxu0 %v6362
    %7452 = vmatpush1.bf16.msra.mxu0 %v6361
    %7453 = vmatprep.subr.bf16.mxu0 %v6370
    %7454 = vmatpush1.bf16.msra.mxu0 %v6369
    %7455 = vmatprep.mubr.bf16.mxu0 %v3896
    %7456 = vmatmul.mubr.bf16.gmra.mrb[0].mxu0 %v3895
    %v7457 = vpop.f32.mrb[0].mxu0
    %v7458 = vadd.f32 %v7417, %v7457
    %v7459 = vpop.f32.mrb[0].mxu0
    %v7460 = vadd.f32 %v7419, %v7459
    %v7461 = vpop.f32.mrb[0].mxu0
    %v7462 = vpop.f32.mrb[0].mxu0
    %7463 = vdwg.mxu0
    %7464 = vmatprep.subr.bf16.mxu0 %v6378
    %7465 = vmatpush1.bf16.msra.mxu0 %v6377
    %7466 = vmatprep.subr.bf16.mxu0 %v6386
    %7467 = vmatpush1.bf16.msra.mxu0 %v6385
    %7468 = vmatprep.subr.bf16.mxu0 %v6394
    %7469 = vmatpush1.bf16.msra.mxu0 %v6393
    %7470 = vmatprep.subr.bf16.mxu0 %v6402
    %7471 = vmatpush1.bf16.msra.mxu0 %v6401
    %7472 = vmatprep.subr.bf16.mxu0 %v6410
    %7473 = vmatpush1.bf16.msra.mxu0 %v6409
    %7474 = vmatprep.subr.bf16.mxu0 %v6418
    %7475 = vmatpush1.bf16.msra.mxu0 %v6417
    %7476 = vmatprep.subr.bf16.mxu0 %v6426
    %7477 = vmatpush1.bf16.msra.mxu0 %v6425
    %7478 = vmatprep.subr.bf16.mxu0 %v6434
    %7479 = vmatpush1.bf16.msra.mxu0 %v6433
    %7480 = vmatprep.subr.bf16.mxu0 %v6442
    %7481 = vmatpush1.bf16.msra.mxu0 %v6441
    %7482 = vmatprep.subr.bf16.mxu0 %v6450
    %7483 = vmatpush1.bf16.msra.mxu0 %v6449
    %7484 = vmatprep.subr.bf16.mxu0 %v6458
    %7485 = vmatpush1.bf16.msra.mxu0 %v6457
    %7486 = vmatprep.subr.bf16.mxu0 %v6466
    %7487 = vmatpush1.bf16.msra.mxu0 %v6465
    %7488 = vmatprep.subr.bf16.mxu0 %v6474
    %7489 = vmatpush1.bf16.msra.mxu0 %v6473
    %7490 = vmatprep.subr.bf16.mxu0 %v6482
    %7491 = vmatpush1.bf16.msra.mxu0 %v6481
    %7492 = vmatprep.subr.bf16.mxu0 %v6490
    %7493 = vmatpush1.bf16.msra.mxu0 %v6489
    %7494 = vmatprep.subr.bf16.mxu0 %v6498
    %7495 = vmatpush1.bf16.msra.mxu0 %v6497
    %7496 = vmatprep.mubr.bf16.mxu0 %v3898
    %7497 = vmatmul.mubr.bf16.gmra.mrb[0].mxu0 %v3897
    %v7498 = vpop.f32.mrb[0].mxu0
    %v7499 = vadd.f32 %v7458, %v7498
    %v7500 = vpop.f32.mrb[0].mxu0
    %v7501 = vadd.f32 %v7460, %v7500
    %v7502 = vpop.f32.mrb[0].mxu0
    %v7503 = vpop.f32.mrb[0].mxu0
    %7504 = vdwg.mxu0
    %7505 = vmatprep.subr.bf16.mxu0 %v5996
    %7506 = vmatpush1.bf16.msra.mxu0 %v5995
    %7507 = vmatprep.subr.bf16.mxu0 %v6004
    %7508 = vmatpush1.bf16.msra.mxu0 %v6003
    %7509 = vmatprep.subr.bf16.mxu0 %v6012
    %7510 = vmatpush1.bf16.msra.mxu0 %v6011
    %7511 = vmatprep.subr.bf16.mxu0 %v6020
    %7512 = vmatpush1.bf16.msra.mxu0 %v6019
    %7513 = vmatprep.subr.bf16.mxu0 %v6028
    %7514 = vmatpush1.bf16.msra.mxu0 %v6027
    %7515 = vmatprep.subr.bf16.mxu0 %v6036
    %7516 = vmatpush1.bf16.msra.mxu0 %v6035
    %7517 = vmatprep.subr.bf16.mxu0 %v6044
    %7518 = vmatpush1.bf16.msra.mxu0 %v6043
    %7519 = vmatprep.subr.bf16.mxu0 %v6052
    %7520 = vmatpush1.bf16.msra.mxu0 %v6051
    %7521 = vmatprep.subr.bf16.mxu0 %v6060
    %7522 = vmatpush1.bf16.msra.mxu0 %v6059
    %7523 = vmatprep.subr.bf16.mxu0 %v6068
    %7524 = vmatpush1.bf16.msra.mxu0 %v6067
    %7525 = vmatprep.subr.bf16.mxu0 %v6076
    %7526 = vmatpush1.bf16.msra.mxu0 %v6075
    %7527 = vmatprep.subr.bf16.mxu0 %v6084
    %7528 = vmatpush1.bf16.msra.mxu0 %v6083
    %7529 = vmatprep.subr.bf16.mxu0 %v6092
    %7530 = vmatpush1.bf16.msra.mxu0 %v6091
    %7531 = vmatprep.subr.bf16.mxu0 %v6100
    %7532 = vmatpush1.bf16.msra.mxu0 %v6099
    %7533 = vmatprep.subr.bf16.mxu0 %v6108
    %7534 = vmatpush1.bf16.msra.mxu0 %v6107
    %7535 = vmatprep.subr.bf16.mxu0 %v6116
    %7536 = vmatpush1.bf16.msra.mxu0 %v6115
    %7537 = vmatprep.mubr.bf16.mxu0 %v3892
    %7538 = vmatmul.mubr.bf16.gmra.mrb[0].mxu0 %v3891
    %v7539 = vpop.f32.mrb[0].mxu0
    %v7540 = vadd.f32 %v4440, %v7539
    %v7541 = vpop.f32.mrb[0].mxu0
    %v7542 = vadd.f32 %v4444, %v7541
    %v7543 = vpop.f32.mrb[0].mxu0
    %v7544 = vpop.f32.mrb[0].mxu0
    %7545 = vdwg.mxu0
    %7546 = vmatprep.subr.bf16.mxu0 %v6124
    %7547 = vmatpush1.bf16.msra.mxu0 %v6123
    %7548 = vmatprep.subr.bf16.mxu0 %v6132
    %7549 = vmatpush1.bf16.msra.mxu0 %v6131
    %7550 = vmatprep.subr.bf16.mxu0 %v6140
    %7551 = vmatpush1.bf16.msra.mxu0 %v6139
    %7552 = vmatprep.subr.bf16.mxu0 %v6148
    %7553 = vmatpush1.bf16.msra.mxu0 %v6147
    %7554 = vmatprep.subr.bf16.mxu0 %v6156
    %7555 = vmatpush1.bf16.msra.mxu0 %v6155
    %7556 = vmatprep.subr.bf16.mxu0 %v6164
    %7557 = vmatpush1.bf16.msra.mxu0 %v6163
    %7558 = vmatprep.subr.bf16.mxu0 %v6172
    %7559 = vmatpush1.bf16.msra.mxu0 %v6171
    %7560 = vmatprep.subr.bf16.mxu0 %v6180
    %7561 = vmatpush1.bf16.msra.mxu0 %v6179
    %7562 = vmatprep.subr.bf16.mxu0 %v6188
    %7563 = vmatpush1.bf16.msra.mxu0 %v6187
    %7564 = vmatprep.subr.bf16.mxu0 %v6196
    %7565 = vmatpush1.bf16.msra.mxu0 %v6195
    %7566 = vmatprep.subr.bf16.mxu0 %v6204
    %7567 = vmatpush1.bf16.msra.mxu0 %v6203
    %7568 = vmatprep.subr.bf16.mxu0 %v6212
    %7569 = vmatpush1.bf16.msra.mxu0 %v6211
    %7570 = vmatprep.subr.bf16.mxu0 %v6220
    %7571 = vmatpush1.bf16.msra.mxu0 %v6219
    %7572 = vmatprep.subr.bf16.mxu0 %v6228
    %7573 = vmatpush1.bf16.msra.mxu0 %v6227
    %7574 = vmatprep.subr.bf16.mxu0 %v6236
    %7575 = vmatpush1.bf16.msra.mxu0 %v6235
    %7576 = vmatprep.subr.bf16.mxu0 %v6244
    %7577 = vmatpush1.bf16.msra.mxu0 %v6243
    %7578 = vmatprep.mubr.bf16.mxu0 %v3894
    %7579 = vmatmul.mubr.bf16.gmra.mrb[0].mxu0 %v3893
    %v7580 = vpop.f32.mrb[0].mxu0
    %v7581 = vadd.f32 %v7540, %v7580
    %v7582 = vpop.f32.mrb[0].mxu0
    %v7583 = vadd.f32 %v7542, %v7582
    %v7584 = vpop.f32.mrb[0].mxu0
    %v7585 = vpop.f32.mrb[0].mxu0
    %7586 = vdwg.mxu0
    %7587 = vmatprep.subr.bf16.mxu0 %v6252
    %7588 = vmatpush1.bf16.msra.mxu0 %v6251
    %7589 = vmatprep.subr.bf16.mxu0 %v6260
    %7590 = vmatpush1.bf16.msra.mxu0 %v6259
    %7591 = vmatprep.subr.bf16.mxu0 %v6268
    %7592 = vmatpush1.bf16.msra.mxu0 %v6267
    %7593 = vmatprep.subr.bf16.mxu0 %v6276
    %7594 = vmatpush1.bf16.msra.mxu0 %v6275
    %7595 = vmatprep.subr.bf16.mxu0 %v6284
    %7596 = vmatpush1.bf16.msra.mxu0 %v6283
    %7597 = vmatprep.subr.bf16.mxu0 %v6292
    %7598 = vmatpush1.bf16.msra.mxu0 %v6291
    %7599 = vmatprep.subr.bf16.mxu0 %v6300
    %7600 = vmatpush1.bf16.msra.mxu0 %v6299
    %7601 = vmatprep.subr.bf16.mxu0 %v6308
    %7602 = vmatpush1.bf16.msra.mxu0 %v6307
    %7603 = vmatprep.subr.bf16.mxu0 %v6316
    %7604 = vmatpush1.bf16.msra.mxu0 %v6315
    %7605 = vmatprep.subr.bf16.mxu0 %v6324
    %7606 = vmatpush1.bf16.msra.mxu0 %v6323
    %7607 = vmatprep.subr.bf16.mxu0 %v6332
    %7608 = vmatpush1.bf16.msra.mxu0 %v6331
    %7609 = vmatprep.subr.bf16.mxu0 %v6340
    %7610 = vmatpush1.bf16.msra.mxu0 %v6339
    %7611 = vmatprep.subr.bf16.mxu0 %v6348
    %7612 = vmatpush1.bf16.msra.mxu0 %v6347
    %7613 = vmatprep.subr.bf16.mxu0 %v6356
    %7614 = vmatpush1.bf16.msra.mxu0 %v6355
    %7615 = vmatprep.subr.bf16.mxu0 %v6364
    %7616 = vmatpush1.bf16.msra.mxu0 %v6363
    %7617 = vmatprep.subr.bf16.mxu0 %v6372
    %7618 = vmatpush1.bf16.msra.mxu0 %v6371
    %7619 = vmatprep.mubr.bf16.mxu0 %v3896
    %7620 = vmatmul.mubr.bf16.gmra.mrb[0].mxu0 %v3895
    %v7621 = vpop.f32.mrb[0].mxu0
    %v7622 = vadd.f32 %v7581, %v7621
    %v7623 = vpop.f32.mrb[0].mxu0
    %v7624 = vadd.f32 %v7583, %v7623
    %v7625 = vpop.f32.mrb[0].mxu0
    %v7626 = vpop.f32.mrb[0].mxu0
    %7627 = vdwg.mxu0
    %7628 = vmatprep.subr.bf16.mxu0 %v6380
    %7629 = vmatpush1.bf16.msra.mxu0 %v6379
    %7630 = vmatprep.subr.bf16.mxu0 %v6388
    %7631 = vmatpush1.bf16.msra.mxu0 %v6387
    %7632 = vmatprep.subr.bf16.mxu0 %v6396
    %7633 = vmatpush1.bf16.msra.mxu0 %v6395
    %7634 = vmatprep.subr.bf16.mxu0 %v6404
    %7635 = vmatpush1.bf16.msra.mxu0 %v6403
    %7636 = vmatprep.subr.bf16.mxu0 %v6412
    %7637 = vmatpush1.bf16.msra.mxu0 %v6411
    %7638 = vmatprep.subr.bf16.mxu0 %v6420
    %7639 = vmatpush1.bf16.msra.mxu0 %v6419
    %7640 = vmatprep.subr.bf16.mxu0 %v6428
    %7641 = vmatpush1.bf16.msra.mxu0 %v6427
    %7642 = vmatprep.subr.bf16.mxu0 %v6436
    %7643 = vmatpush1.bf16.msra.mxu0 %v6435
    %7644 = vmatprep.subr.bf16.mxu0 %v6444
    %7645 = vmatpush1.bf16.msra.mxu0 %v6443
    %7646 = vmatprep.subr.bf16.mxu0 %v6452
    %7647 = vmatpush1.bf16.msra.mxu0 %v6451
    %7648 = vmatprep.subr.bf16.mxu0 %v6460
    %7649 = vmatpush1.bf16.msra.mxu0 %v6459
    %7650 = vmatprep.subr.bf16.mxu0 %v6468
    %7651 = vmatpush1.bf16.msra.mxu0 %v6467
    %7652 = vmatprep.subr.bf16.mxu0 %v6476
    %7653 = vmatpush1.bf16.msra.mxu0 %v6475
    %7654 = vmatprep.subr.bf16.mxu0 %v6484
    %7655 = vmatpush1.bf16.msra.mxu0 %v6483
    %7656 = vmatprep.subr.bf16.mxu0 %v6492
    %7657 = vmatpush1.bf16.msra.mxu0 %v6491
    %7658 = vmatprep.subr.bf16.mxu0 %v6500
    %7659 = vmatpush1.bf16.msra.mxu0 %v6499
    %7660 = vmatprep.mubr.bf16.mxu0 %v3898
    %7661 = vmatmul.mubr.bf16.gmra.mrb[0].mxu0 %v3897
    %v7662 = vpop.f32.mrb[0].mxu0
    %v7663 = vadd.f32 %v7622, %v7662
    %v7664 = vpop.f32.mrb[0].mxu0
    %v7665 = vadd.f32 %v7624, %v7664
    %v7666 = vpop.f32.mrb[0].mxu0
    %v7667 = vpop.f32.mrb[0].mxu0
    %7668 = vdwg.mxu0
    %v7669 = vld [vmem:[#allocation10] sm:$0xff]
    %v7671 = vlaneseq
    %v7672 = vshrl.u32 %v7671, 7
    %v7673 = vsub.s32 0, %v7672
    %v7674 = vrot.slane %v7669, %v7673
    %v7675 = vlaneseq
    %v7676 = vshrl.u32 %v7675, 7
    %v7677 = vsub.s32 1, %v7676
    %v7678 = vrot.slane %v7669, %v7677
    %v7679 = vlaneseq
    %v7680 = vshrl.u32 %v7679, 7
    %v7681 = vsub.s32 2, %v7680
    %v7682 = vrot.slane %v7669, %v7681
    %v7683 = vlaneseq
    %v7684 = vshrl.u32 %v7683, 7
    %v7685 = vsub.s32 3, %v7684
    %v7686 = vrot.slane %v7669, %v7685
    %v7687 = vlaneseq
    %v7688 = vshrl.u32 %v7687, 7
    %v7689 = vsub.s32 4, %v7688
    %v7690 = vrot.slane %v7669, %v7689
    %v7691 = vlaneseq
    %v7692 = vshrl.u32 %v7691, 7
    %v7693 = vsub.s32 5, %v7692
    %v7694 = vrot.slane %v7669, %v7693
    %v7695 = vlaneseq
    %v7696 = vshrl.u32 %v7695, 7
    %v7697 = vsub.s32 6, %v7696
    %v7698 = vrot.slane %v7669, %v7697
    %v7699 = vlaneseq
    %v7700 = vshrl.u32 %v7699, 7
    %v7701 = vsub.s32 7, %v7700
    %v7702 = vrot.slane %v7669, %v7701
    %v7711 = vmul.f32 %v7171, %v7674
    %v7712 = vmul.f32 %v7173, %v7678
    %v7713 = vmul.f32 %v7335, %v7682
    %v7714 = vmul.f32 %v7337, %v7686
    %v7715 = vmul.f32 %v7499, %v7690
    %v7716 = vmul.f32 %v7501, %v7694
    %v7717 = vmul.f32 %v7663, %v7698
    %v7718 = vmul.f32 %v7665, %v7702
    %v7719 = vadd.f32 %v7711, %v7712
    %v7720 = vadd.f32 %v7719, %v7713
    %v7721 = vadd.f32 %v7720, %v7714
    %v7722 = vadd.f32 %v7721, %v7715
    %v7723 = vadd.f32 %v7722, %v7716
    %v7724 = vadd.f32 %v7723, %v7717
    %v7725 = vadd.f32 %v7724, %v7718
    %7726 = vadd.xlane.f32.xlu0 %v7725
    %v7727 = vpop.xlane.xlu0 %7726
    %v7728 = vld [vmem:[#allocation11] sm:$0xff]
    %v7730 = vlaneseq
    %v7731 = vshrl.u32 %v7730, 7
    %v7732 = vsub.s32 0, %v7731
    %v7733 = vrot.slane %v7728, %v7732
    %v7734 = vlaneseq
    %v7735 = vshrl.u32 %v7734, 7
    %v7736 = vsub.s32 1, %v7735
    %v7737 = vrot.slane %v7728, %v7736
    %v7738 = vlaneseq
    %v7739 = vshrl.u32 %v7738, 7
    %v7740 = vsub.s32 2, %v7739
    %v7741 = vrot.slane %v7728, %v7740
    %v7742 = vlaneseq
    %v7743 = vshrl.u32 %v7742, 7
    %v7744 = vsub.s32 3, %v7743
    %v7745 = vrot.slane %v7728, %v7744
    %v7746 = vlaneseq
    %v7747 = vshrl.u32 %v7746, 7
    %v7748 = vsub.s32 4, %v7747
    %v7749 = vrot.slane %v7728, %v7748
    %v7750 = vlaneseq
    %v7751 = vshrl.u32 %v7750, 7
    %v7752 = vsub.s32 5, %v7751
    %v7753 = vrot.slane %v7728, %v7752
    %v7754 = vlaneseq
    %v7755 = vshrl.u32 %v7754, 7
    %v7756 = vsub.s32 6, %v7755
    %v7757 = vrot.slane %v7728, %v7756
    %v7758 = vlaneseq
    %v7759 = vshrl.u32 %v7758, 7
    %v7760 = vsub.s32 7, %v7759
    %v7761 = vrot.slane %v7728, %v7760
    %v7770 = vmul.f32 %v3393, %v7733
    %v7771 = vmul.f32 %v3395, %v7737
    %v7772 = vmul.f32 %v3557, %v7741
    %v7773 = vmul.f32 %v3559, %v7745
    %v7774 = vmul.f32 %v3721, %v7749
    %v7775 = vmul.f32 %v3723, %v7753
    %v7776 = vmul.f32 %v3885, %v7757
    %v7777 = vmul.f32 %v3887, %v7761
    %v7778 = vadd.f32 %v7770, %v7771
    %v7779 = vadd.f32 %v7778, %v7772
    %v7780 = vadd.f32 %v7779, %v7773
    %v7781 = vadd.f32 %v7780, %v7774
    %v7782 = vadd.f32 %v7781, %v7775
    %v7783 = vadd.f32 %v7782, %v7776
    %v7784 = vadd.f32 %v7783, %v7777
    %7785 = vadd.xlane.f32.xlu0 %v7784
    %v7786 = vpop.xlane.xlu0 %7785
    %v7787 = vadd.f32 %v7727, %v7786
    %v7788 = vld [vmem:[#allocation2] sm:$0x1]
    %v7790 = vlaneseq
    %v7791 = vshrl.u32 %v7790, 7
    %v7792 = vsub.s32 0, %v7791
    %v7793 = vrot.slane %v7788, %v7792
    %v7795 = vadd.f32 %v7787, %v7793
    %vm7796 = vcmask 7168
    %7797 = vst.msk [vmem:[%s8] sm:$0xff] %vm7796, %v7795
    // Predicated region
    $region58: #{foo_forward.1} parent=1 // pred_check
      _
    $region59: #{foo_forward.1} parent=1 // pred_check_branch
      %7799 = sbr.rel (0) target = $region61
    $region60: #{foo_forward.1} parent=1 // pred_region
      _
    $region61: #{foo_forward.1} parent=1 // pred_fallthru
      _
    // Predicated region
    $region62: #{foo_forward.1} parent=1 // pred_check
      _
    $region63: #{foo_forward.1} parent=1 // pred_check_branch
      %7801 = sbr.rel (0) target = $region65
    $region64: #{foo_forward.1} parent=1 // pred_region
      _
    $region65: #{foo_forward.1} parent=1 // pred_fallthru
      _
    %7802 = vsyncpa [#allocation4], 1
    %7803 = vsyncpa [#allocation6], 1
    %7804 = vsyncpa [#allocation9], 1
    %7805 = vsyncpa [#allocation12], 1

</llo_original>
